<compile_context>
chip_gen: v5e
topology: v5e:2x2
jax: 0.10.0
libtpu: 0.0.40
codegen_flags: <defaults>
</compile_context>

<pallas_src>
import functools

import jax
import jax.numpy as jnp
from jax.experimental import pallas as pl
from jax.experimental.pallas import tpu as pltpu


def _attention_kernel(x_ref, wqkv_ref, wout_ref, bout_ref, o_ref, attn_ref,
                      *, heads, dim_head, bp, n):
    inner = heads * dim_head
    t = bp * n

    # ---- single MXU-efficient QKV projection over all bp*n tokens ----
    x_bf16 = x_ref[...].astype(jnp.bfloat16)                      # (t, dim)
    qkv = jnp.dot(x_bf16, wqkv_ref[...],
                  preferred_element_type=jnp.float32)             # (t, 3*inner) f32

    # ---- gather per-head q/k/v once into a single (bp*heads, n, d) batch ----
    # p-major ordering (g = patch*heads + head) so the attn output reshapes
    # straight to (b, p, heads, n, n) outside the kernel (pure metadata).
    def gather_heads(base):
        parts = [
            qkv[:, base + h * dim_head: base + (h + 1) * dim_head]
            .reshape(bp, 1, n, dim_head)
            for h in range(heads)
        ]
        return jnp.concatenate(parts, axis=1).reshape(bp * heads, n, dim_head)

    q = gather_heads(0)                                           # (bp*heads, n, d) f32
    k = gather_heads(inner)
    v = gather_heads(2 * inner)

    # ---- batched attention over all (patch, head) pairs ----
    # scale is already folded into the q columns of wqkv (wrapper-side)
    dots = jnp.einsum("gnd,gmd->gnm",
                      q.astype(jnp.bfloat16), k.astype(jnp.bfloat16),
                      preferred_element_type=jnp.float32)         # (bp*heads, n, n)
    dots = dots - jnp.max(dots, axis=-1, keepdims=True)
    e = jnp.exp(dots)
    # exact softmax: attn is a returned tensor, keep rows summing to 1
    attn = e / jnp.sum(e, axis=-1, keepdims=True)
    attn_ref[...] = attn                                          # one full-block store

    out = jnp.einsum("gnm,gmd->gnd",
                     attn.astype(jnp.bfloat16), v.astype(jnp.bfloat16),
                     preferred_element_type=jnp.float32)          # (bp*heads, n, d) f32

    # ---- output projection accumulated per head (no VMEM scratch round-trip) ----
    # out_concat(T, inner) @ Wout == sum_h out_h(T, d) @ Wout[h]; accumulate in f32
    # registers, casting the MXU operand once right before each dot.
    out4 = out.reshape(bp, heads, n, dim_head)
    o_acc = None
    for h in range(heads):
        out_h = out4[:, h].reshape(t, dim_head).astype(jnp.bfloat16)
        contrib = jnp.dot(out_h, wout_ref[h],
                          preferred_element_type=jnp.float32)     # (t, dim) f32
        o_acc = contrib if o_acc is None else o_acc + contrib
    o_ref[...] = o_acc + bout_ref[...]


def attention_forward(x, params, *, heads, dim_head):
    b, p, n, dim = x.shape
    inner = heads * dim_head
    scale = dim_head ** (-0.5)
    bp = b * p
    t = bp * n

    # fold the softmax scale into the q columns; bf16 weights for the MXU
    wqkv = params["wqkv"]
    wqkv_scaled = jnp.concatenate([wqkv[:, :inner] * scale, wqkv[:, inner:]], axis=-1)
    wqkv_bf16 = wqkv_scaled.astype(jnp.bfloat16)
    # per-head layout (heads, dim_head, dim) -> plain leading-dim index in kernel
    wout_bf16 = params["wout"].reshape(heads, dim_head, dim).astype(jnp.bfloat16)

    x2d = x.reshape(t, dim)

    kernel = functools.partial(_attention_kernel, heads=heads, dim_head=dim_head,
                               bp=bp, n=n)

    # Single grid step: working set is tiny, so any grid split is pure per-step
    # overhead on single-TC chips (v5e/v6e) and does not pay on v7x either.
    grid_spec = pltpu.PrefetchScalarGridSpec(
        num_scalar_prefetch=0,
        grid=(1,),
        in_specs=[
            pl.BlockSpec((t, dim), lambda i: (0, 0)),                 # x tokens
            pl.BlockSpec((dim, 3 * inner), lambda i: (0, 0)),         # wqkv (bf16, q pre-scaled)
            pl.BlockSpec((heads, dim_head, dim), lambda i: (0, 0, 0)),  # wout (bf16, per-head)
            pl.BlockSpec((1, dim), lambda i: (0, 0)),                 # bout (f32)
        ],
        out_specs=[
            pl.BlockSpec((t, dim), lambda i: (0, 0)),                 # o
            pl.BlockSpec((bp * heads, n, n), lambda i: (0, 0, 0)),    # attn (p-major flat)
        ],
    )

    o2d, attn_flat = pl.pallas_call(
        kernel,
        grid_spec=grid_spec,
        out_shape=(
            jax.ShapeDtypeStruct((t, dim), jnp.float32),
            jax.ShapeDtypeStruct((bp * heads, n, n), jnp.float32),
        ),
        compiler_params=pltpu.CompilerParams(
            dimension_semantics=("arbitrary",),
            vmem_limit_bytes=32 * 1024 * 1024,
        ),
    )(x2d, wqkv_bf16, wout_bf16, params["bout"])

    # pure-metadata reshapes (flat batch index is ((b*p)*heads + h))
    return o2d.reshape(b, p, n, dim), attn_flat.reshape(b, p, heads, n, n)


def attention_ref(x, params, *, heads, dim_head):
    """Pure-JAX (f32) reference mirroring the PyTorch forward."""
    b, p, n, dim = x.shape
    inner = heads * dim_head
    scale = dim_head ** (-0.5)
    qkv = x @ params["wqkv"]
    q, k, v = jnp.split(qkv, 3, axis=-1)

    def split_heads(t):
        return t.reshape(b, p, n, heads, dim_head).transpose(0, 1, 3, 2, 4)

    q, k, v = map(split_heads, (q, k, v))
    dots = jnp.einsum("bphnd,bphmd->bphnm", q, k) * scale
    attn = jax.nn.softmax(dots, axis=-1)
    out = jnp.einsum("bphnm,bphmd->bphnd", attn, v)
    out = out.transpose(0, 1, 3, 2, 4).reshape(b, p, n, inner)
    return out @ params["wout"] + params["bout"], attn


if __name__ == "__main__":
    # x : (batch, patch, tokens-per-patch, channels)
    b, p, n = 2, 4, 16
    dim, heads, dim_head = 32, 4, 16
    inner = heads * dim_head

    key = jax.random.PRNGKey(0)
    kx, kw, ko, kb = jax.random.split(key, 4)
    x = jax.random.normal(kx, (b, p, n, dim), jnp.float32)
    params = {
        "wqkv": jax.random.normal(kw, (dim, 3 * inner), jnp.float32) / jnp.sqrt(dim),
        "wout": jax.random.normal(ko, (inner, dim), jnp.float32) / jnp.sqrt(inner),
        "bout": jax.random.normal(kb, (1, dim), jnp.float32) * 0.02,
    }

    o, attn = attention_forward(x, params, heads=heads, dim_head=dim_head)
    jax.block_until_ready((o, attn))

    o_exp, attn_exp = attention_ref(x, params, heads=heads, dim_head=dim_head)
    assert o.shape == (b, p, n, dim) and attn.shape == (b, p, heads, n, n)
    # bf16 MXU operands (f32 accumulation) -> looser tolerance than pure f32
    assert jnp.allclose(o, o_exp, atol=5e-2, rtol=5e-2), (
        "output mismatch, max abs err = %g" % float(jnp.max(jnp.abs(o - o_exp))))
    assert jnp.allclose(attn, attn_exp, atol=5e-2, rtol=5e-2), (
        "attention mismatch, max abs err = %g" % float(jnp.max(jnp.abs(attn - attn_exp))))

    print("KERNEL_OK")
</pallas_src>

<mosaic_0001>
module attributes {stable_mosaic.version = 11 : i64} {
  func.func @_attention_kernel(%arg0: i32, %arg1: memref<128x32xf32, #tpu.memory_space<vmem>>, %arg2: memref<32x192xbf16, #tpu.memory_space<vmem>>, %arg3: memref<4x16x32xbf16, #tpu.memory_space<vmem>>, %arg4: memref<1x32xf32, #tpu.memory_space<vmem>>, %arg5: memref<128x32xf32, #tpu.memory_space<vmem>>, %arg6: memref<32x16x16xf32, #tpu.memory_space<vmem>>) attributes {dimension_semantics = [#tpu.dimension_semantics<arbitrary>], iteration_bounds = array<i64: 1>, scalar_prefetch = 0 : i64, scratch_operands = 0 : i64, tpu.core_type = #tpu.core_type<tc>, window_params = [{pipeline_mode = #tpu.pipeline_mode<synchronous>, transform_indices = @transform_0, window_bounds = array<i64: 128, 32>}, {pipeline_mode = #tpu.pipeline_mode<synchronous>, transform_indices = @transform_1, window_bounds = array<i64: 32, 192>}, {pipeline_mode = #tpu.pipeline_mode<synchronous>, transform_indices = @transform_2, window_bounds = array<i64: 4, 16, 32>}, {pipeline_mode = #tpu.pipeline_mode<synchronous>, transform_indices = @transform_3, window_bounds = array<i64: 1, 32>}, {pipeline_mode = #tpu.pipeline_mode<synchronous>, transform_indices = @transform_4, window_bounds = array<i64: 128, 32>}, {pipeline_mode = #tpu.pipeline_mode<synchronous>, transform_indices = @transform_5, window_bounds = array<i64: 32, 16, 16>}]} {
    %c0 = arith.constant 0 : index
    %c0_0 = arith.constant 0 : index
    %0 = vector.load %arg1[%c0, %c0_0] : memref<128x32xf32, #tpu.memory_space<vmem>>, vector<128x32xf32>
    %1 = arith.truncf %0 : vector<128x32xf32> to vector<128x32xbf16>
    %c0_1 = arith.constant 0 : index
    %c0_2 = arith.constant 0 : index
    %2 = vector.load %arg2[%c0_1, %c0_2] : memref<32x192xbf16, #tpu.memory_space<vmem>>, vector<32x192xbf16>
    %cst = arith.constant dense<0.000000e+00> : vector<128x192xf32>
    %3 = tpu.matmul %1, %2, %cst {dimension_numbers = #tpu.dot_dimension_numbers<[1], [0], [0], [1], [0, 0, 1, 1], [], []>} : vector<128x32xbf16>, vector<32x192xbf16>, vector<128x192xf32> -> vector<128x192xf32>
    %4 = vector.extract_strided_slice %3 {offsets = [0, 0], sizes = [128, 16], strides = [1, 1]} : vector<128x192xf32> to vector<128x16xf32>
    %5 = vector.shape_cast %4 : vector<128x16xf32> to vector<8x1x16x16xf32>
    %6 = vector.extract_strided_slice %3 {offsets = [0, 16], sizes = [128, 16], strides = [1, 1]} : vector<128x192xf32> to vector<128x16xf32>
    %7 = vector.shape_cast %6 : vector<128x16xf32> to vector<8x1x16x16xf32>
    %8 = vector.extract_strided_slice %3 {offsets = [0, 32], sizes = [128, 16], strides = [1, 1]} : vector<128x192xf32> to vector<128x16xf32>
    %9 = vector.shape_cast %8 : vector<128x16xf32> to vector<8x1x16x16xf32>
    %10 = vector.extract_strided_slice %3 {offsets = [0, 48], sizes = [128, 16], strides = [1, 1]} : vector<128x192xf32> to vector<128x16xf32>
    %11 = vector.shape_cast %10 : vector<128x16xf32> to vector<8x1x16x16xf32>
    %12 = tpu.concatenate %5, %7, %9, %11 in 1 : vector<8x1x16x16xf32>, vector<8x1x16x16xf32>, vector<8x1x16x16xf32>, vector<8x1x16x16xf32> -> vector<8x4x16x16xf32>
    %13 = vector.shape_cast %12 : vector<8x4x16x16xf32> to vector<32x16x16xf32>
    %14 = vector.extract_strided_slice %3 {offsets = [0, 64], sizes = [128, 16], strides = [1, 1]} : vector<128x192xf32> to vector<128x16xf32>
    %15 = vector.shape_cast %14 : vector<128x16xf32> to vector<8x1x16x16xf32>
    %16 = vector.extract_strided_slice %3 {offsets = [0, 80], sizes = [128, 16], strides = [1, 1]} : vector<128x192xf32> to vector<128x16xf32>
    %17 = vector.shape_cast %16 : vector<128x16xf32> to vector<8x1x16x16xf32>
    %18 = vector.extract_strided_slice %3 {offsets = [0, 96], sizes = [128, 16], strides = [1, 1]} : vector<128x192xf32> to vector<128x16xf32>
    %19 = vector.shape_cast %18 : vector<128x16xf32> to vector<8x1x16x16xf32>
    %20 = vector.extract_strided_slice %3 {offsets = [0, 112], sizes = [128, 16], strides = [1, 1]} : vector<128x192xf32> to vector<128x16xf32>
    %21 = vector.shape_cast %20 : vector<128x16xf32> to vector<8x1x16x16xf32>
    %22 = tpu.concatenate %15, %17, %19, %21 in 1 : vector<8x1x16x16xf32>, vector<8x1x16x16xf32>, vector<8x1x16x16xf32>, vector<8x1x16x16xf32> -> vector<8x4x16x16xf32>
    %23 = vector.shape_cast %22 : vector<8x4x16x16xf32> to vector<32x16x16xf32>
    %24 = vector.extract_strided_slice %3 {offsets = [0, 128], sizes = [128, 16], strides = [1, 1]} : vector<128x192xf32> to vector<128x16xf32>
    %25 = vector.shape_cast %24 : vector<128x16xf32> to vector<8x1x16x16xf32>
    %26 = vector.extract_strided_slice %3 {offsets = [0, 144], sizes = [128, 16], strides = [1, 1]} : vector<128x192xf32> to vector<128x16xf32>
    %27 = vector.shape_cast %26 : vector<128x16xf32> to vector<8x1x16x16xf32>
    %28 = vector.extract_strided_slice %3 {offsets = [0, 160], sizes = [128, 16], strides = [1, 1]} : vector<128x192xf32> to vector<128x16xf32>
    %29 = vector.shape_cast %28 : vector<128x16xf32> to vector<8x1x16x16xf32>
    %30 = vector.extract_strided_slice %3 {offsets = [0, 176], sizes = [128, 16], strides = [1, 1]} : vector<128x192xf32> to vector<128x16xf32>
    %31 = vector.shape_cast %30 : vector<128x16xf32> to vector<8x1x16x16xf32>
    %32 = tpu.concatenate %25, %27, %29, %31 in 1 : vector<8x1x16x16xf32>, vector<8x1x16x16xf32>, vector<8x1x16x16xf32>, vector<8x1x16x16xf32> -> vector<8x4x16x16xf32>
    %33 = vector.shape_cast %32 : vector<8x4x16x16xf32> to vector<32x16x16xf32>
    %34 = arith.truncf %13 : vector<32x16x16xf32> to vector<32x16x16xbf16>
    %35 = arith.truncf %23 : vector<32x16x16xf32> to vector<32x16x16xbf16>
    "tpu.trace_start"() <{level = 10 : i32, message = "gnd,gmd->gnm"}> : () -> ()
    %cst_3 = arith.constant dense<0.000000e+00> : vector<32x16x16xf32>
    %36 = tpu.matmul %34, %35, %cst_3 {dimension_numbers = #tpu.dot_dimension_numbers<[2], [2], [1], [1], [0, 0, 0, 1, 1, 1], [0], [0]>} : vector<32x16x16xbf16>, vector<32x16x16xbf16>, vector<32x16x16xf32> -> vector<32x16x16xf32>
    "tpu.trace_stop"() : () -> ()
    %cst_4 = arith.constant dense<0xFF800000> : vector<32x16xf32>
    %37 = vector.multi_reduction <maximumf>, %36, %cst_4 [2] : vector<32x16x16xf32> to vector<32x16xf32>
    %38 = vector.shape_cast %37 : vector<32x16xf32> to vector<32x16x1xf32>
    %39 = vector.broadcast %38 : vector<32x16x1xf32> to vector<32x16x16xf32>
    %40 = arith.subf %36, %39 : vector<32x16x16xf32>
    %41 = math.exp %40 : vector<32x16x16xf32>
    %cst_5 = arith.constant dense<0.000000e+00> : vector<32x16xf32>
    %42 = vector.multi_reduction <add>, %41, %cst_5 [2] : vector<32x16x16xf32> to vector<32x16xf32>
    %43 = vector.shape_cast %42 : vector<32x16xf32> to vector<32x16x1xf32>
    %44 = vector.broadcast %43 : vector<32x16x1xf32> to vector<32x16x16xf32>
    %45 = arith.divf %41, %44 : vector<32x16x16xf32>
    %c0_6 = arith.constant 0 : index
    %c0_7 = arith.constant 0 : index
    %c0_8 = arith.constant 0 : index
    %46 = vector.load %arg6[%c0_6, %c0_7, %c0_8] : memref<32x16x16xf32, #tpu.memory_space<vmem>>, vector<32x16x16xf32>
    tpu.vector_store %arg6[%c0_6, %c0_7, %c0_8], %45 {strides = array<i32>} : memref<32x16x16xf32, #tpu.memory_space<vmem>>, vector<32x16x16xf32>,
    %47 = arith.truncf %45 : vector<32x16x16xf32> to vector<32x16x16xbf16>
    %48 = arith.truncf %33 : vector<32x16x16xf32> to vector<32x16x16xbf16>
    "tpu.trace_start"() <{level = 10 : i32, message = "gnm,gmd->gnd"}> : () -> ()
    %cst_9 = arith.constant dense<0.000000e+00> : vector<32x16x16xf32>
    %49 = tpu.matmul %47, %48, %cst_9 {dimension_numbers = #tpu.dot_dimension_numbers<[2], [1], [1], [2], [0, 0, 0, 1, 1, 2], [0], [0]>} : vector<32x16x16xbf16>, vector<32x16x16xbf16>, vector<32x16x16xf32> -> vector<32x16x16xf32>
    "tpu.trace_stop"() : () -> ()
    %50 = vector.shape_cast %49 : vector<32x16x16xf32> to vector<8x4x16x16xf32>
    %51 = vector.extract_strided_slice %50 {offsets = [0, 0, 0, 0], sizes = [8, 1, 16, 16], strides = [1, 1, 1, 1]} : vector<8x4x16x16xf32> to vector<8x1x16x16xf32>
    %52 = vector.shape_cast %51 : vector<8x1x16x16xf32> to vector<8x16x16xf32>
    %53 = vector.shape_cast %52 : vector<8x16x16xf32> to vector<128x16xf32>
    %54 = arith.truncf %53 : vector<128x16xf32> to vector<128x16xbf16>
    %c0_10 = arith.constant 0 : index
    %c0_11 = arith.constant 0 : index
    %c0_12 = arith.constant 0 : index
    %55 = vector.load %arg3[%c0_10, %c0_11, %c0_12] : memref<4x16x32xbf16, #tpu.memory_space<vmem>>, vector<1x16x32xbf16>
    %56 = vector.shape_cast %55 : vector<1x16x32xbf16> to vector<16x32xbf16>
    %cst_13 = arith.constant dense<0.000000e+00> : vector<128x32xf32>
    %57 = tpu.matmul %54, %56, %cst_13 {dimension_numbers = #tpu.dot_dimension_numbers<[1], [0], [0], [1], [0, 0, 1, 1], [], []>} : vector<128x16xbf16>, vector<16x32xbf16>, vector<128x32xf32> -> vector<128x32xf32>
    %58 = vector.extract_strided_slice %50 {offsets = [0, 1, 0, 0], sizes = [8, 1, 16, 16], strides = [1, 1, 1, 1]} : vector<8x4x16x16xf32> to vector<8x1x16x16xf32>
    %59 = vector.shape_cast %58 : vector<8x1x16x16xf32> to vector<8x16x16xf32>
    %60 = vector.shape_cast %59 : vector<8x16x16xf32> to vector<128x16xf32>
    %61 = arith.truncf %60 : vector<128x16xf32> to vector<128x16xbf16>
    %c1 = arith.constant 1 : index
    %c0_14 = arith.constant 0 : index
    %c0_15 = arith.constant 0 : index
    %62 = vector.load %arg3[%c1, %c0_14, %c0_15] : memref<4x16x32xbf16, #tpu.memory_space<vmem>>, vector<1x16x32xbf16>
    %63 = vector.shape_cast %62 : vector<1x16x32xbf16> to vector<16x32xbf16>
    %cst_16 = arith.constant dense<0.000000e+00> : vector<128x32xf32>
    %64 = tpu.matmul %61, %63, %cst_16 {dimension_numbers = #tpu.dot_dimension_numbers<[1], [0], [0], [1], [0, 0, 1, 1], [], []>} : vector<128x16xbf16>, vector<16x32xbf16>, vector<128x32xf32> -> vector<128x32xf32>
    %65 = arith.addf %57, %64 : vector<128x32xf32>
    %66 = vector.extract_strided_slice %50 {offsets = [0, 2, 0, 0], sizes = [8, 1, 16, 16], strides = [1, 1, 1, 1]} : vector<8x4x16x16xf32> to vector<8x1x16x16xf32>
    %67 = vector.shape_cast %66 : vector<8x1x16x16xf32> to vector<8x16x16xf32>
    %68 = vector.shape_cast %67 : vector<8x16x16xf32> to vector<128x16xf32>
    %69 = arith.truncf %68 : vector<128x16xf32> to vector<128x16xbf16>
    %c2 = arith.constant 2 : index
    %c0_17 = arith.constant 0 : index
    %c0_18 = arith.constant 0 : index
    %70 = vector.load %arg3[%c2, %c0_17, %c0_18] : memref<4x16x32xbf16, #tpu.memory_space<vmem>>, vector<1x16x32xbf16>
    %71 = vector.shape_cast %70 : vector<1x16x32xbf16> to vector<16x32xbf16>
    %cst_19 = arith.constant dense<0.000000e+00> : vector<128x32xf32>
    %72 = tpu.matmul %69, %71, %cst_19 {dimension_numbers = #tpu.dot_dimension_numbers<[1], [0], [0], [1], [0, 0, 1, 1], [], []>} : vector<128x16xbf16>, vector<16x32xbf16>, vector<128x32xf32> -> vector<128x32xf32>
    %73 = arith.addf %65, %72 : vector<128x32xf32>
    %74 = vector.extract_strided_slice %50 {offsets = [0, 3, 0, 0], sizes = [8, 1, 16, 16], strides = [1, 1, 1, 1]} : vector<8x4x16x16xf32> to vector<8x1x16x16xf32>
    %75 = vector.shape_cast %74 : vector<8x1x16x16xf32> to vector<8x16x16xf32>
    %76 = vector.shape_cast %75 : vector<8x16x16xf32> to vector<128x16xf32>
    %77 = arith.truncf %76 : vector<128x16xf32> to vector<128x16xbf16>
    %c3 = arith.constant 3 : index
    %c0_20 = arith.constant 0 : index
    %c0_21 = arith.constant 0 : index
    %78 = vector.load %arg3[%c3, %c0_20, %c0_21] : memref<4x16x32xbf16, #tpu.memory_space<vmem>>, vector<1x16x32xbf16>
    %79 = vector.shape_cast %78 : vector<1x16x32xbf16> to vector<16x32xbf16>
    %cst_22 = arith.constant dense<0.000000e+00> : vector<128x32xf32>
    %80 = tpu.matmul %77, %79, %cst_22 {dimension_numbers = #tpu.dot_dimension_numbers<[1], [0], [0], [1], [0, 0, 1, 1], [], []>} : vector<128x16xbf16>, vector<16x32xbf16>, vector<128x32xf32> -> vector<128x32xf32>
    %81 = arith.addf %73, %80 : vector<128x32xf32>
    %c0_23 = arith.constant 0 : index
    %c0_24 = arith.constant 0 : index
    %82 = vector.load %arg4[%c0_23, %c0_24] : memref<1x32xf32, #tpu.memory_space<vmem>>, vector<1x32xf32>
    %83 = vector.broadcast %82 : vector<1x32xf32> to vector<128x32xf32>
    %84 = arith.addf %81, %83 : vector<128x32xf32>
    %c0_25 = arith.constant 0 : index
    %c0_26 = arith.constant 0 : index
    %85 = vector.load %arg5[%c0_25, %c0_26] : memref<128x32xf32, #tpu.memory_space<vmem>>, vector<128x32xf32>
    tpu.vector_store %arg5[%c0_25, %c0_26], %84 {strides = array<i32>} : memref<128x32xf32, #tpu.memory_space<vmem>>, vector<128x32xf32>,
    return
  }
  func.func @transform_0(%arg0: i32) -> (i32, i32) {
    %c0_i32 = arith.constant 0 : i32
    %c0_i32_0 = arith.constant 0 : i32
    %c0_i32_1 = arith.constant 0 : i32
    return %c0_i32, %c0_i32_0 : i32, i32
  }
  func.func @transform_1(%arg0: i32) -> (i32, i32) {
    %c0_i32 = arith.constant 0 : i32
    %c0_i32_0 = arith.constant 0 : i32
    %c0_i32_1 = arith.constant 0 : i32
    return %c0_i32, %c0_i32_0 : i32, i32
  }
  func.func @transform_2(%arg0: i32) -> (i32, i32, i32) {
    %c0_i32 = arith.constant 0 : i32
    %c0_i32_0 = arith.constant 0 : i32
    %c0_i32_1 = arith.constant 0 : i32
    %c0_i32_2 = arith.constant 0 : i32
    return %c0_i32, %c0_i32_0, %c0_i32_1 : i32, i32, i32
  }
  func.func @transform_3(%arg0: i32) -> (i32, i32) {
    %c0_i32 = arith.constant 0 : i32
    %c0_i32_0 = arith.constant 0 : i32
    %c0_i32_1 = arith.constant 0 : i32
    return %c0_i32, %c0_i32_0 : i32, i32
  }
  func.func @transform_4(%arg0: i32) -> (i32, i32) {
    %c0_i32 = arith.constant 0 : i32
    %c0_i32_0 = arith.constant 0 : i32
    %c0_i32_1 = arith.constant 0 : i32
    return %c0_i32, %c0_i32_0 : i32, i32
  }
  func.func @transform_5(%arg0: i32) -> (i32, i32, i32) {
    %c0_i32 = arith.constant 0 : i32
    %c0_i32_0 = arith.constant 0 : i32
    %c0_i32_1 = arith.constant 0 : i32
    %c0_i32_2 = arith.constant 0 : i32
    return %c0_i32, %c0_i32_0, %c0_i32_1 : i32, i32, i32
  }
}

</mosaic_0001>

<llo_original>
// kernel: tpu_custom_call.1
$region0: #{tpu_custom_call.1}
  #allocation0 [shape = 'u32[]', space=smem, size = 0x4, offset = 0x4, fixed_abs, tag = 'smem constant byte address 0x4 - core index']
  #allocation1 [shape = 'u32[72,128]{1,0:T(1,128)}', space=vmem, size = 0x9000, scoped, tag = 'internal scratch']
  %s0 = inlined_call_operand.vmem [shape: f32[128,32], index: 0, kind: input, shape index: {}]
  %s1 = inlined_call_operand.vmem [shape: bf16[32,192], index: 1, kind: input, shape index: {}]
  %s2 = inlined_call_operand.vmem [shape: bf16[4,16,32], index: 2, kind: input, shape index: {}]
  %s3 = inlined_call_operand.vmem [shape: f32[1,32], index: 3, kind: input, shape index: {}]
  %s4 = inlined_call_operand.vmem [shape: f32[128,32], index: 4, kind: output, shape index: {0}]
  %s5 = inlined_call_operand.vmem [shape: f32[32,16,16], index: 5, kind: output, shape index: {1}]
  %6 = xla_tuple %s4, %s5
  %s7 = sld [smem:[#allocation0]]
  $region34: #{tpu_custom_call.1} parent=0
    _
  %s9 = ssub.s32 1, %s7
  %s10 = scalar_select 0, %s9, %s7
  // Predicated region
  $region2: #{tpu_custom_call.1} parent=0 // pred_check
    _
  $region3: #{tpu_custom_call.1} parent=0 // pred_check_branch
    %12 = sbr.rel (0) target = $region5
  $region4: #{tpu_custom_call.1} parent=0 // pred_region
    _
  $region5: #{tpu_custom_call.1} parent=0 // pred_fallthru
    _
  // Predicated region
  $region6: #{tpu_custom_call.1} parent=0 // pred_check
    _
  $region7: #{tpu_custom_call.1} parent=0 // pred_check_branch
    %14 = sbr.rel (0) target = $region9
  $region8: #{tpu_custom_call.1} parent=0 // pred_region
    _
  $region9: #{tpu_custom_call.1} parent=0 // pred_fallthru
    _
  // Predicated region
  $region10: #{tpu_custom_call.1} parent=0 // pred_check
    _
  $region11: #{tpu_custom_call.1} parent=0 // pred_check_branch
    %16 = sbr.rel (0) target = $region13
  $region12: #{tpu_custom_call.1} parent=0 // pred_region
    _
  $region13: #{tpu_custom_call.1} parent=0 // pred_fallthru
    _
  // Predicated region
  $region14: #{tpu_custom_call.1} parent=0 // pred_check
    _
  $region15: #{tpu_custom_call.1} parent=0 // pred_check_branch
    %18 = sbr.rel (0) target = $region17
  $region16: #{tpu_custom_call.1} parent=0 // pred_region
    _
  $region17: #{tpu_custom_call.1} parent=0 // pred_fallthru
    _
  %v20 = vld [vmem:[%s0] sm:$0xff]
  %v21 = vld [vmem:[%s0 + $0x8] sm:$0xff]
  %v22 = vld [vmem:[%s0 + $0x10] sm:$0xff]
  %v23 = vld [vmem:[%s0 + $0x18] sm:$0xff]
  %v24 = vld [vmem:[%s0 + $0x20] sm:$0xff]
  %v25 = vld [vmem:[%s0 + $0x28] sm:$0xff]
  %v26 = vld [vmem:[%s0 + $0x30] sm:$0xff]
  %v27 = vld [vmem:[%s0 + $0x38] sm:$0xff]
  %v28 = vld [vmem:[%s0 + $0x40] sm:$0xff]
  %v29 = vld [vmem:[%s0 + $0x48] sm:$0xff]
  %v30 = vld [vmem:[%s0 + $0x50] sm:$0xff]
  %v31 = vld [vmem:[%s0 + $0x58] sm:$0xff]
  %v32 = vld [vmem:[%s0 + $0x60] sm:$0xff]
  %v33 = vld [vmem:[%s0 + $0x68] sm:$0xff]
  %v34 = vld [vmem:[%s0 + $0x70] sm:$0xff]
  %v35 = vld [vmem:[%s0 + $0x78] sm:$0xff]
  %v36 = vpack.c.bf16 %v21, %v20
  %v37 = vpack.c.bf16 %v23, %v22
  %v38 = vpack.c.bf16 %v25, %v24
  %v39 = vpack.c.bf16 %v27, %v26
  %v40 = vpack.c.bf16 %v29, %v28
  %v41 = vpack.c.bf16 %v31, %v30
  %v42 = vpack.c.bf16 %v33, %v32
  %v43 = vpack.c.bf16 %v35, %v34
  %v44 = vld [vmem:[%s1] sm:$0xff]
  %v45 = vld [vmem:[%s1 + $0x8] sm:$0xff]
  %v46 = vld [vmem:[%s1 + $0x10] sm:$0xff]
  %v47 = vld [vmem:[%s1 + $0x18] sm:$0xff]
  %v52 = vunpack.c.l.b16 %v44
  %v53 = vunpack.c.h.b16 %v44
  %v54 = vunpack.c.l.b16 %v45
  %v55 = vunpack.c.h.b16 %v45
  %v56 = vunpack.c.l.b16 %v46
  %v57 = vunpack.c.h.b16 %v46
  %v58 = vunpack.c.l.b16 %v47
  %v59 = vunpack.c.h.b16 %v47
  %v60 = vpack.c.b16 %v54, %v52
  %v61 = vpack.c.b16 %v55, %v53
  %v62 = vpack.c.b16 %v58, %v56
  %v63 = vpack.c.b16 %v59, %v57
  %vm68 = vcmask 261120
  %v70 = vsel %vm68, %v36, 0
  %v73 = vsel %vm68, %v37, 0
  %v76 = vsel %vm68, %v38, 0
  %v79 = vsel %vm68, %v39, 0
  %v82 = vsel %vm68, %v40, 0
  %v85 = vsel %vm68, %v41, 0
  %v88 = vsel %vm68, %v42, 0
  %v91 = vsel %vm68, %v43, 0
  %93 = vmatpush.bf16.msra.mxu0 0
  %94 = vmatpush.bf16.msra.mxu0 0
  %95 = vmatpush.bf16.msra.mxu0 0
  %96 = vmatpush.bf16.msra.mxu0 0
  %97 = vmatpush.bf16.msra.mxu0 0
  %98 = vmatpush.bf16.msra.mxu0 0
  %99 = vmatpush.bf16.msra.mxu0 %v62
  %100 = vmatpush.bf16.msra.mxu0 %v60
  %101 = vmatmul.bf16.gmra.mxu0 %v70
  %v102 = vpop.f32.mrf.mxu0
  %v103 = vadd.f32 0.0, %v102
  %v104 = vpop.f32.mrf.mxu0
  %v105 = vadd.f32 0.0, %v104
  %106 = vmatmul.bf16.gmra.mxu0 %v73
  %v107 = vpop.f32.mrf.mxu0
  %v108 = vadd.f32 0.0, %v107
  %v109 = vpop.f32.mrf.mxu0
  %v110 = vadd.f32 0.0, %v109
  %111 = vmatmul.bf16.gmra.mxu0 %v76
  %v112 = vpop.f32.mrf.mxu0
  %v113 = vadd.f32 0.0, %v112
  %v114 = vpop.f32.mrf.mxu0
  %v115 = vadd.f32 0.0, %v114
  %116 = vmatmul.bf16.gmra.mxu0 %v79
  %v117 = vpop.f32.mrf.mxu0
  %v118 = vadd.f32 0.0, %v117
  %v119 = vpop.f32.mrf.mxu0
  %v120 = vadd.f32 0.0, %v119
  %121 = vmatmul.bf16.gmra.mxu0 %v82
  %v122 = vpop.f32.mrf.mxu0
  %v123 = vadd.f32 0.0, %v122
  %v124 = vpop.f32.mrf.mxu0
  %v125 = vadd.f32 0.0, %v124
  %126 = vmatmul.bf16.gmra.mxu0 %v85
  %v127 = vpop.f32.mrf.mxu0
  %v128 = vadd.f32 0.0, %v127
  %v129 = vpop.f32.mrf.mxu0
  %v130 = vadd.f32 0.0, %v129
  %131 = vmatmul.bf16.gmra.mxu0 %v88
  %v132 = vpop.f32.mrf.mxu0
  %v133 = vadd.f32 0.0, %v132
  %v134 = vpop.f32.mrf.mxu0
  %v135 = vadd.f32 0.0, %v134
  %136 = vmatmul.bf16.gmra.mxu0 %v91
  %v137 = vpop.f32.mrf.mxu0
  %v138 = vadd.f32 0.0, %v137
  %v139 = vpop.f32.mrf.mxu0
  %v140 = vadd.f32 0.0, %v139
  %141 = vdwg.mxu0
  %142 = vmatpush.bf16.msra.mxu0 0
  %143 = vmatpush.bf16.msra.mxu0 0
  %144 = vmatpush.bf16.msra.mxu0 0
  %145 = vmatpush.bf16.msra.mxu0 0
  %146 = vmatpush.bf16.msra.mxu0 0
  %147 = vmatpush.bf16.msra.mxu0 0
  %148 = vmatpush.bf16.msra.mxu0 %v63
  %149 = vmatpush.bf16.msra.mxu0 %v61
  %150 = vmatmul.bf16.gmra.mxu0 %v70
  %v151 = vpop.f32.mrf.mxu0
  %v152 = vadd.f32 0.0, %v151
  %v153 = vpop.f32.mrf.mxu0
  %v154 = vadd.f32 0.0, %v153
  %155 = vmatmul.bf16.gmra.mxu0 %v73
  %v156 = vpop.f32.mrf.mxu0
  %v157 = vadd.f32 0.0, %v156
  %v158 = vpop.f32.mrf.mxu0
  %v159 = vadd.f32 0.0, %v158
  %160 = vmatmul.bf16.gmra.mxu0 %v76
  %v161 = vpop.f32.mrf.mxu0
  %v162 = vadd.f32 0.0, %v161
  %v163 = vpop.f32.mrf.mxu0
  %v164 = vadd.f32 0.0, %v163
  %165 = vmatmul.bf16.gmra.mxu0 %v79
  %v166 = vpop.f32.mrf.mxu0
  %v167 = vadd.f32 0.0, %v166
  %v168 = vpop.f32.mrf.mxu0
  %v169 = vadd.f32 0.0, %v168
  %170 = vmatmul.bf16.gmra.mxu0 %v82
  %v171 = vpop.f32.mrf.mxu0
  %v172 = vadd.f32 0.0, %v171
  %v173 = vpop.f32.mrf.mxu0
  %v174 = vadd.f32 0.0, %v173
  %175 = vmatmul.bf16.gmra.mxu0 %v85
  %v176 = vpop.f32.mrf.mxu0
  %v177 = vadd.f32 0.0, %v176
  %v178 = vpop.f32.mrf.mxu0
  %v179 = vadd.f32 0.0, %v178
  %180 = vmatmul.bf16.gmra.mxu0 %v88
  %v181 = vpop.f32.mrf.mxu0
  %v182 = vadd.f32 0.0, %v181
  %v183 = vpop.f32.mrf.mxu0
  %v184 = vadd.f32 0.0, %v183
  %185 = vmatmul.bf16.gmra.mxu0 %v91
  %v186 = vpop.f32.mrf.mxu0
  %v187 = vadd.f32 0.0, %v186
  %v188 = vpop.f32.mrf.mxu0
  %v189 = vadd.f32 0.0, %v188
  %190 = vdwg.mxu0
  %207 = vrot.lane.b32.xlu0 %v103, 112
  %v208 = vpop.permute.xlu0 %207
  %209 = vrot.lane.b32.xlu0 %v105, 112
  %v210 = vpop.permute.xlu0 %209
  %211 = vrot.lane.b32.xlu0 %v108, 112
  %v212 = vpop.permute.xlu0 %211
  %213 = vrot.lane.b32.xlu0 %v110, 112
  %v214 = vpop.permute.xlu0 %213
  %215 = vrot.lane.b32.xlu0 %v113, 112
  %v216 = vpop.permute.xlu0 %215
  %217 = vrot.lane.b32.xlu0 %v115, 112
  %v218 = vpop.permute.xlu0 %217
  %219 = vrot.lane.b32.xlu0 %v118, 112
  %v220 = vpop.permute.xlu0 %219
  %221 = vrot.lane.b32.xlu0 %v120, 112
  %v222 = vpop.permute.xlu0 %221
  %223 = vrot.lane.b32.xlu0 %v123, 112
  %v224 = vpop.permute.xlu0 %223
  %225 = vrot.lane.b32.xlu0 %v125, 112
  %v226 = vpop.permute.xlu0 %225
  %227 = vrot.lane.b32.xlu0 %v128, 112
  %v228 = vpop.permute.xlu0 %227
  %229 = vrot.lane.b32.xlu0 %v130, 112
  %v230 = vpop.permute.xlu0 %229
  %231 = vrot.lane.b32.xlu0 %v133, 112
  %v232 = vpop.permute.xlu0 %231
  %233 = vrot.lane.b32.xlu0 %v135, 112
  %v234 = vpop.permute.xlu0 %233
  %235 = vrot.lane.b32.xlu0 %v138, 112
  %v236 = vpop.permute.xlu0 %235
  %237 = vrot.lane.b32.xlu0 %v140, 112
  %v238 = vpop.permute.xlu0 %237
  %255 = vrot.lane.b32.xlu0 %v103, 96
  %v256 = vpop.permute.xlu0 %255
  %257 = vrot.lane.b32.xlu0 %v105, 96
  %v258 = vpop.permute.xlu0 %257
  %259 = vrot.lane.b32.xlu0 %v108, 96
  %v260 = vpop.permute.xlu0 %259
  %261 = vrot.lane.b32.xlu0 %v110, 96
  %v262 = vpop.permute.xlu0 %261
  %263 = vrot.lane.b32.xlu0 %v113, 96
  %v264 = vpop.permute.xlu0 %263
  %265 = vrot.lane.b32.xlu0 %v115, 96
  %v266 = vpop.permute.xlu0 %265
  %267 = vrot.lane.b32.xlu0 %v118, 96
  %v268 = vpop.permute.xlu0 %267
  %269 = vrot.lane.b32.xlu0 %v120, 96
  %v270 = vpop.permute.xlu0 %269
  %271 = vrot.lane.b32.xlu0 %v123, 96
  %v272 = vpop.permute.xlu0 %271
  %273 = vrot.lane.b32.xlu0 %v125, 96
  %v274 = vpop.permute.xlu0 %273
  %275 = vrot.lane.b32.xlu0 %v128, 96
  %v276 = vpop.permute.xlu0 %275
  %277 = vrot.lane.b32.xlu0 %v130, 96
  %v278 = vpop.permute.xlu0 %277
  %279 = vrot.lane.b32.xlu0 %v133, 96
  %v280 = vpop.permute.xlu0 %279
  %281 = vrot.lane.b32.xlu0 %v135, 96
  %v282 = vpop.permute.xlu0 %281
  %283 = vrot.lane.b32.xlu0 %v138, 96
  %v284 = vpop.permute.xlu0 %283
  %285 = vrot.lane.b32.xlu0 %v140, 96
  %v286 = vpop.permute.xlu0 %285
  %303 = vrot.lane.b32.xlu0 %v103, 80
  %v304 = vpop.permute.xlu0 %303
  %305 = vrot.lane.b32.xlu0 %v105, 80
  %v306 = vpop.permute.xlu0 %305
  %307 = vrot.lane.b32.xlu0 %v108, 80
  %v308 = vpop.permute.xlu0 %307
  %309 = vrot.lane.b32.xlu0 %v110, 80
  %v310 = vpop.permute.xlu0 %309
  %311 = vrot.lane.b32.xlu0 %v113, 80
  %v312 = vpop.permute.xlu0 %311
  %313 = vrot.lane.b32.xlu0 %v115, 80
  %v314 = vpop.permute.xlu0 %313
  %315 = vrot.lane.b32.xlu0 %v118, 80
  %v316 = vpop.permute.xlu0 %315
  %317 = vrot.lane.b32.xlu0 %v120, 80
  %v318 = vpop.permute.xlu0 %317
  %319 = vrot.lane.b32.xlu0 %v123, 80
  %v320 = vpop.permute.xlu0 %319
  %321 = vrot.lane.b32.xlu0 %v125, 80
  %v322 = vpop.permute.xlu0 %321
  %323 = vrot.lane.b32.xlu0 %v128, 80
  %v324 = vpop.permute.xlu0 %323
  %325 = vrot.lane.b32.xlu0 %v130, 80
  %v326 = vpop.permute.xlu0 %325
  %327 = vrot.lane.b32.xlu0 %v133, 80
  %v328 = vpop.permute.xlu0 %327
  %329 = vrot.lane.b32.xlu0 %v135, 80
  %v330 = vpop.permute.xlu0 %329
  %331 = vrot.lane.b32.xlu0 %v138, 80
  %v332 = vpop.permute.xlu0 %331
  %333 = vrot.lane.b32.xlu0 %v140, 80
  %v334 = vpop.permute.xlu0 %333
  %367 = vrot.lane.b32.xlu0 %v152, 112
  %v368 = vpop.permute.xlu0 %367
  %369 = vrot.lane.b32.xlu0 %v154, 112
  %v370 = vpop.permute.xlu0 %369
  %371 = vrot.lane.b32.xlu0 %v157, 112
  %v372 = vpop.permute.xlu0 %371
  %373 = vrot.lane.b32.xlu0 %v159, 112
  %v374 = vpop.permute.xlu0 %373
  %375 = vrot.lane.b32.xlu0 %v162, 112
  %v376 = vpop.permute.xlu0 %375
  %377 = vrot.lane.b32.xlu0 %v164, 112
  %v378 = vpop.permute.xlu0 %377
  %379 = vrot.lane.b32.xlu0 %v167, 112
  %v380 = vpop.permute.xlu0 %379
  %381 = vrot.lane.b32.xlu0 %v169, 112
  %v382 = vpop.permute.xlu0 %381
  %383 = vrot.lane.b32.xlu0 %v172, 112
  %v384 = vpop.permute.xlu0 %383
  %385 = vrot.lane.b32.xlu0 %v174, 112
  %v386 = vpop.permute.xlu0 %385
  %387 = vrot.lane.b32.xlu0 %v177, 112
  %v388 = vpop.permute.xlu0 %387
  %389 = vrot.lane.b32.xlu0 %v179, 112
  %v390 = vpop.permute.xlu0 %389
  %391 = vrot.lane.b32.xlu0 %v182, 112
  %v392 = vpop.permute.xlu0 %391
  %393 = vrot.lane.b32.xlu0 %v184, 112
  %v394 = vpop.permute.xlu0 %393
  %395 = vrot.lane.b32.xlu0 %v187, 112
  %v396 = vpop.permute.xlu0 %395
  %397 = vrot.lane.b32.xlu0 %v189, 112
  %v398 = vpop.permute.xlu0 %397
  %415 = vrot.lane.b32.xlu0 %v152, 96
  %v416 = vpop.permute.xlu0 %415
  %417 = vrot.lane.b32.xlu0 %v154, 96
  %v418 = vpop.permute.xlu0 %417
  %419 = vrot.lane.b32.xlu0 %v157, 96
  %v420 = vpop.permute.xlu0 %419
  %421 = vrot.lane.b32.xlu0 %v159, 96
  %v422 = vpop.permute.xlu0 %421
  %423 = vrot.lane.b32.xlu0 %v162, 96
  %v424 = vpop.permute.xlu0 %423
  %425 = vrot.lane.b32.xlu0 %v164, 96
  %v426 = vpop.permute.xlu0 %425
  %427 = vrot.lane.b32.xlu0 %v167, 96
  %v428 = vpop.permute.xlu0 %427
  %429 = vrot.lane.b32.xlu0 %v169, 96
  %v430 = vpop.permute.xlu0 %429
  %431 = vrot.lane.b32.xlu0 %v172, 96
  %v432 = vpop.permute.xlu0 %431
  %433 = vrot.lane.b32.xlu0 %v174, 96
  %v434 = vpop.permute.xlu0 %433
  %435 = vrot.lane.b32.xlu0 %v177, 96
  %v436 = vpop.permute.xlu0 %435
  %437 = vrot.lane.b32.xlu0 %v179, 96
  %v438 = vpop.permute.xlu0 %437
  %439 = vrot.lane.b32.xlu0 %v182, 96
  %v440 = vpop.permute.xlu0 %439
  %441 = vrot.lane.b32.xlu0 %v184, 96
  %v442 = vpop.permute.xlu0 %441
  %443 = vrot.lane.b32.xlu0 %v187, 96
  %v444 = vpop.permute.xlu0 %443
  %445 = vrot.lane.b32.xlu0 %v189, 96
  %v446 = vpop.permute.xlu0 %445
  %463 = vrot.lane.b32.xlu0 %v152, 80
  %v464 = vpop.permute.xlu0 %463
  %465 = vrot.lane.b32.xlu0 %v154, 80
  %v466 = vpop.permute.xlu0 %465
  %467 = vrot.lane.b32.xlu0 %v157, 80
  %v468 = vpop.permute.xlu0 %467
  %469 = vrot.lane.b32.xlu0 %v159, 80
  %v470 = vpop.permute.xlu0 %469
  %471 = vrot.lane.b32.xlu0 %v162, 80
  %v472 = vpop.permute.xlu0 %471
  %473 = vrot.lane.b32.xlu0 %v164, 80
  %v474 = vpop.permute.xlu0 %473
  %475 = vrot.lane.b32.xlu0 %v167, 80
  %v476 = vpop.permute.xlu0 %475
  %477 = vrot.lane.b32.xlu0 %v169, 80
  %v478 = vpop.permute.xlu0 %477
  %479 = vrot.lane.b32.xlu0 %v172, 80
  %v480 = vpop.permute.xlu0 %479
  %481 = vrot.lane.b32.xlu0 %v174, 80
  %v482 = vpop.permute.xlu0 %481
  %483 = vrot.lane.b32.xlu0 %v177, 80
  %v484 = vpop.permute.xlu0 %483
  %485 = vrot.lane.b32.xlu0 %v179, 80
  %v486 = vpop.permute.xlu0 %485
  %487 = vrot.lane.b32.xlu0 %v182, 80
  %v488 = vpop.permute.xlu0 %487
  %489 = vrot.lane.b32.xlu0 %v184, 80
  %v490 = vpop.permute.xlu0 %489
  %491 = vrot.lane.b32.xlu0 %v187, 80
  %v492 = vpop.permute.xlu0 %491
  %493 = vrot.lane.b32.xlu0 %v189, 80
  %v494 = vpop.permute.xlu0 %493
  %v511 = vpack.c.bf16 %v103, %v103
  %v512 = vpack.c.bf16 %v105, %v105
  %v513 = vpack.c.bf16 %v208, %v208
  %v514 = vpack.c.bf16 %v210, %v210
  %v515 = vpack.c.bf16 %v256, %v256
  %v516 = vpack.c.bf16 %v258, %v258
  %v517 = vpack.c.bf16 %v304, %v304
  %v518 = vpack.c.bf16 %v306, %v306
  %v519 = vpack.c.bf16 %v108, %v108
  %v520 = vpack.c.bf16 %v110, %v110
  %v521 = vpack.c.bf16 %v212, %v212
  %v522 = vpack.c.bf16 %v214, %v214
  %v523 = vpack.c.bf16 %v260, %v260
  %v524 = vpack.c.bf16 %v262, %v262
  %v525 = vpack.c.bf16 %v308, %v308
  %v526 = vpack.c.bf16 %v310, %v310
  %v527 = vpack.c.bf16 %v113, %v113
  %v528 = vpack.c.bf16 %v115, %v115
  %v529 = vpack.c.bf16 %v216, %v216
  %v530 = vpack.c.bf16 %v218, %v218
  %v531 = vpack.c.bf16 %v264, %v264
  %v532 = vpack.c.bf16 %v266, %v266
  %v533 = vpack.c.bf16 %v312, %v312
  %v534 = vpack.c.bf16 %v314, %v314
  %v535 = vpack.c.bf16 %v118, %v118
  %v536 = vpack.c.bf16 %v120, %v120
  %v537 = vpack.c.bf16 %v220, %v220
  %v538 = vpack.c.bf16 %v222, %v222
  %v539 = vpack.c.bf16 %v268, %v268
  %v540 = vpack.c.bf16 %v270, %v270
  %v541 = vpack.c.bf16 %v316, %v316
  %v542 = vpack.c.bf16 %v318, %v318
  %v543 = vpack.c.bf16 %v123, %v123
  %v544 = vpack.c.bf16 %v125, %v125
  %v545 = vpack.c.bf16 %v224, %v224
  %v546 = vpack.c.bf16 %v226, %v226
  %v547 = vpack.c.bf16 %v272, %v272
  %v548 = vpack.c.bf16 %v274, %v274
  %v549 = vpack.c.bf16 %v320, %v320
  %v550 = vpack.c.bf16 %v322, %v322
  %v551 = vpack.c.bf16 %v128, %v128
  %v552 = vpack.c.bf16 %v130, %v130
  %v553 = vpack.c.bf16 %v228, %v228
  %v554 = vpack.c.bf16 %v230, %v230
  %v555 = vpack.c.bf16 %v276, %v276
  %v556 = vpack.c.bf16 %v278, %v278
  %v557 = vpack.c.bf16 %v324, %v324
  %v558 = vpack.c.bf16 %v326, %v326
  %v559 = vpack.c.bf16 %v133, %v133
  %v560 = vpack.c.bf16 %v135, %v135
  %v561 = vpack.c.bf16 %v232, %v232
  %v562 = vpack.c.bf16 %v234, %v234
  %v563 = vpack.c.bf16 %v280, %v280
  %v564 = vpack.c.bf16 %v282, %v282
  %v565 = vpack.c.bf16 %v328, %v328
  %v566 = vpack.c.bf16 %v330, %v330
  %v567 = vpack.c.bf16 %v138, %v138
  %v568 = vpack.c.bf16 %v140, %v140
  %v569 = vpack.c.bf16 %v236, %v236
  %v570 = vpack.c.bf16 %v238, %v238
  %v571 = vpack.c.bf16 %v284, %v284
  %v572 = vpack.c.bf16 %v286, %v286
  %v573 = vpack.c.bf16 %v332, %v332
  %v574 = vpack.c.bf16 %v334, %v334
  %v577 = vunpack.c.l.b16 %v511
  %v578 = vunpack.c.l.b16 %v512
  %v579 = vpack.c.b16 %v578, %v577
  %580 = vrot.lane.b32.xlu0 %v579, 64
  %v581 = vpop.permute.xlu0 %580
  %vm582 = vcmask 130048
  %v584 = vsel %vm582, %v579, 0
  %v587 = vsel %vm582, %v581, 0
  %589 = vmatpush.bf16.xpose.msra.mxu0 0
  %590 = vmatpush.bf16.xpose.msra.mxu0 0
  %591 = vmatpush.bf16.xpose.msra.mxu0 0
  %592 = vmatpush.bf16.xpose.msra.mxu0 0
  %593 = vmatpush.bf16.xpose.msra.mxu0 0
  %594 = vmatpush.bf16.xpose.msra.mxu0 0
  %595 = vmatpush.bf16.xpose.msra.mxu0 0
  %596 = vmatpush.bf16.xpose.msra.mxu0 %v587
  %597 = vmatmul.bf16.gmra.mxu0 %v584
  %v598 = vpop.f32.mrf.mxu0
  %v599 = vadd.f32 0.0, %v598
  %v600 = vpop.f32.mrf.mxu0
  %v601 = vadd.f32 0.0, %v600
  %602 = vdwg.mxu0
  %v605 = vunpack.c.l.b16 %v513
  %v606 = vunpack.c.l.b16 %v514
  %v607 = vpack.c.b16 %v606, %v605
  %608 = vrot.lane.b32.xlu0 %v607, 64
  %v609 = vpop.permute.xlu0 %608
  %v611 = vsel %vm582, %v607, 0
  %v614 = vsel %vm582, %v609, 0
  %616 = vmatpush.bf16.xpose.msra.mxu0 0
  %617 = vmatpush.bf16.xpose.msra.mxu0 0
  %618 = vmatpush.bf16.xpose.msra.mxu0 0
  %619 = vmatpush.bf16.xpose.msra.mxu0 0
  %620 = vmatpush.bf16.xpose.msra.mxu0 0
  %621 = vmatpush.bf16.xpose.msra.mxu0 0
  %622 = vmatpush.bf16.xpose.msra.mxu0 0
  %623 = vmatpush.bf16.xpose.msra.mxu0 %v614
  %624 = vmatmul.bf16.gmra.mxu0 %v611
  %v625 = vpop.f32.mrf.mxu0
  %v626 = vadd.f32 0.0, %v625
  %v627 = vpop.f32.mrf.mxu0
  %v628 = vadd.f32 0.0, %v627
  %629 = vdwg.mxu0
  %v632 = vunpack.c.l.b16 %v515
  %v633 = vunpack.c.l.b16 %v516
  %v634 = vpack.c.b16 %v633, %v632
  %635 = vrot.lane.b32.xlu0 %v634, 64
  %v636 = vpop.permute.xlu0 %635
  %v638 = vsel %vm582, %v634, 0
  %v641 = vsel %vm582, %v636, 0
  %643 = vmatpush.bf16.xpose.msra.mxu0 0
  %644 = vmatpush.bf16.xpose.msra.mxu0 0
  %645 = vmatpush.bf16.xpose.msra.mxu0 0
  %646 = vmatpush.bf16.xpose.msra.mxu0 0
  %647 = vmatpush.bf16.xpose.msra.mxu0 0
  %648 = vmatpush.bf16.xpose.msra.mxu0 0
  %649 = vmatpush.bf16.xpose.msra.mxu0 0
  %650 = vmatpush.bf16.xpose.msra.mxu0 %v641
  %651 = vmatmul.bf16.gmra.mxu0 %v638
  %v652 = vpop.f32.mrf.mxu0
  %v653 = vadd.f32 0.0, %v652
  %v654 = vpop.f32.mrf.mxu0
  %v655 = vadd.f32 0.0, %v654
  %656 = vdwg.mxu0
  %v659 = vunpack.c.l.b16 %v517
  %v660 = vunpack.c.l.b16 %v518
  %v661 = vpack.c.b16 %v660, %v659
  %662 = vrot.lane.b32.xlu0 %v661, 64
  %v663 = vpop.permute.xlu0 %662
  %v665 = vsel %vm582, %v661, 0
  %v668 = vsel %vm582, %v663, 0
  %670 = vmatpush.bf16.xpose.msra.mxu0 0
  %671 = vmatpush.bf16.xpose.msra.mxu0 0
  %672 = vmatpush.bf16.xpose.msra.mxu0 0
  %673 = vmatpush.bf16.xpose.msra.mxu0 0
  %674 = vmatpush.bf16.xpose.msra.mxu0 0
  %675 = vmatpush.bf16.xpose.msra.mxu0 0
  %676 = vmatpush.bf16.xpose.msra.mxu0 0
  %677 = vmatpush.bf16.xpose.msra.mxu0 %v668
  %678 = vmatmul.bf16.gmra.mxu0 %v665
  %v679 = vpop.f32.mrf.mxu0
  %v680 = vadd.f32 0.0, %v679
  %v681 = vpop.f32.mrf.mxu0
  %v682 = vadd.f32 0.0, %v681
  %683 = vdwg.mxu0
  %v686 = vunpack.c.l.b16 %v519
  %v687 = vunpack.c.l.b16 %v520
  %v688 = vpack.c.b16 %v687, %v686
  %689 = vrot.lane.b32.xlu0 %v688, 64
  %v690 = vpop.permute.xlu0 %689
  %v692 = vsel %vm582, %v688, 0
  %v695 = vsel %vm582, %v690, 0
  %697 = vmatpush.bf16.xpose.msra.mxu0 0
  %698 = vmatpush.bf16.xpose.msra.mxu0 0
  %699 = vmatpush.bf16.xpose.msra.mxu0 0
  %700 = vmatpush.bf16.xpose.msra.mxu0 0
  %701 = vmatpush.bf16.xpose.msra.mxu0 0
  %702 = vmatpush.bf16.xpose.msra.mxu0 0
  %703 = vmatpush.bf16.xpose.msra.mxu0 0
  %704 = vmatpush.bf16.xpose.msra.mxu0 %v695
  %705 = vmatmul.bf16.gmra.mxu0 %v692
  %v706 = vpop.f32.mrf.mxu0
  %v707 = vadd.f32 0.0, %v706
  %v708 = vpop.f32.mrf.mxu0
  %v709 = vadd.f32 0.0, %v708
  %710 = vdwg.mxu0
  %v713 = vunpack.c.l.b16 %v521
  %v714 = vunpack.c.l.b16 %v522
  %v715 = vpack.c.b16 %v714, %v713
  %716 = vrot.lane.b32.xlu0 %v715, 64
  %v717 = vpop.permute.xlu0 %716
  %v719 = vsel %vm582, %v715, 0
  %v722 = vsel %vm582, %v717, 0
  %724 = vmatpush.bf16.xpose.msra.mxu0 0
  %725 = vmatpush.bf16.xpose.msra.mxu0 0
  %726 = vmatpush.bf16.xpose.msra.mxu0 0
  %727 = vmatpush.bf16.xpose.msra.mxu0 0
  %728 = vmatpush.bf16.xpose.msra.mxu0 0
  %729 = vmatpush.bf16.xpose.msra.mxu0 0
  %730 = vmatpush.bf16.xpose.msra.mxu0 0
  %731 = vmatpush.bf16.xpose.msra.mxu0 %v722
  %732 = vmatmul.bf16.gmra.mxu0 %v719
  %v733 = vpop.f32.mrf.mxu0
  %v734 = vadd.f32 0.0, %v733
  %v735 = vpop.f32.mrf.mxu0
  %v736 = vadd.f32 0.0, %v735
  %737 = vdwg.mxu0
  %v740 = vunpack.c.l.b16 %v523
  %v741 = vunpack.c.l.b16 %v524
  %v742 = vpack.c.b16 %v741, %v740
  %743 = vrot.lane.b32.xlu0 %v742, 64
  %v744 = vpop.permute.xlu0 %743
  %v746 = vsel %vm582, %v742, 0
  %v749 = vsel %vm582, %v744, 0
  %751 = vmatpush.bf16.xpose.msra.mxu0 0
  %752 = vmatpush.bf16.xpose.msra.mxu0 0
  %753 = vmatpush.bf16.xpose.msra.mxu0 0
  %754 = vmatpush.bf16.xpose.msra.mxu0 0
  %755 = vmatpush.bf16.xpose.msra.mxu0 0
  %756 = vmatpush.bf16.xpose.msra.mxu0 0
  %757 = vmatpush.bf16.xpose.msra.mxu0 0
  %758 = vmatpush.bf16.xpose.msra.mxu0 %v749
  %759 = vmatmul.bf16.gmra.mxu0 %v746
  %v760 = vpop.f32.mrf.mxu0
  %v761 = vadd.f32 0.0, %v760
  %v762 = vpop.f32.mrf.mxu0
  %v763 = vadd.f32 0.0, %v762
  %764 = vdwg.mxu0
  %v767 = vunpack.c.l.b16 %v525
  %v768 = vunpack.c.l.b16 %v526
  %v769 = vpack.c.b16 %v768, %v767
  %770 = vrot.lane.b32.xlu0 %v769, 64
  %v771 = vpop.permute.xlu0 %770
  %v773 = vsel %vm582, %v769, 0
  %v776 = vsel %vm582, %v771, 0
  %778 = vmatpush.bf16.xpose.msra.mxu0 0
  %779 = vmatpush.bf16.xpose.msra.mxu0 0
  %780 = vmatpush.bf16.xpose.msra.mxu0 0
  %781 = vmatpush.bf16.xpose.msra.mxu0 0
  %782 = vmatpush.bf16.xpose.msra.mxu0 0
  %783 = vmatpush.bf16.xpose.msra.mxu0 0
  %784 = vmatpush.bf16.xpose.msra.mxu0 0
  %785 = vmatpush.bf16.xpose.msra.mxu0 %v776
  %786 = vmatmul.bf16.gmra.mxu0 %v773
  %v787 = vpop.f32.mrf.mxu0
  %v788 = vadd.f32 0.0, %v787
  %v789 = vpop.f32.mrf.mxu0
  %v790 = vadd.f32 0.0, %v789
  %791 = vdwg.mxu0
  %v794 = vunpack.c.l.b16 %v527
  %v795 = vunpack.c.l.b16 %v528
  %v796 = vpack.c.b16 %v795, %v794
  %797 = vrot.lane.b32.xlu0 %v796, 64
  %v798 = vpop.permute.xlu0 %797
  %v800 = vsel %vm582, %v796, 0
  %v803 = vsel %vm582, %v798, 0
  %805 = vmatpush.bf16.xpose.msra.mxu0 0
  %806 = vmatpush.bf16.xpose.msra.mxu0 0
  %807 = vmatpush.bf16.xpose.msra.mxu0 0
  %808 = vmatpush.bf16.xpose.msra.mxu0 0
  %809 = vmatpush.bf16.xpose.msra.mxu0 0
  %810 = vmatpush.bf16.xpose.msra.mxu0 0
  %811 = vmatpush.bf16.xpose.msra.mxu0 0
  %812 = vmatpush.bf16.xpose.msra.mxu0 %v803
  %813 = vmatmul.bf16.gmra.mxu0 %v800
  %v814 = vpop.f32.mrf.mxu0
  %v815 = vadd.f32 0.0, %v814
  %v816 = vpop.f32.mrf.mxu0
  %v817 = vadd.f32 0.0, %v816
  %818 = vdwg.mxu0
  %v821 = vunpack.c.l.b16 %v529
  %v822 = vunpack.c.l.b16 %v530
  %v823 = vpack.c.b16 %v822, %v821
  %824 = vrot.lane.b32.xlu0 %v823, 64
  %v825 = vpop.permute.xlu0 %824
  %v827 = vsel %vm582, %v823, 0
  %v830 = vsel %vm582, %v825, 0
  %832 = vmatpush.bf16.xpose.msra.mxu0 0
  %833 = vmatpush.bf16.xpose.msra.mxu0 0
  %834 = vmatpush.bf16.xpose.msra.mxu0 0
  %835 = vmatpush.bf16.xpose.msra.mxu0 0
  %836 = vmatpush.bf16.xpose.msra.mxu0 0
  %837 = vmatpush.bf16.xpose.msra.mxu0 0
  %838 = vmatpush.bf16.xpose.msra.mxu0 0
  %839 = vmatpush.bf16.xpose.msra.mxu0 %v830
  %840 = vmatmul.bf16.gmra.mxu0 %v827
  %v841 = vpop.f32.mrf.mxu0
  %v842 = vadd.f32 0.0, %v841
  %v843 = vpop.f32.mrf.mxu0
  %v844 = vadd.f32 0.0, %v843
  %845 = vdwg.mxu0
  %v848 = vunpack.c.l.b16 %v531
  %v849 = vunpack.c.l.b16 %v532
  %v850 = vpack.c.b16 %v849, %v848
  %851 = vrot.lane.b32.xlu0 %v850, 64
  %v852 = vpop.permute.xlu0 %851
  %v854 = vsel %vm582, %v850, 0
  %v857 = vsel %vm582, %v852, 0
  %859 = vmatpush.bf16.xpose.msra.mxu0 0
  %860 = vmatpush.bf16.xpose.msra.mxu0 0
  %861 = vmatpush.bf16.xpose.msra.mxu0 0
  %862 = vmatpush.bf16.xpose.msra.mxu0 0
  %863 = vmatpush.bf16.xpose.msra.mxu0 0
  %864 = vmatpush.bf16.xpose.msra.mxu0 0
  %865 = vmatpush.bf16.xpose.msra.mxu0 0
  %866 = vmatpush.bf16.xpose.msra.mxu0 %v857
  %867 = vmatmul.bf16.gmra.mxu0 %v854
  %v868 = vpop.f32.mrf.mxu0
  %v869 = vadd.f32 0.0, %v868
  %v870 = vpop.f32.mrf.mxu0
  %v871 = vadd.f32 0.0, %v870
  %872 = vdwg.mxu0
  %v875 = vunpack.c.l.b16 %v533
  %v876 = vunpack.c.l.b16 %v534
  %v877 = vpack.c.b16 %v876, %v875
  %878 = vrot.lane.b32.xlu0 %v877, 64
  %v879 = vpop.permute.xlu0 %878
  %v881 = vsel %vm582, %v877, 0
  %v884 = vsel %vm582, %v879, 0
  %886 = vmatpush.bf16.xpose.msra.mxu0 0
  %887 = vmatpush.bf16.xpose.msra.mxu0 0
  %888 = vmatpush.bf16.xpose.msra.mxu0 0
  %889 = vmatpush.bf16.xpose.msra.mxu0 0
  %890 = vmatpush.bf16.xpose.msra.mxu0 0
  %891 = vmatpush.bf16.xpose.msra.mxu0 0
  %892 = vmatpush.bf16.xpose.msra.mxu0 0
  %893 = vmatpush.bf16.xpose.msra.mxu0 %v884
  %894 = vmatmul.bf16.gmra.mxu0 %v881
  %v895 = vpop.f32.mrf.mxu0
  %v896 = vadd.f32 0.0, %v895
  %v897 = vpop.f32.mrf.mxu0
  %v898 = vadd.f32 0.0, %v897
  %899 = vdwg.mxu0
  %v902 = vunpack.c.l.b16 %v535
  %v903 = vunpack.c.l.b16 %v536
  %v904 = vpack.c.b16 %v903, %v902
  %905 = vrot.lane.b32.xlu0 %v904, 64
  %v906 = vpop.permute.xlu0 %905
  %v908 = vsel %vm582, %v904, 0
  %v911 = vsel %vm582, %v906, 0
  %913 = vmatpush.bf16.xpose.msra.mxu0 0
  %914 = vmatpush.bf16.xpose.msra.mxu0 0
  %915 = vmatpush.bf16.xpose.msra.mxu0 0
  %916 = vmatpush.bf16.xpose.msra.mxu0 0
  %917 = vmatpush.bf16.xpose.msra.mxu0 0
  %918 = vmatpush.bf16.xpose.msra.mxu0 0
  %919 = vmatpush.bf16.xpose.msra.mxu0 0
  %920 = vmatpush.bf16.xpose.msra.mxu0 %v911
  %921 = vmatmul.bf16.gmra.mxu0 %v908
  %v922 = vpop.f32.mrf.mxu0
  %v923 = vadd.f32 0.0, %v922
  %v924 = vpop.f32.mrf.mxu0
  %v925 = vadd.f32 0.0, %v924
  %926 = vdwg.mxu0
  %v929 = vunpack.c.l.b16 %v537
  %v930 = vunpack.c.l.b16 %v538
  %v931 = vpack.c.b16 %v930, %v929
  %932 = vrot.lane.b32.xlu0 %v931, 64
  %v933 = vpop.permute.xlu0 %932
  %v935 = vsel %vm582, %v931, 0
  %v938 = vsel %vm582, %v933, 0
  %940 = vmatpush.bf16.xpose.msra.mxu0 0
  %941 = vmatpush.bf16.xpose.msra.mxu0 0
  %942 = vmatpush.bf16.xpose.msra.mxu0 0
  %943 = vmatpush.bf16.xpose.msra.mxu0 0
  %944 = vmatpush.bf16.xpose.msra.mxu0 0
  %945 = vmatpush.bf16.xpose.msra.mxu0 0
  %946 = vmatpush.bf16.xpose.msra.mxu0 0
  %947 = vmatpush.bf16.xpose.msra.mxu0 %v938
  %948 = vmatmul.bf16.gmra.mxu0 %v935
  %v949 = vpop.f32.mrf.mxu0
  %v950 = vadd.f32 0.0, %v949
  %v951 = vpop.f32.mrf.mxu0
  %v952 = vadd.f32 0.0, %v951
  %953 = vdwg.mxu0
  %v956 = vunpack.c.l.b16 %v539
  %v957 = vunpack.c.l.b16 %v540
  %v958 = vpack.c.b16 %v957, %v956
  %959 = vrot.lane.b32.xlu0 %v958, 64
  %v960 = vpop.permute.xlu0 %959
  %v962 = vsel %vm582, %v958, 0
  %v965 = vsel %vm582, %v960, 0
  %967 = vmatpush.bf16.xpose.msra.mxu0 0
  %968 = vmatpush.bf16.xpose.msra.mxu0 0
  %969 = vmatpush.bf16.xpose.msra.mxu0 0
  %970 = vmatpush.bf16.xpose.msra.mxu0 0
  %971 = vmatpush.bf16.xpose.msra.mxu0 0
  %972 = vmatpush.bf16.xpose.msra.mxu0 0
  %973 = vmatpush.bf16.xpose.msra.mxu0 0
  %974 = vmatpush.bf16.xpose.msra.mxu0 %v965
  %975 = vmatmul.bf16.gmra.mxu0 %v962
  %v976 = vpop.f32.mrf.mxu0
  %v977 = vadd.f32 0.0, %v976
  %v978 = vpop.f32.mrf.mxu0
  %v979 = vadd.f32 0.0, %v978
  %980 = vdwg.mxu0
  %v983 = vunpack.c.l.b16 %v541
  %v984 = vunpack.c.l.b16 %v542
  %v985 = vpack.c.b16 %v984, %v983
  %986 = vrot.lane.b32.xlu0 %v985, 64
  %v987 = vpop.permute.xlu0 %986
  %v989 = vsel %vm582, %v985, 0
  %v992 = vsel %vm582, %v987, 0
  %994 = vmatpush.bf16.xpose.msra.mxu0 0
  %995 = vmatpush.bf16.xpose.msra.mxu0 0
  %996 = vmatpush.bf16.xpose.msra.mxu0 0
  %997 = vmatpush.bf16.xpose.msra.mxu0 0
  %998 = vmatpush.bf16.xpose.msra.mxu0 0
  %999 = vmatpush.bf16.xpose.msra.mxu0 0
  %1000 = vmatpush.bf16.xpose.msra.mxu0 0
  %1001 = vmatpush.bf16.xpose.msra.mxu0 %v992
  %1002 = vmatmul.bf16.gmra.mxu0 %v989
  %v1003 = vpop.f32.mrf.mxu0
  %v1004 = vadd.f32 0.0, %v1003
  %v1005 = vpop.f32.mrf.mxu0
  %v1006 = vadd.f32 0.0, %v1005
  %1007 = vdwg.mxu0
  %v1010 = vunpack.c.l.b16 %v543
  %v1011 = vunpack.c.l.b16 %v544
  %v1012 = vpack.c.b16 %v1011, %v1010
  %1013 = vrot.lane.b32.xlu0 %v1012, 64
  %v1014 = vpop.permute.xlu0 %1013
  %v1016 = vsel %vm582, %v1012, 0
  %v1019 = vsel %vm582, %v1014, 0
  %1021 = vmatpush.bf16.xpose.msra.mxu0 0
  %1022 = vmatpush.bf16.xpose.msra.mxu0 0
  %1023 = vmatpush.bf16.xpose.msra.mxu0 0
  %1024 = vmatpush.bf16.xpose.msra.mxu0 0
  %1025 = vmatpush.bf16.xpose.msra.mxu0 0
  %1026 = vmatpush.bf16.xpose.msra.mxu0 0
  %1027 = vmatpush.bf16.xpose.msra.mxu0 0
  %1028 = vmatpush.bf16.xpose.msra.mxu0 %v1019
  %1029 = vmatmul.bf16.gmra.mxu0 %v1016
  %v1030 = vpop.f32.mrf.mxu0
  %v1031 = vadd.f32 0.0, %v1030
  %v1032 = vpop.f32.mrf.mxu0
  %v1033 = vadd.f32 0.0, %v1032
  %1034 = vdwg.mxu0
  %v1037 = vunpack.c.l.b16 %v545
  %v1038 = vunpack.c.l.b16 %v546
  %v1039 = vpack.c.b16 %v1038, %v1037
  %1040 = vrot.lane.b32.xlu0 %v1039, 64
  %v1041 = vpop.permute.xlu0 %1040
  %v1043 = vsel %vm582, %v1039, 0
  %v1046 = vsel %vm582, %v1041, 0
  %1048 = vmatpush.bf16.xpose.msra.mxu0 0
  %1049 = vmatpush.bf16.xpose.msra.mxu0 0
  %1050 = vmatpush.bf16.xpose.msra.mxu0 0
  %1051 = vmatpush.bf16.xpose.msra.mxu0 0
  %1052 = vmatpush.bf16.xpose.msra.mxu0 0
  %1053 = vmatpush.bf16.xpose.msra.mxu0 0
  %1054 = vmatpush.bf16.xpose.msra.mxu0 0
  %1055 = vmatpush.bf16.xpose.msra.mxu0 %v1046
  %1056 = vmatmul.bf16.gmra.mxu0 %v1043
  %v1057 = vpop.f32.mrf.mxu0
  %v1058 = vadd.f32 0.0, %v1057
  %v1059 = vpop.f32.mrf.mxu0
  %v1060 = vadd.f32 0.0, %v1059
  %1061 = vdwg.mxu0
  %v1064 = vunpack.c.l.b16 %v547
  %v1065 = vunpack.c.l.b16 %v548
  %v1066 = vpack.c.b16 %v1065, %v1064
  %1067 = vrot.lane.b32.xlu0 %v1066, 64
  %v1068 = vpop.permute.xlu0 %1067
  %v1070 = vsel %vm582, %v1066, 0
  %v1073 = vsel %vm582, %v1068, 0
  %1075 = vmatpush.bf16.xpose.msra.mxu0 0
  %1076 = vmatpush.bf16.xpose.msra.mxu0 0
  %1077 = vmatpush.bf16.xpose.msra.mxu0 0
  %1078 = vmatpush.bf16.xpose.msra.mxu0 0
  %1079 = vmatpush.bf16.xpose.msra.mxu0 0
  %1080 = vmatpush.bf16.xpose.msra.mxu0 0
  %1081 = vmatpush.bf16.xpose.msra.mxu0 0
  %1082 = vmatpush.bf16.xpose.msra.mxu0 %v1073
  %1083 = vmatmul.bf16.gmra.mxu0 %v1070
  %v1084 = vpop.f32.mrf.mxu0
  %v1085 = vadd.f32 0.0, %v1084
  %v1086 = vpop.f32.mrf.mxu0
  %v1087 = vadd.f32 0.0, %v1086
  %1088 = vdwg.mxu0
  %v1091 = vunpack.c.l.b16 %v549
  %v1092 = vunpack.c.l.b16 %v550
  %v1093 = vpack.c.b16 %v1092, %v1091
  %1094 = vrot.lane.b32.xlu0 %v1093, 64
  %v1095 = vpop.permute.xlu0 %1094
  %v1097 = vsel %vm582, %v1093, 0
  %v1100 = vsel %vm582, %v1095, 0
  %1102 = vmatpush.bf16.xpose.msra.mxu0 0
  %1103 = vmatpush.bf16.xpose.msra.mxu0 0
  %1104 = vmatpush.bf16.xpose.msra.mxu0 0
  %1105 = vmatpush.bf16.xpose.msra.mxu0 0
  %1106 = vmatpush.bf16.xpose.msra.mxu0 0
  %1107 = vmatpush.bf16.xpose.msra.mxu0 0
  %1108 = vmatpush.bf16.xpose.msra.mxu0 0
  %1109 = vmatpush.bf16.xpose.msra.mxu0 %v1100
  %1110 = vmatmul.bf16.gmra.mxu0 %v1097
  %v1111 = vpop.f32.mrf.mxu0
  %v1112 = vadd.f32 0.0, %v1111
  %v1113 = vpop.f32.mrf.mxu0
  %v1114 = vadd.f32 0.0, %v1113
  %1115 = vdwg.mxu0
  %v1118 = vunpack.c.l.b16 %v551
  %v1119 = vunpack.c.l.b16 %v552
  %v1120 = vpack.c.b16 %v1119, %v1118
  %1121 = vrot.lane.b32.xlu0 %v1120, 64
  %v1122 = vpop.permute.xlu0 %1121
  %v1124 = vsel %vm582, %v1120, 0
  %v1127 = vsel %vm582, %v1122, 0
  %1129 = vmatpush.bf16.xpose.msra.mxu0 0
  %1130 = vmatpush.bf16.xpose.msra.mxu0 0
  %1131 = vmatpush.bf16.xpose.msra.mxu0 0
  %1132 = vmatpush.bf16.xpose.msra.mxu0 0
  %1133 = vmatpush.bf16.xpose.msra.mxu0 0
  %1134 = vmatpush.bf16.xpose.msra.mxu0 0
  %1135 = vmatpush.bf16.xpose.msra.mxu0 0
  %1136 = vmatpush.bf16.xpose.msra.mxu0 %v1127
  %1137 = vmatmul.bf16.gmra.mxu0 %v1124
  %v1138 = vpop.f32.mrf.mxu0
  %v1139 = vadd.f32 0.0, %v1138
  %v1140 = vpop.f32.mrf.mxu0
  %v1141 = vadd.f32 0.0, %v1140
  %1142 = vdwg.mxu0
  %v1145 = vunpack.c.l.b16 %v553
  %v1146 = vunpack.c.l.b16 %v554
  %v1147 = vpack.c.b16 %v1146, %v1145
  %1148 = vrot.lane.b32.xlu0 %v1147, 64
  %v1149 = vpop.permute.xlu0 %1148
  %v1151 = vsel %vm582, %v1147, 0
  %v1154 = vsel %vm582, %v1149, 0
  %1156 = vmatpush.bf16.xpose.msra.mxu0 0
  %1157 = vmatpush.bf16.xpose.msra.mxu0 0
  %1158 = vmatpush.bf16.xpose.msra.mxu0 0
  %1159 = vmatpush.bf16.xpose.msra.mxu0 0
  %1160 = vmatpush.bf16.xpose.msra.mxu0 0
  %1161 = vmatpush.bf16.xpose.msra.mxu0 0
  %1162 = vmatpush.bf16.xpose.msra.mxu0 0
  %1163 = vmatpush.bf16.xpose.msra.mxu0 %v1154
  %1164 = vmatmul.bf16.gmra.mxu0 %v1151
  %v1165 = vpop.f32.mrf.mxu0
  %v1166 = vadd.f32 0.0, %v1165
  %v1167 = vpop.f32.mrf.mxu0
  %v1168 = vadd.f32 0.0, %v1167
  %1169 = vdwg.mxu0
  %v1172 = vunpack.c.l.b16 %v555
  %v1173 = vunpack.c.l.b16 %v556
  %v1174 = vpack.c.b16 %v1173, %v1172
  %1175 = vrot.lane.b32.xlu0 %v1174, 64
  %v1176 = vpop.permute.xlu0 %1175
  %v1178 = vsel %vm582, %v1174, 0
  %v1181 = vsel %vm582, %v1176, 0
  %1183 = vmatpush.bf16.xpose.msra.mxu0 0
  %1184 = vmatpush.bf16.xpose.msra.mxu0 0
  %1185 = vmatpush.bf16.xpose.msra.mxu0 0
  %1186 = vmatpush.bf16.xpose.msra.mxu0 0
  %1187 = vmatpush.bf16.xpose.msra.mxu0 0
  %1188 = vmatpush.bf16.xpose.msra.mxu0 0
  %1189 = vmatpush.bf16.xpose.msra.mxu0 0
  %1190 = vmatpush.bf16.xpose.msra.mxu0 %v1181
  %1191 = vmatmul.bf16.gmra.mxu0 %v1178
  %v1192 = vpop.f32.mrf.mxu0
  %v1193 = vadd.f32 0.0, %v1192
  %v1194 = vpop.f32.mrf.mxu0
  %v1195 = vadd.f32 0.0, %v1194
  %1196 = vdwg.mxu0
  %v1199 = vunpack.c.l.b16 %v557
  %v1200 = vunpack.c.l.b16 %v558
  %v1201 = vpack.c.b16 %v1200, %v1199
  %1202 = vrot.lane.b32.xlu0 %v1201, 64
  %v1203 = vpop.permute.xlu0 %1202
  %v1205 = vsel %vm582, %v1201, 0
  %v1208 = vsel %vm582, %v1203, 0
  %1210 = vmatpush.bf16.xpose.msra.mxu0 0
  %1211 = vmatpush.bf16.xpose.msra.mxu0 0
  %1212 = vmatpush.bf16.xpose.msra.mxu0 0
  %1213 = vmatpush.bf16.xpose.msra.mxu0 0
  %1214 = vmatpush.bf16.xpose.msra.mxu0 0
  %1215 = vmatpush.bf16.xpose.msra.mxu0 0
  %1216 = vmatpush.bf16.xpose.msra.mxu0 0
  %1217 = vmatpush.bf16.xpose.msra.mxu0 %v1208
  %1218 = vmatmul.bf16.gmra.mxu0 %v1205
  %v1219 = vpop.f32.mrf.mxu0
  %v1220 = vadd.f32 0.0, %v1219
  %v1221 = vpop.f32.mrf.mxu0
  %v1222 = vadd.f32 0.0, %v1221
  %1223 = vdwg.mxu0
  %v1226 = vunpack.c.l.b16 %v559
  %v1227 = vunpack.c.l.b16 %v560
  %v1228 = vpack.c.b16 %v1227, %v1226
  %1229 = vrot.lane.b32.xlu0 %v1228, 64
  %v1230 = vpop.permute.xlu0 %1229
  %v1232 = vsel %vm582, %v1228, 0
  %v1235 = vsel %vm582, %v1230, 0
  %1237 = vmatpush.bf16.xpose.msra.mxu0 0
  %1238 = vmatpush.bf16.xpose.msra.mxu0 0
  %1239 = vmatpush.bf16.xpose.msra.mxu0 0
  %1240 = vmatpush.bf16.xpose.msra.mxu0 0
  %1241 = vmatpush.bf16.xpose.msra.mxu0 0
  %1242 = vmatpush.bf16.xpose.msra.mxu0 0
  %1243 = vmatpush.bf16.xpose.msra.mxu0 0
  %1244 = vmatpush.bf16.xpose.msra.mxu0 %v1235
  %1245 = vmatmul.bf16.gmra.mxu0 %v1232
  %v1246 = vpop.f32.mrf.mxu0
  %v1247 = vadd.f32 0.0, %v1246
  %v1248 = vpop.f32.mrf.mxu0
  %v1249 = vadd.f32 0.0, %v1248
  %1250 = vdwg.mxu0
  %v1253 = vunpack.c.l.b16 %v561
  %v1254 = vunpack.c.l.b16 %v562
  %v1255 = vpack.c.b16 %v1254, %v1253
  %1256 = vrot.lane.b32.xlu0 %v1255, 64
  %v1257 = vpop.permute.xlu0 %1256
  %v1259 = vsel %vm582, %v1255, 0
  %v1262 = vsel %vm582, %v1257, 0
  %1264 = vmatpush.bf16.xpose.msra.mxu0 0
  %1265 = vmatpush.bf16.xpose.msra.mxu0 0
  %1266 = vmatpush.bf16.xpose.msra.mxu0 0
  %1267 = vmatpush.bf16.xpose.msra.mxu0 0
  %1268 = vmatpush.bf16.xpose.msra.mxu0 0
  %1269 = vmatpush.bf16.xpose.msra.mxu0 0
  %1270 = vmatpush.bf16.xpose.msra.mxu0 0
  %1271 = vmatpush.bf16.xpose.msra.mxu0 %v1262
  %1272 = vmatmul.bf16.gmra.mxu0 %v1259
  %v1273 = vpop.f32.mrf.mxu0
  %v1274 = vadd.f32 0.0, %v1273
  %v1275 = vpop.f32.mrf.mxu0
  %v1276 = vadd.f32 0.0, %v1275
  %1277 = vdwg.mxu0
  %v1280 = vunpack.c.l.b16 %v563
  %v1281 = vunpack.c.l.b16 %v564
  %v1282 = vpack.c.b16 %v1281, %v1280
  %1283 = vrot.lane.b32.xlu0 %v1282, 64
  %v1284 = vpop.permute.xlu0 %1283
  %v1286 = vsel %vm582, %v1282, 0
  %v1289 = vsel %vm582, %v1284, 0
  %1291 = vmatpush.bf16.xpose.msra.mxu0 0
  %1292 = vmatpush.bf16.xpose.msra.mxu0 0
  %1293 = vmatpush.bf16.xpose.msra.mxu0 0
  %1294 = vmatpush.bf16.xpose.msra.mxu0 0
  %1295 = vmatpush.bf16.xpose.msra.mxu0 0
  %1296 = vmatpush.bf16.xpose.msra.mxu0 0
  %1297 = vmatpush.bf16.xpose.msra.mxu0 0
  %1298 = vmatpush.bf16.xpose.msra.mxu0 %v1289
  %1299 = vmatmul.bf16.gmra.mxu0 %v1286
  %v1300 = vpop.f32.mrf.mxu0
  %v1301 = vadd.f32 0.0, %v1300
  %v1302 = vpop.f32.mrf.mxu0
  %v1303 = vadd.f32 0.0, %v1302
  %1304 = vdwg.mxu0
  %v1307 = vunpack.c.l.b16 %v565
  %v1308 = vunpack.c.l.b16 %v566
  %v1309 = vpack.c.b16 %v1308, %v1307
  %1310 = vrot.lane.b32.xlu0 %v1309, 64
  %v1311 = vpop.permute.xlu0 %1310
  %v1313 = vsel %vm582, %v1309, 0
  %v1316 = vsel %vm582, %v1311, 0
  %1318 = vmatpush.bf16.xpose.msra.mxu0 0
  %1319 = vmatpush.bf16.xpose.msra.mxu0 0
  %1320 = vmatpush.bf16.xpose.msra.mxu0 0
  %1321 = vmatpush.bf16.xpose.msra.mxu0 0
  %1322 = vmatpush.bf16.xpose.msra.mxu0 0
  %1323 = vmatpush.bf16.xpose.msra.mxu0 0
  %1324 = vmatpush.bf16.xpose.msra.mxu0 0
  %1325 = vmatpush.bf16.xpose.msra.mxu0 %v1316
  %1326 = vmatmul.bf16.gmra.mxu0 %v1313
  %v1327 = vpop.f32.mrf.mxu0
  %v1328 = vadd.f32 0.0, %v1327
  %v1329 = vpop.f32.mrf.mxu0
  %v1330 = vadd.f32 0.0, %v1329
  %1331 = vdwg.mxu0
  %v1334 = vunpack.c.l.b16 %v567
  %v1335 = vunpack.c.l.b16 %v568
  %v1336 = vpack.c.b16 %v1335, %v1334
  %1337 = vrot.lane.b32.xlu0 %v1336, 64
  %v1338 = vpop.permute.xlu0 %1337
  %v1340 = vsel %vm582, %v1336, 0
  %v1343 = vsel %vm582, %v1338, 0
  %1345 = vmatpush.bf16.xpose.msra.mxu0 0
  %1346 = vmatpush.bf16.xpose.msra.mxu0 0
  %1347 = vmatpush.bf16.xpose.msra.mxu0 0
  %1348 = vmatpush.bf16.xpose.msra.mxu0 0
  %1349 = vmatpush.bf16.xpose.msra.mxu0 0
  %1350 = vmatpush.bf16.xpose.msra.mxu0 0
  %1351 = vmatpush.bf16.xpose.msra.mxu0 0
  %1352 = vmatpush.bf16.xpose.msra.mxu0 %v1343
  %1353 = vmatmul.bf16.gmra.mxu0 %v1340
  %v1354 = vpop.f32.mrf.mxu0
  %v1355 = vadd.f32 0.0, %v1354
  %v1356 = vpop.f32.mrf.mxu0
  %v1357 = vadd.f32 0.0, %v1356
  %1358 = vdwg.mxu0
  %v1361 = vunpack.c.l.b16 %v569
  %v1362 = vunpack.c.l.b16 %v570
  %v1363 = vpack.c.b16 %v1362, %v1361
  %1364 = vrot.lane.b32.xlu0 %v1363, 64
  %v1365 = vpop.permute.xlu0 %1364
  %v1367 = vsel %vm582, %v1363, 0
  %v1370 = vsel %vm582, %v1365, 0
  %1372 = vmatpush.bf16.xpose.msra.mxu0 0
  %1373 = vmatpush.bf16.xpose.msra.mxu0 0
  %1374 = vmatpush.bf16.xpose.msra.mxu0 0
  %1375 = vmatpush.bf16.xpose.msra.mxu0 0
  %1376 = vmatpush.bf16.xpose.msra.mxu0 0
  %1377 = vmatpush.bf16.xpose.msra.mxu0 0
  %1378 = vmatpush.bf16.xpose.msra.mxu0 0
  %1379 = vmatpush.bf16.xpose.msra.mxu0 %v1370
  %1380 = vmatmul.bf16.gmra.mxu0 %v1367
  %v1381 = vpop.f32.mrf.mxu0
  %v1382 = vadd.f32 0.0, %v1381
  %v1383 = vpop.f32.mrf.mxu0
  %v1384 = vadd.f32 0.0, %v1383
  %1385 = vdwg.mxu0
  %v1388 = vunpack.c.l.b16 %v571
  %v1389 = vunpack.c.l.b16 %v572
  %v1390 = vpack.c.b16 %v1389, %v1388
  %1391 = vrot.lane.b32.xlu0 %v1390, 64
  %v1392 = vpop.permute.xlu0 %1391
  %v1394 = vsel %vm582, %v1390, 0
  %v1397 = vsel %vm582, %v1392, 0
  %1399 = vmatpush.bf16.xpose.msra.mxu0 0
  %1400 = vmatpush.bf16.xpose.msra.mxu0 0
  %1401 = vmatpush.bf16.xpose.msra.mxu0 0
  %1402 = vmatpush.bf16.xpose.msra.mxu0 0
  %1403 = vmatpush.bf16.xpose.msra.mxu0 0
  %1404 = vmatpush.bf16.xpose.msra.mxu0 0
  %1405 = vmatpush.bf16.xpose.msra.mxu0 0
  %1406 = vmatpush.bf16.xpose.msra.mxu0 %v1397
  %1407 = vmatmul.bf16.gmra.mxu0 %v1394
  %v1408 = vpop.f32.mrf.mxu0
  %v1409 = vadd.f32 0.0, %v1408
  %v1410 = vpop.f32.mrf.mxu0
  %v1411 = vadd.f32 0.0, %v1410
  %1412 = vdwg.mxu0
  %v1415 = vunpack.c.l.b16 %v573
  %v1416 = vunpack.c.l.b16 %v574
  %v1417 = vpack.c.b16 %v1416, %v1415
  %1418 = vrot.lane.b32.xlu0 %v1417, 64
  %v1419 = vpop.permute.xlu0 %1418
  %v1421 = vsel %vm582, %v1417, 0
  %v1424 = vsel %vm582, %v1419, 0
  %1426 = vmatpush.bf16.xpose.msra.mxu0 0
  %1427 = vmatpush.bf16.xpose.msra.mxu0 0
  %1428 = vmatpush.bf16.xpose.msra.mxu0 0
  %1429 = vmatpush.bf16.xpose.msra.mxu0 0
  %1430 = vmatpush.bf16.xpose.msra.mxu0 0
  %1431 = vmatpush.bf16.xpose.msra.mxu0 0
  %1432 = vmatpush.bf16.xpose.msra.mxu0 0
  %1433 = vmatpush.bf16.xpose.msra.mxu0 %v1424
  %1434 = vmatmul.bf16.gmra.mxu0 %v1421
  %v1435 = vpop.f32.mrf.mxu0
  %v1436 = vadd.f32 0.0, %v1435
  %v1437 = vpop.f32.mrf.mxu0
  %v1438 = vadd.f32 0.0, %v1437
  %1439 = vdwg.mxu0
  %v1440 = vsel %vm582, %v599, -inf
  %1441 = vmax.xlane.f32.xlu0 %v1440
  %v1442 = vpop.xlane.xlu0 %1441
  %v1443 = vsel %vm582, %v601, -inf
  %1444 = vmax.xlane.f32.xlu0 %v1443
  %v1445 = vpop.xlane.xlu0 %1444
  %v1446 = vsel %vm582, %v626, -inf
  %1447 = vmax.xlane.f32.xlu0 %v1446
  %v1448 = vpop.xlane.xlu0 %1447
  %v1449 = vsel %vm582, %v628, -inf
  %1450 = vmax.xlane.f32.xlu0 %v1449
  %v1451 = vpop.xlane.xlu0 %1450
  %v1452 = vsel %vm582, %v653, -inf
  %1453 = vmax.xlane.f32.xlu0 %v1452
  %v1454 = vpop.xlane.xlu0 %1453
  %v1455 = vsel %vm582, %v655, -inf
  %1456 = vmax.xlane.f32.xlu0 %v1455
  %v1457 = vpop.xlane.xlu0 %1456
  %v1458 = vsel %vm582, %v680, -inf
  %1459 = vmax.xlane.f32.xlu0 %v1458
  %v1460 = vpop.xlane.xlu0 %1459
  %v1461 = vsel %vm582, %v682, -inf
  %1462 = vmax.xlane.f32.xlu0 %v1461
  %v1463 = vpop.xlane.xlu0 %1462
  %v1464 = vsel %vm582, %v707, -inf
  %1465 = vmax.xlane.f32.xlu0 %v1464
  %v1466 = vpop.xlane.xlu0 %1465
  %v1467 = vsel %vm582, %v709, -inf
  %1468 = vmax.xlane.f32.xlu0 %v1467
  %v1469 = vpop.xlane.xlu0 %1468
  %v1470 = vsel %vm582, %v734, -inf
  %1471 = vmax.xlane.f32.xlu0 %v1470
  %v1472 = vpop.xlane.xlu0 %1471
  %v1473 = vsel %vm582, %v736, -inf
  %1474 = vmax.xlane.f32.xlu0 %v1473
  %v1475 = vpop.xlane.xlu0 %1474
  %v1476 = vsel %vm582, %v761, -inf
  %1477 = vmax.xlane.f32.xlu0 %v1476
  %v1478 = vpop.xlane.xlu0 %1477
  %v1479 = vsel %vm582, %v763, -inf
  %1480 = vmax.xlane.f32.xlu0 %v1479
  %v1481 = vpop.xlane.xlu0 %1480
  %v1482 = vsel %vm582, %v788, -inf
  %1483 = vmax.xlane.f32.xlu0 %v1482
  %v1484 = vpop.xlane.xlu0 %1483
  %v1485 = vsel %vm582, %v790, -inf
  %1486 = vmax.xlane.f32.xlu0 %v1485
  %v1487 = vpop.xlane.xlu0 %1486
  %v1488 = vsel %vm582, %v815, -inf
  %1489 = vmax.xlane.f32.xlu0 %v1488
  %v1490 = vpop.xlane.xlu0 %1489
  %v1491 = vsel %vm582, %v817, -inf
  %1492 = vmax.xlane.f32.xlu0 %v1491
  %v1493 = vpop.xlane.xlu0 %1492
  %v1494 = vsel %vm582, %v842, -inf
  %1495 = vmax.xlane.f32.xlu0 %v1494
  %v1496 = vpop.xlane.xlu0 %1495
  %v1497 = vsel %vm582, %v844, -inf
  %1498 = vmax.xlane.f32.xlu0 %v1497
  %v1499 = vpop.xlane.xlu0 %1498
  %v1500 = vsel %vm582, %v869, -inf
  %1501 = vmax.xlane.f32.xlu0 %v1500
  %v1502 = vpop.xlane.xlu0 %1501
  %v1503 = vsel %vm582, %v871, -inf
  %1504 = vmax.xlane.f32.xlu0 %v1503
  %v1505 = vpop.xlane.xlu0 %1504
  %v1506 = vsel %vm582, %v896, -inf
  %1507 = vmax.xlane.f32.xlu0 %v1506
  %v1508 = vpop.xlane.xlu0 %1507
  %v1509 = vsel %vm582, %v898, -inf
  %1510 = vmax.xlane.f32.xlu0 %v1509
  %v1511 = vpop.xlane.xlu0 %1510
  %v1512 = vsel %vm582, %v923, -inf
  %1513 = vmax.xlane.f32.xlu0 %v1512
  %v1514 = vpop.xlane.xlu0 %1513
  %v1515 = vsel %vm582, %v925, -inf
  %1516 = vmax.xlane.f32.xlu0 %v1515
  %v1517 = vpop.xlane.xlu0 %1516
  %v1518 = vsel %vm582, %v950, -inf
  %1519 = vmax.xlane.f32.xlu0 %v1518
  %v1520 = vpop.xlane.xlu0 %1519
  %v1521 = vsel %vm582, %v952, -inf
  %1522 = vmax.xlane.f32.xlu0 %v1521
  %v1523 = vpop.xlane.xlu0 %1522
  %v1524 = vsel %vm582, %v977, -inf
  %1525 = vmax.xlane.f32.xlu0 %v1524
  %v1526 = vpop.xlane.xlu0 %1525
  %v1527 = vsel %vm582, %v979, -inf
  %1528 = vmax.xlane.f32.xlu0 %v1527
  %v1529 = vpop.xlane.xlu0 %1528
  %v1530 = vsel %vm582, %v1004, -inf
  %1531 = vmax.xlane.f32.xlu0 %v1530
  %v1532 = vpop.xlane.xlu0 %1531
  %v1533 = vsel %vm582, %v1006, -inf
  %1534 = vmax.xlane.f32.xlu0 %v1533
  %v1535 = vpop.xlane.xlu0 %1534
  %v1536 = vsel %vm582, %v1031, -inf
  %1537 = vmax.xlane.f32.xlu0 %v1536
  %v1538 = vpop.xlane.xlu0 %1537
  %v1539 = vsel %vm582, %v1033, -inf
  %1540 = vmax.xlane.f32.xlu0 %v1539
  %v1541 = vpop.xlane.xlu0 %1540
  %v1542 = vsel %vm582, %v1058, -inf
  %1543 = vmax.xlane.f32.xlu0 %v1542
  %v1544 = vpop.xlane.xlu0 %1543
  %v1545 = vsel %vm582, %v1060, -inf
  %1546 = vmax.xlane.f32.xlu0 %v1545
  %v1547 = vpop.xlane.xlu0 %1546
  %v1548 = vsel %vm582, %v1085, -inf
  %1549 = vmax.xlane.f32.xlu0 %v1548
  %v1550 = vpop.xlane.xlu0 %1549
  %v1551 = vsel %vm582, %v1087, -inf
  %1552 = vmax.xlane.f32.xlu0 %v1551
  %v1553 = vpop.xlane.xlu0 %1552
  %v1554 = vsel %vm582, %v1112, -inf
  %1555 = vmax.xlane.f32.xlu0 %v1554
  %v1556 = vpop.xlane.xlu0 %1555
  %v1557 = vsel %vm582, %v1114, -inf
  %1558 = vmax.xlane.f32.xlu0 %v1557
  %v1559 = vpop.xlane.xlu0 %1558
  %v1560 = vsel %vm582, %v1139, -inf
  %1561 = vmax.xlane.f32.xlu0 %v1560
  %v1562 = vpop.xlane.xlu0 %1561
  %v1563 = vsel %vm582, %v1141, -inf
  %1564 = vmax.xlane.f32.xlu0 %v1563
  %v1565 = vpop.xlane.xlu0 %1564
  %v1566 = vsel %vm582, %v1166, -inf
  %1567 = vmax.xlane.f32.xlu0 %v1566
  %v1568 = vpop.xlane.xlu0 %1567
  %v1569 = vsel %vm582, %v1168, -inf
  %1570 = vmax.xlane.f32.xlu0 %v1569
  %v1571 = vpop.xlane.xlu0 %1570
  %v1572 = vsel %vm582, %v1193, -inf
  %1573 = vmax.xlane.f32.xlu0 %v1572
  %v1574 = vpop.xlane.xlu0 %1573
  %v1575 = vsel %vm582, %v1195, -inf
  %1576 = vmax.xlane.f32.xlu0 %v1575
  %v1577 = vpop.xlane.xlu0 %1576
  %v1578 = vsel %vm582, %v1220, -inf
  %1579 = vmax.xlane.f32.xlu0 %v1578
  %v1580 = vpop.xlane.xlu0 %1579
  %v1581 = vsel %vm582, %v1222, -inf
  %1582 = vmax.xlane.f32.xlu0 %v1581
  %v1583 = vpop.xlane.xlu0 %1582
  %v1584 = vsel %vm582, %v1247, -inf
  %1585 = vmax.xlane.f32.xlu0 %v1584
  %v1586 = vpop.xlane.xlu0 %1585
  %v1587 = vsel %vm582, %v1249, -inf
  %1588 = vmax.xlane.f32.xlu0 %v1587
  %v1589 = vpop.xlane.xlu0 %1588
  %v1590 = vsel %vm582, %v1274, -inf
  %1591 = vmax.xlane.f32.xlu0 %v1590
  %v1592 = vpop.xlane.xlu0 %1591
  %v1593 = vsel %vm582, %v1276, -inf
  %1594 = vmax.xlane.f32.xlu0 %v1593
  %v1595 = vpop.xlane.xlu0 %1594
  %v1596 = vsel %vm582, %v1301, -inf
  %1597 = vmax.xlane.f32.xlu0 %v1596
  %v1598 = vpop.xlane.xlu0 %1597
  %v1599 = vsel %vm582, %v1303, -inf
  %1600 = vmax.xlane.f32.xlu0 %v1599
  %v1601 = vpop.xlane.xlu0 %1600
  %v1602 = vsel %vm582, %v1328, -inf
  %1603 = vmax.xlane.f32.xlu0 %v1602
  %v1604 = vpop.xlane.xlu0 %1603
  %v1605 = vsel %vm582, %v1330, -inf
  %1606 = vmax.xlane.f32.xlu0 %v1605
  %v1607 = vpop.xlane.xlu0 %1606
  %v1608 = vsel %vm582, %v1355, -inf
  %1609 = vmax.xlane.f32.xlu0 %v1608
  %v1610 = vpop.xlane.xlu0 %1609
  %v1611 = vsel %vm582, %v1357, -inf
  %1612 = vmax.xlane.f32.xlu0 %v1611
  %v1613 = vpop.xlane.xlu0 %1612
  %v1614 = vsel %vm582, %v1382, -inf
  %1615 = vmax.xlane.f32.xlu0 %v1614
  %v1616 = vpop.xlane.xlu0 %1615
  %v1617 = vsel %vm582, %v1384, -inf
  %1618 = vmax.xlane.f32.xlu0 %v1617
  %v1619 = vpop.xlane.xlu0 %1618
  %v1620 = vsel %vm582, %v1409, -inf
  %1621 = vmax.xlane.f32.xlu0 %v1620
  %v1622 = vpop.xlane.xlu0 %1621
  %v1623 = vsel %vm582, %v1411, -inf
  %1624 = vmax.xlane.f32.xlu0 %v1623
  %v1625 = vpop.xlane.xlu0 %1624
  %v1626 = vsel %vm582, %v1436, -inf
  %1627 = vmax.xlane.f32.xlu0 %v1626
  %v1628 = vpop.xlane.xlu0 %1627
  %v1629 = vsel %vm582, %v1438, -inf
  %1630 = vmax.xlane.f32.xlu0 %v1629
  %v1631 = vpop.xlane.xlu0 %1630
  %v1632 = vsub.f32 %v599, %v1442
  %v1633 = vsub.f32 %v601, %v1445
  %v1634 = vsub.f32 %v626, %v1448
  %v1635 = vsub.f32 %v628, %v1451
  %v1636 = vsub.f32 %v653, %v1454
  %v1637 = vsub.f32 %v655, %v1457
  %v1638 = vsub.f32 %v680, %v1460
  %v1639 = vsub.f32 %v682, %v1463
  %v1640 = vsub.f32 %v707, %v1466
  %v1641 = vsub.f32 %v709, %v1469
  %v1642 = vsub.f32 %v734, %v1472
  %v1643 = vsub.f32 %v736, %v1475
  %v1644 = vsub.f32 %v761, %v1478
  %v1645 = vsub.f32 %v763, %v1481
  %v1646 = vsub.f32 %v788, %v1484
  %v1647 = vsub.f32 %v790, %v1487
  %v1648 = vsub.f32 %v815, %v1490
  %v1649 = vsub.f32 %v817, %v1493
  %v1650 = vsub.f32 %v842, %v1496
  %v1651 = vsub.f32 %v844, %v1499
  %v1652 = vsub.f32 %v869, %v1502
  %v1653 = vsub.f32 %v871, %v1505
  %v1654 = vsub.f32 %v896, %v1508
  %v1655 = vsub.f32 %v898, %v1511
  %v1656 = vsub.f32 %v923, %v1514
  %v1657 = vsub.f32 %v925, %v1517
  %v1658 = vsub.f32 %v950, %v1520
  %v1659 = vsub.f32 %v952, %v1523
  %v1660 = vsub.f32 %v977, %v1526
  %v1661 = vsub.f32 %v979, %v1529
  %v1662 = vsub.f32 %v1004, %v1532
  %v1663 = vsub.f32 %v1006, %v1535
  %v1664 = vsub.f32 %v1031, %v1538
  %v1665 = vsub.f32 %v1033, %v1541
  %v1666 = vsub.f32 %v1058, %v1544
  %v1667 = vsub.f32 %v1060, %v1547
  %v1668 = vsub.f32 %v1085, %v1550
  %v1669 = vsub.f32 %v1087, %v1553
  %v1670 = vsub.f32 %v1112, %v1556
  %v1671 = vsub.f32 %v1114, %v1559
  %v1672 = vsub.f32 %v1139, %v1562
  %v1673 = vsub.f32 %v1141, %v1565
  %v1674 = vsub.f32 %v1166, %v1568
  %v1675 = vsub.f32 %v1168, %v1571
  %v1676 = vsub.f32 %v1193, %v1574
  %v1677 = vsub.f32 %v1195, %v1577
  %v1678 = vsub.f32 %v1220, %v1580
  %v1679 = vsub.f32 %v1222, %v1583
  %v1680 = vsub.f32 %v1247, %v1586
  %v1681 = vsub.f32 %v1249, %v1589
  %v1682 = vsub.f32 %v1274, %v1592
  %v1683 = vsub.f32 %v1276, %v1595
  %v1684 = vsub.f32 %v1301, %v1598
  %v1685 = vsub.f32 %v1303, %v1601
  %v1686 = vsub.f32 %v1328, %v1604
  %v1687 = vsub.f32 %v1330, %v1607
  %v1688 = vsub.f32 %v1355, %v1610
  %v1689 = vsub.f32 %v1357, %v1613
  %v1690 = vsub.f32 %v1382, %v1616
  %v1691 = vsub.f32 %v1384, %v1619
  %v1692 = vsub.f32 %v1409, %v1622
  %v1693 = vsub.f32 %v1411, %v1625
  %v1694 = vsub.f32 %v1436, %v1628
  %v1695 = vsub.f32 %v1438, %v1631
  %v1696 = vmul.f32 %v1632, 1.442695
  %v1697 = vpow.pop %v1696
  %v1698 = vmul.f32 %v1633, 1.442695
  %v1699 = vpow.pop %v1698
  %v1700 = vmul.f32 %v1634, 1.442695
  %v1701 = vpow.pop %v1700
  %v1702 = vmul.f32 %v1635, 1.442695
  %v1703 = vpow.pop %v1702
  %v1704 = vmul.f32 %v1636, 1.442695
  %v1705 = vpow.pop %v1704
  %v1706 = vmul.f32 %v1637, 1.442695
  %v1707 = vpow.pop %v1706
  %v1708 = vmul.f32 %v1638, 1.442695
  %v1709 = vpow.pop %v1708
  %v1710 = vmul.f32 %v1639, 1.442695
  %v1711 = vpow.pop %v1710
  %v1712 = vmul.f32 %v1640, 1.442695
  %v1713 = vpow.pop %v1712
  %v1714 = vmul.f32 %v1641, 1.442695
  %v1715 = vpow.pop %v1714
  %v1716 = vmul.f32 %v1642, 1.442695
  %v1717 = vpow.pop %v1716
  %v1718 = vmul.f32 %v1643, 1.442695
  %v1719 = vpow.pop %v1718
  %v1720 = vmul.f32 %v1644, 1.442695
  %v1721 = vpow.pop %v1720
  %v1722 = vmul.f32 %v1645, 1.442695
  %v1723 = vpow.pop %v1722
  %v1724 = vmul.f32 %v1646, 1.442695
  %v1725 = vpow.pop %v1724
  %v1726 = vmul.f32 %v1647, 1.442695
  %v1727 = vpow.pop %v1726
  %v1728 = vmul.f32 %v1648, 1.442695
  %v1729 = vpow.pop %v1728
  %v1730 = vmul.f32 %v1649, 1.442695
  %v1731 = vpow.pop %v1730
  %v1732 = vmul.f32 %v1650, 1.442695
  %v1733 = vpow.pop %v1732
  %v1734 = vmul.f32 %v1651, 1.442695
  %v1735 = vpow.pop %v1734
  %v1736 = vmul.f32 %v1652, 1.442695
  %v1737 = vpow.pop %v1736
  %v1738 = vmul.f32 %v1653, 1.442695
  %v1739 = vpow.pop %v1738
  %v1740 = vmul.f32 %v1654, 1.442695
  %v1741 = vpow.pop %v1740
  %v1742 = vmul.f32 %v1655, 1.442695
  %v1743 = vpow.pop %v1742
  %v1744 = vmul.f32 %v1656, 1.442695
  %v1745 = vpow.pop %v1744
  %v1746 = vmul.f32 %v1657, 1.442695
  %v1747 = vpow.pop %v1746
  %v1748 = vmul.f32 %v1658, 1.442695
  %v1749 = vpow.pop %v1748
  %v1750 = vmul.f32 %v1659, 1.442695
  %v1751 = vpow.pop %v1750
  %v1752 = vmul.f32 %v1660, 1.442695
  %v1753 = vpow.pop %v1752
  %v1754 = vmul.f32 %v1661, 1.442695
  %v1755 = vpow.pop %v1754
  %v1756 = vmul.f32 %v1662, 1.442695
  %v1757 = vpow.pop %v1756
  %v1758 = vmul.f32 %v1663, 1.442695
  %v1759 = vpow.pop %v1758
  %v1760 = vmul.f32 %v1664, 1.442695
  %v1761 = vpow.pop %v1760
  %v1762 = vmul.f32 %v1665, 1.442695
  %v1763 = vpow.pop %v1762
  %v1764 = vmul.f32 %v1666, 1.442695
  %v1765 = vpow.pop %v1764
  %v1766 = vmul.f32 %v1667, 1.442695
  %v1767 = vpow.pop %v1766
  %v1768 = vmul.f32 %v1668, 1.442695
  %v1769 = vpow.pop %v1768
  %v1770 = vmul.f32 %v1669, 1.442695
  %v1771 = vpow.pop %v1770
  %v1772 = vmul.f32 %v1670, 1.442695
  %v1773 = vpow.pop %v1772
  %v1774 = vmul.f32 %v1671, 1.442695
  %v1775 = vpow.pop %v1774
  %v1776 = vmul.f32 %v1672, 1.442695
  %v1777 = vpow.pop %v1776
  %v1778 = vmul.f32 %v1673, 1.442695
  %v1779 = vpow.pop %v1778
  %v1780 = vmul.f32 %v1674, 1.442695
  %v1781 = vpow.pop %v1780
  %v1782 = vmul.f32 %v1675, 1.442695
  %v1783 = vpow.pop %v1782
  %v1784 = vmul.f32 %v1676, 1.442695
  %v1785 = vpow.pop %v1784
  %v1786 = vmul.f32 %v1677, 1.442695
  %v1787 = vpow.pop %v1786
  %v1788 = vmul.f32 %v1678, 1.442695
  %v1789 = vpow.pop %v1788
  %v1790 = vmul.f32 %v1679, 1.442695
  %v1791 = vpow.pop %v1790
  %v1792 = vmul.f32 %v1680, 1.442695
  %v1793 = vpow.pop %v1792
  %v1794 = vmul.f32 %v1681, 1.442695
  %v1795 = vpow.pop %v1794
  %v1796 = vmul.f32 %v1682, 1.442695
  %v1797 = vpow.pop %v1796
  %v1798 = vmul.f32 %v1683, 1.442695
  %v1799 = vpow.pop %v1798
  %v1800 = vmul.f32 %v1684, 1.442695
  %v1801 = vpow.pop %v1800
  %v1802 = vmul.f32 %v1685, 1.442695
  %v1803 = vpow.pop %v1802
  %v1804 = vmul.f32 %v1686, 1.442695
  %v1805 = vpow.pop %v1804
  %v1806 = vmul.f32 %v1687, 1.442695
  %v1807 = vpow.pop %v1806
  %v1808 = vmul.f32 %v1688, 1.442695
  %v1809 = vpow.pop %v1808
  %v1810 = vmul.f32 %v1689, 1.442695
  %v1811 = vpow.pop %v1810
  %v1812 = vmul.f32 %v1690, 1.442695
  %v1813 = vpow.pop %v1812
  %v1814 = vmul.f32 %v1691, 1.442695
  %v1815 = vpow.pop %v1814
  %v1816 = vmul.f32 %v1692, 1.442695
  %v1817 = vpow.pop %v1816
  %v1818 = vmul.f32 %v1693, 1.442695
  %v1819 = vpow.pop %v1818
  %v1820 = vmul.f32 %v1694, 1.442695
  %v1821 = vpow.pop %v1820
  %v1822 = vmul.f32 %v1695, 1.442695
  %v1823 = vpow.pop %v1822
  %v1824 = vsel %vm582, %v1697, 0.0
  %1825 = vadd.xlane.f32.xlu0 %v1824
  %v1826 = vpop.xlane.xlu0 %1825
  %v1827 = vsel %vm582, %v1699, 0.0
  %1828 = vadd.xlane.f32.xlu0 %v1827
  %v1829 = vpop.xlane.xlu0 %1828
  %v1830 = vsel %vm582, %v1701, 0.0
  %1831 = vadd.xlane.f32.xlu0 %v1830
  %v1832 = vpop.xlane.xlu0 %1831
  %v1833 = vsel %vm582, %v1703, 0.0
  %1834 = vadd.xlane.f32.xlu0 %v1833
  %v1835 = vpop.xlane.xlu0 %1834
  %v1836 = vsel %vm582, %v1705, 0.0
  %1837 = vadd.xlane.f32.xlu0 %v1836
  %v1838 = vpop.xlane.xlu0 %1837
  %v1839 = vsel %vm582, %v1707, 0.0
  %1840 = vadd.xlane.f32.xlu0 %v1839
  %v1841 = vpop.xlane.xlu0 %1840
  %v1842 = vsel %vm582, %v1709, 0.0
  %1843 = vadd.xlane.f32.xlu0 %v1842
  %v1844 = vpop.xlane.xlu0 %1843
  %v1845 = vsel %vm582, %v1711, 0.0
  %1846 = vadd.xlane.f32.xlu0 %v1845
  %v1847 = vpop.xlane.xlu0 %1846
  %v1848 = vsel %vm582, %v1713, 0.0
  %1849 = vadd.xlane.f32.xlu0 %v1848
  %v1850 = vpop.xlane.xlu0 %1849
  %v1851 = vsel %vm582, %v1715, 0.0
  %1852 = vadd.xlane.f32.xlu0 %v1851
  %v1853 = vpop.xlane.xlu0 %1852
  %v1854 = vsel %vm582, %v1717, 0.0
  %1855 = vadd.xlane.f32.xlu0 %v1854
  %v1856 = vpop.xlane.xlu0 %1855
  %v1857 = vsel %vm582, %v1719, 0.0
  %1858 = vadd.xlane.f32.xlu0 %v1857
  %v1859 = vpop.xlane.xlu0 %1858
  %v1860 = vsel %vm582, %v1721, 0.0
  %1861 = vadd.xlane.f32.xlu0 %v1860
  %v1862 = vpop.xlane.xlu0 %1861
  %v1863 = vsel %vm582, %v1723, 0.0
  %1864 = vadd.xlane.f32.xlu0 %v1863
  %v1865 = vpop.xlane.xlu0 %1864
  %v1866 = vsel %vm582, %v1725, 0.0
  %1867 = vadd.xlane.f32.xlu0 %v1866
  %v1868 = vpop.xlane.xlu0 %1867
  %v1869 = vsel %vm582, %v1727, 0.0
  %1870 = vadd.xlane.f32.xlu0 %v1869
  %v1871 = vpop.xlane.xlu0 %1870
  %v1872 = vsel %vm582, %v1729, 0.0
  %1873 = vadd.xlane.f32.xlu0 %v1872
  %v1874 = vpop.xlane.xlu0 %1873
  %v1875 = vsel %vm582, %v1731, 0.0
  %1876 = vadd.xlane.f32.xlu0 %v1875
  %v1877 = vpop.xlane.xlu0 %1876
  %v1878 = vsel %vm582, %v1733, 0.0
  %1879 = vadd.xlane.f32.xlu0 %v1878
  %v1880 = vpop.xlane.xlu0 %1879
  %v1881 = vsel %vm582, %v1735, 0.0
  %1882 = vadd.xlane.f32.xlu0 %v1881
  %v1883 = vpop.xlane.xlu0 %1882
  %v1884 = vsel %vm582, %v1737, 0.0
  %1885 = vadd.xlane.f32.xlu0 %v1884
  %v1886 = vpop.xlane.xlu0 %1885
  %v1887 = vsel %vm582, %v1739, 0.0
  %1888 = vadd.xlane.f32.xlu0 %v1887
  %v1889 = vpop.xlane.xlu0 %1888
  %v1890 = vsel %vm582, %v1741, 0.0
  %1891 = vadd.xlane.f32.xlu0 %v1890
  %v1892 = vpop.xlane.xlu0 %1891
  %v1893 = vsel %vm582, %v1743, 0.0
  %1894 = vadd.xlane.f32.xlu0 %v1893
  %v1895 = vpop.xlane.xlu0 %1894
  %v1896 = vsel %vm582, %v1745, 0.0
  %1897 = vadd.xlane.f32.xlu0 %v1896
  %v1898 = vpop.xlane.xlu0 %1897
  %v1899 = vsel %vm582, %v1747, 0.0
  %1900 = vadd.xlane.f32.xlu0 %v1899
  %v1901 = vpop.xlane.xlu0 %1900
  %v1902 = vsel %vm582, %v1749, 0.0
  %1903 = vadd.xlane.f32.xlu0 %v1902
  %v1904 = vpop.xlane.xlu0 %1903
  %v1905 = vsel %vm582, %v1751, 0.0
  %1906 = vadd.xlane.f32.xlu0 %v1905
  %v1907 = vpop.xlane.xlu0 %1906
  %v1908 = vsel %vm582, %v1753, 0.0
  %1909 = vadd.xlane.f32.xlu0 %v1908
  %v1910 = vpop.xlane.xlu0 %1909
  %v1911 = vsel %vm582, %v1755, 0.0
  %1912 = vadd.xlane.f32.xlu0 %v1911
  %v1913 = vpop.xlane.xlu0 %1912
  %v1914 = vsel %vm582, %v1757, 0.0
  %1915 = vadd.xlane.f32.xlu0 %v1914
  %v1916 = vpop.xlane.xlu0 %1915
  %v1917 = vsel %vm582, %v1759, 0.0
  %1918 = vadd.xlane.f32.xlu0 %v1917
  %v1919 = vpop.xlane.xlu0 %1918
  %v1920 = vsel %vm582, %v1761, 0.0
  %1921 = vadd.xlane.f32.xlu0 %v1920
  %v1922 = vpop.xlane.xlu0 %1921
  %v1923 = vsel %vm582, %v1763, 0.0
  %1924 = vadd.xlane.f32.xlu0 %v1923
  %v1925 = vpop.xlane.xlu0 %1924
  %v1926 = vsel %vm582, %v1765, 0.0
  %1927 = vadd.xlane.f32.xlu0 %v1926
  %v1928 = vpop.xlane.xlu0 %1927
  %v1929 = vsel %vm582, %v1767, 0.0
  %1930 = vadd.xlane.f32.xlu0 %v1929
  %v1931 = vpop.xlane.xlu0 %1930
  %v1932 = vsel %vm582, %v1769, 0.0
  %1933 = vadd.xlane.f32.xlu0 %v1932
  %v1934 = vpop.xlane.xlu0 %1933
  %v1935 = vsel %vm582, %v1771, 0.0
  %1936 = vadd.xlane.f32.xlu0 %v1935
  %v1937 = vpop.xlane.xlu0 %1936
  %v1938 = vsel %vm582, %v1773, 0.0
  %1939 = vadd.xlane.f32.xlu0 %v1938
  %v1940 = vpop.xlane.xlu0 %1939
  %v1941 = vsel %vm582, %v1775, 0.0
  %1942 = vadd.xlane.f32.xlu0 %v1941
  %v1943 = vpop.xlane.xlu0 %1942
  %v1944 = vsel %vm582, %v1777, 0.0
  %1945 = vadd.xlane.f32.xlu0 %v1944
  %v1946 = vpop.xlane.xlu0 %1945
  %v1947 = vsel %vm582, %v1779, 0.0
  %1948 = vadd.xlane.f32.xlu0 %v1947
  %v1949 = vpop.xlane.xlu0 %1948
  %v1950 = vsel %vm582, %v1781, 0.0
  %1951 = vadd.xlane.f32.xlu0 %v1950
  %v1952 = vpop.xlane.xlu0 %1951
  %v1953 = vsel %vm582, %v1783, 0.0
  %1954 = vadd.xlane.f32.xlu0 %v1953
  %v1955 = vpop.xlane.xlu0 %1954
  %v1956 = vsel %vm582, %v1785, 0.0
  %1957 = vadd.xlane.f32.xlu0 %v1956
  %v1958 = vpop.xlane.xlu0 %1957
  %v1959 = vsel %vm582, %v1787, 0.0
  %1960 = vadd.xlane.f32.xlu0 %v1959
  %v1961 = vpop.xlane.xlu0 %1960
  %v1962 = vsel %vm582, %v1789, 0.0
  %1963 = vadd.xlane.f32.xlu0 %v1962
  %v1964 = vpop.xlane.xlu0 %1963
  %v1965 = vsel %vm582, %v1791, 0.0
  %1966 = vadd.xlane.f32.xlu0 %v1965
  %v1967 = vpop.xlane.xlu0 %1966
  %v1968 = vsel %vm582, %v1793, 0.0
  %1969 = vadd.xlane.f32.xlu0 %v1968
  %v1970 = vpop.xlane.xlu0 %1969
  %v1971 = vsel %vm582, %v1795, 0.0
  %1972 = vadd.xlane.f32.xlu0 %v1971
  %v1973 = vpop.xlane.xlu0 %1972
  %v1974 = vsel %vm582, %v1797, 0.0
  %1975 = vadd.xlane.f32.xlu0 %v1974
  %v1976 = vpop.xlane.xlu0 %1975
  %v1977 = vsel %vm582, %v1799, 0.0
  %1978 = vadd.xlane.f32.xlu0 %v1977
  %v1979 = vpop.xlane.xlu0 %1978
  %v1980 = vsel %vm582, %v1801, 0.0
  %1981 = vadd.xlane.f32.xlu0 %v1980
  %v1982 = vpop.xlane.xlu0 %1981
  %v1983 = vsel %vm582, %v1803, 0.0
  %1984 = vadd.xlane.f32.xlu0 %v1983
  %v1985 = vpop.xlane.xlu0 %1984
  %v1986 = vsel %vm582, %v1805, 0.0
  %1987 = vadd.xlane.f32.xlu0 %v1986
  %v1988 = vpop.xlane.xlu0 %1987
  %v1989 = vsel %vm582, %v1807, 0.0
  %1990 = vadd.xlane.f32.xlu0 %v1989
  %v1991 = vpop.xlane.xlu0 %1990
  %v1992 = vsel %vm582, %v1809, 0.0
  %1993 = vadd.xlane.f32.xlu0 %v1992
  %v1994 = vpop.xlane.xlu0 %1993
  %v1995 = vsel %vm582, %v1811, 0.0
  %1996 = vadd.xlane.f32.xlu0 %v1995
  %v1997 = vpop.xlane.xlu0 %1996
  %v1998 = vsel %vm582, %v1813, 0.0
  %1999 = vadd.xlane.f32.xlu0 %v1998
  %v2000 = vpop.xlane.xlu0 %1999
  %v2001 = vsel %vm582, %v1815, 0.0
  %2002 = vadd.xlane.f32.xlu0 %v2001
  %v2003 = vpop.xlane.xlu0 %2002
  %v2004 = vsel %vm582, %v1817, 0.0
  %2005 = vadd.xlane.f32.xlu0 %v2004
  %v2006 = vpop.xlane.xlu0 %2005
  %v2007 = vsel %vm582, %v1819, 0.0
  %2008 = vadd.xlane.f32.xlu0 %v2007
  %v2009 = vpop.xlane.xlu0 %2008
  %v2010 = vsel %vm582, %v1821, 0.0
  %2011 = vadd.xlane.f32.xlu0 %v2010
  %v2012 = vpop.xlane.xlu0 %2011
  %v2013 = vsel %vm582, %v1823, 0.0
  %2014 = vadd.xlane.f32.xlu0 %v2013
  %v2015 = vpop.xlane.xlu0 %2014
  %v2016 = vrcp.pop %v1826
  %v2017 = vmul.f32 %v1826, %v2016
  %v2018 = vsub.f32 1.0, %v2017
  %v2019 = vmul.f32 %v2016, %v2018
  %v2020 = vadd.f32 %v2016, %v2019
  %vm2021 = vweird.f32 %v1826
  %vm2022 = vweird.f32 %v2016
  %vm2023 = vmor %vm2021, %vm2022
  %v2024 = vsel %vm2023, %v2016, %v2020
  %v2025 = vand.u32 2147483647, %v1826
  %vm2026 = vcmp.eq.f32.partialorder %v2025, 8.507059e+37
  %v2027 = vand.u32 %v1826, 2147483648
  %v2028 = vor.u32 1.1754944e-38, %v2027
  %v2029 = vsel %vm2026, %v2028, %v2024
  %v2030 = vmul.f32 %v1697, %v2029
  %v2031 = vrcp.pop %v1829
  %v2032 = vmul.f32 %v1829, %v2031
  %v2033 = vsub.f32 1.0, %v2032
  %v2034 = vmul.f32 %v2031, %v2033
  %v2035 = vadd.f32 %v2031, %v2034
  %vm2036 = vweird.f32 %v1829
  %vm2037 = vweird.f32 %v2031
  %vm2038 = vmor %vm2036, %vm2037
  %v2039 = vsel %vm2038, %v2031, %v2035
  %v2040 = vand.u32 2147483647, %v1829
  %vm2041 = vcmp.eq.f32.partialorder %v2040, 8.507059e+37
  %v2042 = vand.u32 %v1829, 2147483648
  %v2043 = vor.u32 1.1754944e-38, %v2042
  %v2044 = vsel %vm2041, %v2043, %v2039
  %v2045 = vmul.f32 %v1699, %v2044
  %v2046 = vrcp.pop %v1832
  %v2047 = vmul.f32 %v1832, %v2046
  %v2048 = vsub.f32 1.0, %v2047
  %v2049 = vmul.f32 %v2046, %v2048
  %v2050 = vadd.f32 %v2046, %v2049
  %vm2051 = vweird.f32 %v1832
  %vm2052 = vweird.f32 %v2046
  %vm2053 = vmor %vm2051, %vm2052
  %v2054 = vsel %vm2053, %v2046, %v2050
  %v2055 = vand.u32 2147483647, %v1832
  %vm2056 = vcmp.eq.f32.partialorder %v2055, 8.507059e+37
  %v2057 = vand.u32 %v1832, 2147483648
  %v2058 = vor.u32 1.1754944e-38, %v2057
  %v2059 = vsel %vm2056, %v2058, %v2054
  %v2060 = vmul.f32 %v1701, %v2059
  %v2061 = vrcp.pop %v1835
  %v2062 = vmul.f32 %v1835, %v2061
  %v2063 = vsub.f32 1.0, %v2062
  %v2064 = vmul.f32 %v2061, %v2063
  %v2065 = vadd.f32 %v2061, %v2064
  %vm2066 = vweird.f32 %v1835
  %vm2067 = vweird.f32 %v2061
  %vm2068 = vmor %vm2066, %vm2067
  %v2069 = vsel %vm2068, %v2061, %v2065
  %v2070 = vand.u32 2147483647, %v1835
  %vm2071 = vcmp.eq.f32.partialorder %v2070, 8.507059e+37
  %v2072 = vand.u32 %v1835, 2147483648
  %v2073 = vor.u32 1.1754944e-38, %v2072
  %v2074 = vsel %vm2071, %v2073, %v2069
  %v2075 = vmul.f32 %v1703, %v2074
  %v2076 = vrcp.pop %v1838
  %v2077 = vmul.f32 %v1838, %v2076
  %v2078 = vsub.f32 1.0, %v2077
  %v2079 = vmul.f32 %v2076, %v2078
  %v2080 = vadd.f32 %v2076, %v2079
  %vm2081 = vweird.f32 %v1838
  %vm2082 = vweird.f32 %v2076
  %vm2083 = vmor %vm2081, %vm2082
  %v2084 = vsel %vm2083, %v2076, %v2080
  %v2085 = vand.u32 2147483647, %v1838
  %vm2086 = vcmp.eq.f32.partialorder %v2085, 8.507059e+37
  %v2087 = vand.u32 %v1838, 2147483648
  %v2088 = vor.u32 1.1754944e-38, %v2087
  %v2089 = vsel %vm2086, %v2088, %v2084
  %v2090 = vmul.f32 %v1705, %v2089
  %v2091 = vrcp.pop %v1841
  %v2092 = vmul.f32 %v1841, %v2091
  %v2093 = vsub.f32 1.0, %v2092
  %v2094 = vmul.f32 %v2091, %v2093
  %v2095 = vadd.f32 %v2091, %v2094
  %vm2096 = vweird.f32 %v1841
  %vm2097 = vweird.f32 %v2091
  %vm2098 = vmor %vm2096, %vm2097
  %v2099 = vsel %vm2098, %v2091, %v2095
  %v2100 = vand.u32 2147483647, %v1841
  %vm2101 = vcmp.eq.f32.partialorder %v2100, 8.507059e+37
  %v2102 = vand.u32 %v1841, 2147483648
  %v2103 = vor.u32 1.1754944e-38, %v2102
  %v2104 = vsel %vm2101, %v2103, %v2099
  %v2105 = vmul.f32 %v1707, %v2104
  %v2106 = vrcp.pop %v1844
  %v2107 = vmul.f32 %v1844, %v2106
  %v2108 = vsub.f32 1.0, %v2107
  %v2109 = vmul.f32 %v2106, %v2108
  %v2110 = vadd.f32 %v2106, %v2109
  %vm2111 = vweird.f32 %v1844
  %vm2112 = vweird.f32 %v2106
  %vm2113 = vmor %vm2111, %vm2112
  %v2114 = vsel %vm2113, %v2106, %v2110
  %v2115 = vand.u32 2147483647, %v1844
  %vm2116 = vcmp.eq.f32.partialorder %v2115, 8.507059e+37
  %v2117 = vand.u32 %v1844, 2147483648
  %v2118 = vor.u32 1.1754944e-38, %v2117
  %v2119 = vsel %vm2116, %v2118, %v2114
  %v2120 = vmul.f32 %v1709, %v2119
  %v2121 = vrcp.pop %v1847
  %v2122 = vmul.f32 %v1847, %v2121
  %v2123 = vsub.f32 1.0, %v2122
  %v2124 = vmul.f32 %v2121, %v2123
  %v2125 = vadd.f32 %v2121, %v2124
  %vm2126 = vweird.f32 %v1847
  %vm2127 = vweird.f32 %v2121
  %vm2128 = vmor %vm2126, %vm2127
  %v2129 = vsel %vm2128, %v2121, %v2125
  %v2130 = vand.u32 2147483647, %v1847
  %vm2131 = vcmp.eq.f32.partialorder %v2130, 8.507059e+37
  %v2132 = vand.u32 %v1847, 2147483648
  %v2133 = vor.u32 1.1754944e-38, %v2132
  %v2134 = vsel %vm2131, %v2133, %v2129
  %v2135 = vmul.f32 %v1711, %v2134
  %v2136 = vrcp.pop %v1850
  %v2137 = vmul.f32 %v1850, %v2136
  %v2138 = vsub.f32 1.0, %v2137
  %v2139 = vmul.f32 %v2136, %v2138
  %v2140 = vadd.f32 %v2136, %v2139
  %vm2141 = vweird.f32 %v1850
  %vm2142 = vweird.f32 %v2136
  %vm2143 = vmor %vm2141, %vm2142
  %v2144 = vsel %vm2143, %v2136, %v2140
  %v2145 = vand.u32 2147483647, %v1850
  %vm2146 = vcmp.eq.f32.partialorder %v2145, 8.507059e+37
  %v2147 = vand.u32 %v1850, 2147483648
  %v2148 = vor.u32 1.1754944e-38, %v2147
  %v2149 = vsel %vm2146, %v2148, %v2144
  %v2150 = vmul.f32 %v1713, %v2149
  %v2151 = vrcp.pop %v1853
  %v2152 = vmul.f32 %v1853, %v2151
  %v2153 = vsub.f32 1.0, %v2152
  %v2154 = vmul.f32 %v2151, %v2153
  %v2155 = vadd.f32 %v2151, %v2154
  %vm2156 = vweird.f32 %v1853
  %vm2157 = vweird.f32 %v2151
  %vm2158 = vmor %vm2156, %vm2157
  %v2159 = vsel %vm2158, %v2151, %v2155
  %v2160 = vand.u32 2147483647, %v1853
  %vm2161 = vcmp.eq.f32.partialorder %v2160, 8.507059e+37
  %v2162 = vand.u32 %v1853, 2147483648
  %v2163 = vor.u32 1.1754944e-38, %v2162
  %v2164 = vsel %vm2161, %v2163, %v2159
  %v2165 = vmul.f32 %v1715, %v2164
  %v2166 = vrcp.pop %v1856
  %v2167 = vmul.f32 %v1856, %v2166
  %v2168 = vsub.f32 1.0, %v2167
  %v2169 = vmul.f32 %v2166, %v2168
  %v2170 = vadd.f32 %v2166, %v2169
  %vm2171 = vweird.f32 %v1856
  %vm2172 = vweird.f32 %v2166
  %vm2173 = vmor %vm2171, %vm2172
  %v2174 = vsel %vm2173, %v2166, %v2170
  %v2175 = vand.u32 2147483647, %v1856
  %vm2176 = vcmp.eq.f32.partialorder %v2175, 8.507059e+37
  %v2177 = vand.u32 %v1856, 2147483648
  %v2178 = vor.u32 1.1754944e-38, %v2177
  %v2179 = vsel %vm2176, %v2178, %v2174
  %v2180 = vmul.f32 %v1717, %v2179
  %v2181 = vrcp.pop %v1859
  %v2182 = vmul.f32 %v1859, %v2181
  %v2183 = vsub.f32 1.0, %v2182
  %v2184 = vmul.f32 %v2181, %v2183
  %v2185 = vadd.f32 %v2181, %v2184
  %vm2186 = vweird.f32 %v1859
  %vm2187 = vweird.f32 %v2181
  %vm2188 = vmor %vm2186, %vm2187
  %v2189 = vsel %vm2188, %v2181, %v2185
  %v2190 = vand.u32 2147483647, %v1859
  %vm2191 = vcmp.eq.f32.partialorder %v2190, 8.507059e+37
  %v2192 = vand.u32 %v1859, 2147483648
  %v2193 = vor.u32 1.1754944e-38, %v2192
  %v2194 = vsel %vm2191, %v2193, %v2189
  %v2195 = vmul.f32 %v1719, %v2194
  %v2196 = vrcp.pop %v1862
  %v2197 = vmul.f32 %v1862, %v2196
  %v2198 = vsub.f32 1.0, %v2197
  %v2199 = vmul.f32 %v2196, %v2198
  %v2200 = vadd.f32 %v2196, %v2199
  %vm2201 = vweird.f32 %v1862
  %vm2202 = vweird.f32 %v2196
  %vm2203 = vmor %vm2201, %vm2202
  %v2204 = vsel %vm2203, %v2196, %v2200
  %v2205 = vand.u32 2147483647, %v1862
  %vm2206 = vcmp.eq.f32.partialorder %v2205, 8.507059e+37
  %v2207 = vand.u32 %v1862, 2147483648
  %v2208 = vor.u32 1.1754944e-38, %v2207
  %v2209 = vsel %vm2206, %v2208, %v2204
  %v2210 = vmul.f32 %v1721, %v2209
  %v2211 = vrcp.pop %v1865
  %v2212 = vmul.f32 %v1865, %v2211
  %v2213 = vsub.f32 1.0, %v2212
  %v2214 = vmul.f32 %v2211, %v2213
  %v2215 = vadd.f32 %v2211, %v2214
  %vm2216 = vweird.f32 %v1865
  %vm2217 = vweird.f32 %v2211
  %vm2218 = vmor %vm2216, %vm2217
  %v2219 = vsel %vm2218, %v2211, %v2215
  %v2220 = vand.u32 2147483647, %v1865
  %vm2221 = vcmp.eq.f32.partialorder %v2220, 8.507059e+37
  %v2222 = vand.u32 %v1865, 2147483648
  %v2223 = vor.u32 1.1754944e-38, %v2222
  %v2224 = vsel %vm2221, %v2223, %v2219
  %v2225 = vmul.f32 %v1723, %v2224
  %v2226 = vrcp.pop %v1868
  %v2227 = vmul.f32 %v1868, %v2226
  %v2228 = vsub.f32 1.0, %v2227
  %v2229 = vmul.f32 %v2226, %v2228
  %v2230 = vadd.f32 %v2226, %v2229
  %vm2231 = vweird.f32 %v1868
  %vm2232 = vweird.f32 %v2226
  %vm2233 = vmor %vm2231, %vm2232
  %v2234 = vsel %vm2233, %v2226, %v2230
  %v2235 = vand.u32 2147483647, %v1868
  %vm2236 = vcmp.eq.f32.partialorder %v2235, 8.507059e+37
  %v2237 = vand.u32 %v1868, 2147483648
  %v2238 = vor.u32 1.1754944e-38, %v2237
  %v2239 = vsel %vm2236, %v2238, %v2234
  %v2240 = vmul.f32 %v1725, %v2239
  %v2241 = vrcp.pop %v1871
  %v2242 = vmul.f32 %v1871, %v2241
  %v2243 = vsub.f32 1.0, %v2242
  %v2244 = vmul.f32 %v2241, %v2243
  %v2245 = vadd.f32 %v2241, %v2244
  %vm2246 = vweird.f32 %v1871
  %vm2247 = vweird.f32 %v2241
  %vm2248 = vmor %vm2246, %vm2247
  %v2249 = vsel %vm2248, %v2241, %v2245
  %v2250 = vand.u32 2147483647, %v1871
  %vm2251 = vcmp.eq.f32.partialorder %v2250, 8.507059e+37
  %v2252 = vand.u32 %v1871, 2147483648
  %v2253 = vor.u32 1.1754944e-38, %v2252
  %v2254 = vsel %vm2251, %v2253, %v2249
  %v2255 = vmul.f32 %v1727, %v2254
  %v2256 = vrcp.pop %v1874
  %v2257 = vmul.f32 %v1874, %v2256
  %v2258 = vsub.f32 1.0, %v2257
  %v2259 = vmul.f32 %v2256, %v2258
  %v2260 = vadd.f32 %v2256, %v2259
  %vm2261 = vweird.f32 %v1874
  %vm2262 = vweird.f32 %v2256
  %vm2263 = vmor %vm2261, %vm2262
  %v2264 = vsel %vm2263, %v2256, %v2260
  %v2265 = vand.u32 2147483647, %v1874
  %vm2266 = vcmp.eq.f32.partialorder %v2265, 8.507059e+37
  %v2267 = vand.u32 %v1874, 2147483648
  %v2268 = vor.u32 1.1754944e-38, %v2267
  %v2269 = vsel %vm2266, %v2268, %v2264
  %v2270 = vmul.f32 %v1729, %v2269
  %v2271 = vrcp.pop %v1877
  %v2272 = vmul.f32 %v1877, %v2271
  %v2273 = vsub.f32 1.0, %v2272
  %v2274 = vmul.f32 %v2271, %v2273
  %v2275 = vadd.f32 %v2271, %v2274
  %vm2276 = vweird.f32 %v1877
  %vm2277 = vweird.f32 %v2271
  %vm2278 = vmor %vm2276, %vm2277
  %v2279 = vsel %vm2278, %v2271, %v2275
  %v2280 = vand.u32 2147483647, %v1877
  %vm2281 = vcmp.eq.f32.partialorder %v2280, 8.507059e+37
  %v2282 = vand.u32 %v1877, 2147483648
  %v2283 = vor.u32 1.1754944e-38, %v2282
  %v2284 = vsel %vm2281, %v2283, %v2279
  %v2285 = vmul.f32 %v1731, %v2284
  %v2286 = vrcp.pop %v1880
  %v2287 = vmul.f32 %v1880, %v2286
  %v2288 = vsub.f32 1.0, %v2287
  %v2289 = vmul.f32 %v2286, %v2288
  %v2290 = vadd.f32 %v2286, %v2289
  %vm2291 = vweird.f32 %v1880
  %vm2292 = vweird.f32 %v2286
  %vm2293 = vmor %vm2291, %vm2292
  %v2294 = vsel %vm2293, %v2286, %v2290
  %v2295 = vand.u32 2147483647, %v1880
  %vm2296 = vcmp.eq.f32.partialorder %v2295, 8.507059e+37
  %v2297 = vand.u32 %v1880, 2147483648
  %v2298 = vor.u32 1.1754944e-38, %v2297
  %v2299 = vsel %vm2296, %v2298, %v2294
  %v2300 = vmul.f32 %v1733, %v2299
  %v2301 = vrcp.pop %v1883
  %v2302 = vmul.f32 %v1883, %v2301
  %v2303 = vsub.f32 1.0, %v2302
  %v2304 = vmul.f32 %v2301, %v2303
  %v2305 = vadd.f32 %v2301, %v2304
  %vm2306 = vweird.f32 %v1883
  %vm2307 = vweird.f32 %v2301
  %vm2308 = vmor %vm2306, %vm2307
  %v2309 = vsel %vm2308, %v2301, %v2305
  %v2310 = vand.u32 2147483647, %v1883
  %vm2311 = vcmp.eq.f32.partialorder %v2310, 8.507059e+37
  %v2312 = vand.u32 %v1883, 2147483648
  %v2313 = vor.u32 1.1754944e-38, %v2312
  %v2314 = vsel %vm2311, %v2313, %v2309
  %v2315 = vmul.f32 %v1735, %v2314
  %v2316 = vrcp.pop %v1886
  %v2317 = vmul.f32 %v1886, %v2316
  %v2318 = vsub.f32 1.0, %v2317
  %v2319 = vmul.f32 %v2316, %v2318
  %v2320 = vadd.f32 %v2316, %v2319
  %vm2321 = vweird.f32 %v1886
  %vm2322 = vweird.f32 %v2316
  %vm2323 = vmor %vm2321, %vm2322
  %v2324 = vsel %vm2323, %v2316, %v2320
  %v2325 = vand.u32 2147483647, %v1886
  %vm2326 = vcmp.eq.f32.partialorder %v2325, 8.507059e+37
  %v2327 = vand.u32 %v1886, 2147483648
  %v2328 = vor.u32 1.1754944e-38, %v2327
  %v2329 = vsel %vm2326, %v2328, %v2324
  %v2330 = vmul.f32 %v1737, %v2329
  %v2331 = vrcp.pop %v1889
  %v2332 = vmul.f32 %v1889, %v2331
  %v2333 = vsub.f32 1.0, %v2332
  %v2334 = vmul.f32 %v2331, %v2333
  %v2335 = vadd.f32 %v2331, %v2334
  %vm2336 = vweird.f32 %v1889
  %vm2337 = vweird.f32 %v2331
  %vm2338 = vmor %vm2336, %vm2337
  %v2339 = vsel %vm2338, %v2331, %v2335
  %v2340 = vand.u32 2147483647, %v1889
  %vm2341 = vcmp.eq.f32.partialorder %v2340, 8.507059e+37
  %v2342 = vand.u32 %v1889, 2147483648
  %v2343 = vor.u32 1.1754944e-38, %v2342
  %v2344 = vsel %vm2341, %v2343, %v2339
  %v2345 = vmul.f32 %v1739, %v2344
  %v2346 = vrcp.pop %v1892
  %v2347 = vmul.f32 %v1892, %v2346
  %v2348 = vsub.f32 1.0, %v2347
  %v2349 = vmul.f32 %v2346, %v2348
  %v2350 = vadd.f32 %v2346, %v2349
  %vm2351 = vweird.f32 %v1892
  %vm2352 = vweird.f32 %v2346
  %vm2353 = vmor %vm2351, %vm2352
  %v2354 = vsel %vm2353, %v2346, %v2350
  %v2355 = vand.u32 2147483647, %v1892
  %vm2356 = vcmp.eq.f32.partialorder %v2355, 8.507059e+37
  %v2357 = vand.u32 %v1892, 2147483648
  %v2358 = vor.u32 1.1754944e-38, %v2357
  %v2359 = vsel %vm2356, %v2358, %v2354
  %v2360 = vmul.f32 %v1741, %v2359
  %v2361 = vrcp.pop %v1895
  %v2362 = vmul.f32 %v1895, %v2361
  %v2363 = vsub.f32 1.0, %v2362
  %v2364 = vmul.f32 %v2361, %v2363
  %v2365 = vadd.f32 %v2361, %v2364
  %vm2366 = vweird.f32 %v1895
  %vm2367 = vweird.f32 %v2361
  %vm2368 = vmor %vm2366, %vm2367
  %v2369 = vsel %vm2368, %v2361, %v2365
  %v2370 = vand.u32 2147483647, %v1895
  %vm2371 = vcmp.eq.f32.partialorder %v2370, 8.507059e+37
  %v2372 = vand.u32 %v1895, 2147483648
  %v2373 = vor.u32 1.1754944e-38, %v2372
  %v2374 = vsel %vm2371, %v2373, %v2369
  %v2375 = vmul.f32 %v1743, %v2374
  %v2376 = vrcp.pop %v1898
  %v2377 = vmul.f32 %v1898, %v2376
  %v2378 = vsub.f32 1.0, %v2377
  %v2379 = vmul.f32 %v2376, %v2378
  %v2380 = vadd.f32 %v2376, %v2379
  %vm2381 = vweird.f32 %v1898
  %vm2382 = vweird.f32 %v2376
  %vm2383 = vmor %vm2381, %vm2382
  %v2384 = vsel %vm2383, %v2376, %v2380
  %v2385 = vand.u32 2147483647, %v1898
  %vm2386 = vcmp.eq.f32.partialorder %v2385, 8.507059e+37
  %v2387 = vand.u32 %v1898, 2147483648
  %v2388 = vor.u32 1.1754944e-38, %v2387
  %v2389 = vsel %vm2386, %v2388, %v2384
  %v2390 = vmul.f32 %v1745, %v2389
  %v2391 = vrcp.pop %v1901
  %v2392 = vmul.f32 %v1901, %v2391
  %v2393 = vsub.f32 1.0, %v2392
  %v2394 = vmul.f32 %v2391, %v2393
  %v2395 = vadd.f32 %v2391, %v2394
  %vm2396 = vweird.f32 %v1901
  %vm2397 = vweird.f32 %v2391
  %vm2398 = vmor %vm2396, %vm2397
  %v2399 = vsel %vm2398, %v2391, %v2395
  %v2400 = vand.u32 2147483647, %v1901
  %vm2401 = vcmp.eq.f32.partialorder %v2400, 8.507059e+37
  %v2402 = vand.u32 %v1901, 2147483648
  %v2403 = vor.u32 1.1754944e-38, %v2402
  %v2404 = vsel %vm2401, %v2403, %v2399
  %v2405 = vmul.f32 %v1747, %v2404
  %v2406 = vrcp.pop %v1904
  %v2407 = vmul.f32 %v1904, %v2406
  %v2408 = vsub.f32 1.0, %v2407
  %v2409 = vmul.f32 %v2406, %v2408
  %v2410 = vadd.f32 %v2406, %v2409
  %vm2411 = vweird.f32 %v1904
  %vm2412 = vweird.f32 %v2406
  %vm2413 = vmor %vm2411, %vm2412
  %v2414 = vsel %vm2413, %v2406, %v2410
  %v2415 = vand.u32 2147483647, %v1904
  %vm2416 = vcmp.eq.f32.partialorder %v2415, 8.507059e+37
  %v2417 = vand.u32 %v1904, 2147483648
  %v2418 = vor.u32 1.1754944e-38, %v2417
  %v2419 = vsel %vm2416, %v2418, %v2414
  %v2420 = vmul.f32 %v1749, %v2419
  %v2421 = vrcp.pop %v1907
  %v2422 = vmul.f32 %v1907, %v2421
  %v2423 = vsub.f32 1.0, %v2422
  %v2424 = vmul.f32 %v2421, %v2423
  %v2425 = vadd.f32 %v2421, %v2424
  %vm2426 = vweird.f32 %v1907
  %vm2427 = vweird.f32 %v2421
  %vm2428 = vmor %vm2426, %vm2427
  %v2429 = vsel %vm2428, %v2421, %v2425
  %v2430 = vand.u32 2147483647, %v1907
  %vm2431 = vcmp.eq.f32.partialorder %v2430, 8.507059e+37
  %v2432 = vand.u32 %v1907, 2147483648
  %v2433 = vor.u32 1.1754944e-38, %v2432
  %v2434 = vsel %vm2431, %v2433, %v2429
  %v2435 = vmul.f32 %v1751, %v2434
  %v2436 = vrcp.pop %v1910
  %v2437 = vmul.f32 %v1910, %v2436
  %v2438 = vsub.f32 1.0, %v2437
  %v2439 = vmul.f32 %v2436, %v2438
  %v2440 = vadd.f32 %v2436, %v2439
  %vm2441 = vweird.f32 %v1910
  %vm2442 = vweird.f32 %v2436
  %vm2443 = vmor %vm2441, %vm2442
  %v2444 = vsel %vm2443, %v2436, %v2440
  %v2445 = vand.u32 2147483647, %v1910
  %vm2446 = vcmp.eq.f32.partialorder %v2445, 8.507059e+37
  %v2447 = vand.u32 %v1910, 2147483648
  %v2448 = vor.u32 1.1754944e-38, %v2447
  %v2449 = vsel %vm2446, %v2448, %v2444
  %v2450 = vmul.f32 %v1753, %v2449
  %v2451 = vrcp.pop %v1913
  %v2452 = vmul.f32 %v1913, %v2451
  %v2453 = vsub.f32 1.0, %v2452
  %v2454 = vmul.f32 %v2451, %v2453
  %v2455 = vadd.f32 %v2451, %v2454
  %vm2456 = vweird.f32 %v1913
  %vm2457 = vweird.f32 %v2451
  %vm2458 = vmor %vm2456, %vm2457
  %v2459 = vsel %vm2458, %v2451, %v2455
  %v2460 = vand.u32 2147483647, %v1913
  %vm2461 = vcmp.eq.f32.partialorder %v2460, 8.507059e+37
  %v2462 = vand.u32 %v1913, 2147483648
  %v2463 = vor.u32 1.1754944e-38, %v2462
  %v2464 = vsel %vm2461, %v2463, %v2459
  %v2465 = vmul.f32 %v1755, %v2464
  %v2466 = vrcp.pop %v1916
  %v2467 = vmul.f32 %v1916, %v2466
  %v2468 = vsub.f32 1.0, %v2467
  %v2469 = vmul.f32 %v2466, %v2468
  %v2470 = vadd.f32 %v2466, %v2469
  %vm2471 = vweird.f32 %v1916
  %vm2472 = vweird.f32 %v2466
  %vm2473 = vmor %vm2471, %vm2472
  %v2474 = vsel %vm2473, %v2466, %v2470
  %v2475 = vand.u32 2147483647, %v1916
  %vm2476 = vcmp.eq.f32.partialorder %v2475, 8.507059e+37
  %v2477 = vand.u32 %v1916, 2147483648
  %v2478 = vor.u32 1.1754944e-38, %v2477
  %v2479 = vsel %vm2476, %v2478, %v2474
  %v2480 = vmul.f32 %v1757, %v2479
  %v2481 = vrcp.pop %v1919
  %v2482 = vmul.f32 %v1919, %v2481
  %v2483 = vsub.f32 1.0, %v2482
  %v2484 = vmul.f32 %v2481, %v2483
  %v2485 = vadd.f32 %v2481, %v2484
  %vm2486 = vweird.f32 %v1919
  %vm2487 = vweird.f32 %v2481
  %vm2488 = vmor %vm2486, %vm2487
  %v2489 = vsel %vm2488, %v2481, %v2485
  %v2490 = vand.u32 2147483647, %v1919
  %vm2491 = vcmp.eq.f32.partialorder %v2490, 8.507059e+37
  %v2492 = vand.u32 %v1919, 2147483648
  %v2493 = vor.u32 1.1754944e-38, %v2492
  %v2494 = vsel %vm2491, %v2493, %v2489
  %v2495 = vmul.f32 %v1759, %v2494
  %v2496 = vrcp.pop %v1922
  %v2497 = vmul.f32 %v1922, %v2496
  %v2498 = vsub.f32 1.0, %v2497
  %v2499 = vmul.f32 %v2496, %v2498
  %v2500 = vadd.f32 %v2496, %v2499
  %vm2501 = vweird.f32 %v1922
  %vm2502 = vweird.f32 %v2496
  %vm2503 = vmor %vm2501, %vm2502
  %v2504 = vsel %vm2503, %v2496, %v2500
  %v2505 = vand.u32 2147483647, %v1922
  %vm2506 = vcmp.eq.f32.partialorder %v2505, 8.507059e+37
  %v2507 = vand.u32 %v1922, 2147483648
  %v2508 = vor.u32 1.1754944e-38, %v2507
  %v2509 = vsel %vm2506, %v2508, %v2504
  %v2510 = vmul.f32 %v1761, %v2509
  %v2511 = vrcp.pop %v1925
  %v2512 = vmul.f32 %v1925, %v2511
  %v2513 = vsub.f32 1.0, %v2512
  %v2514 = vmul.f32 %v2511, %v2513
  %v2515 = vadd.f32 %v2511, %v2514
  %vm2516 = vweird.f32 %v1925
  %vm2517 = vweird.f32 %v2511
  %vm2518 = vmor %vm2516, %vm2517
  %v2519 = vsel %vm2518, %v2511, %v2515
  %v2520 = vand.u32 2147483647, %v1925
  %vm2521 = vcmp.eq.f32.partialorder %v2520, 8.507059e+37
  %v2522 = vand.u32 %v1925, 2147483648
  %v2523 = vor.u32 1.1754944e-38, %v2522
  %v2524 = vsel %vm2521, %v2523, %v2519
  %v2525 = vmul.f32 %v1763, %v2524
  %v2526 = vrcp.pop %v1928
  %v2527 = vmul.f32 %v1928, %v2526
  %v2528 = vsub.f32 1.0, %v2527
  %v2529 = vmul.f32 %v2526, %v2528
  %v2530 = vadd.f32 %v2526, %v2529
  %vm2531 = vweird.f32 %v1928
  %vm2532 = vweird.f32 %v2526
  %vm2533 = vmor %vm2531, %vm2532
  %v2534 = vsel %vm2533, %v2526, %v2530
  %v2535 = vand.u32 2147483647, %v1928
  %vm2536 = vcmp.eq.f32.partialorder %v2535, 8.507059e+37
  %v2537 = vand.u32 %v1928, 2147483648
  %v2538 = vor.u32 1.1754944e-38, %v2537
  %v2539 = vsel %vm2536, %v2538, %v2534
  %v2540 = vmul.f32 %v1765, %v2539
  %v2541 = vrcp.pop %v1931
  %v2542 = vmul.f32 %v1931, %v2541
  %v2543 = vsub.f32 1.0, %v2542
  %v2544 = vmul.f32 %v2541, %v2543
  %v2545 = vadd.f32 %v2541, %v2544
  %vm2546 = vweird.f32 %v1931
  %vm2547 = vweird.f32 %v2541
  %vm2548 = vmor %vm2546, %vm2547
  %v2549 = vsel %vm2548, %v2541, %v2545
  %v2550 = vand.u32 2147483647, %v1931
  %vm2551 = vcmp.eq.f32.partialorder %v2550, 8.507059e+37
  %v2552 = vand.u32 %v1931, 2147483648
  %v2553 = vor.u32 1.1754944e-38, %v2552
  %v2554 = vsel %vm2551, %v2553, %v2549
  %v2555 = vmul.f32 %v1767, %v2554
  %v2556 = vrcp.pop %v1934
  %v2557 = vmul.f32 %v1934, %v2556
  %v2558 = vsub.f32 1.0, %v2557
  %v2559 = vmul.f32 %v2556, %v2558
  %v2560 = vadd.f32 %v2556, %v2559
  %vm2561 = vweird.f32 %v1934
  %vm2562 = vweird.f32 %v2556
  %vm2563 = vmor %vm2561, %vm2562
  %v2564 = vsel %vm2563, %v2556, %v2560
  %v2565 = vand.u32 2147483647, %v1934
  %vm2566 = vcmp.eq.f32.partialorder %v2565, 8.507059e+37
  %v2567 = vand.u32 %v1934, 2147483648
  %v2568 = vor.u32 1.1754944e-38, %v2567
  %v2569 = vsel %vm2566, %v2568, %v2564
  %v2570 = vmul.f32 %v1769, %v2569
  %v2571 = vrcp.pop %v1937
  %v2572 = vmul.f32 %v1937, %v2571
  %v2573 = vsub.f32 1.0, %v2572
  %v2574 = vmul.f32 %v2571, %v2573
  %v2575 = vadd.f32 %v2571, %v2574
  %vm2576 = vweird.f32 %v1937
  %vm2577 = vweird.f32 %v2571
  %vm2578 = vmor %vm2576, %vm2577
  %v2579 = vsel %vm2578, %v2571, %v2575
  %v2580 = vand.u32 2147483647, %v1937
  %vm2581 = vcmp.eq.f32.partialorder %v2580, 8.507059e+37
  %v2582 = vand.u32 %v1937, 2147483648
  %v2583 = vor.u32 1.1754944e-38, %v2582
  %v2584 = vsel %vm2581, %v2583, %v2579
  %v2585 = vmul.f32 %v1771, %v2584
  %v2586 = vrcp.pop %v1940
  %v2587 = vmul.f32 %v1940, %v2586
  %v2588 = vsub.f32 1.0, %v2587
  %v2589 = vmul.f32 %v2586, %v2588
  %v2590 = vadd.f32 %v2586, %v2589
  %vm2591 = vweird.f32 %v1940
  %vm2592 = vweird.f32 %v2586
  %vm2593 = vmor %vm2591, %vm2592
  %v2594 = vsel %vm2593, %v2586, %v2590
  %v2595 = vand.u32 2147483647, %v1940
  %vm2596 = vcmp.eq.f32.partialorder %v2595, 8.507059e+37
  %v2597 = vand.u32 %v1940, 2147483648
  %v2598 = vor.u32 1.1754944e-38, %v2597
  %v2599 = vsel %vm2596, %v2598, %v2594
  %v2600 = vmul.f32 %v1773, %v2599
  %v2601 = vrcp.pop %v1943
  %v2602 = vmul.f32 %v1943, %v2601
  %v2603 = vsub.f32 1.0, %v2602
  %v2604 = vmul.f32 %v2601, %v2603
  %v2605 = vadd.f32 %v2601, %v2604
  %vm2606 = vweird.f32 %v1943
  %vm2607 = vweird.f32 %v2601
  %vm2608 = vmor %vm2606, %vm2607
  %v2609 = vsel %vm2608, %v2601, %v2605
  %v2610 = vand.u32 2147483647, %v1943
  %vm2611 = vcmp.eq.f32.partialorder %v2610, 8.507059e+37
  %v2612 = vand.u32 %v1943, 2147483648
  %v2613 = vor.u32 1.1754944e-38, %v2612
  %v2614 = vsel %vm2611, %v2613, %v2609
  %v2615 = vmul.f32 %v1775, %v2614
  %v2616 = vrcp.pop %v1946
  %v2617 = vmul.f32 %v1946, %v2616
  %v2618 = vsub.f32 1.0, %v2617
  %v2619 = vmul.f32 %v2616, %v2618
  %v2620 = vadd.f32 %v2616, %v2619
  %vm2621 = vweird.f32 %v1946
  %vm2622 = vweird.f32 %v2616
  %vm2623 = vmor %vm2621, %vm2622
  %v2624 = vsel %vm2623, %v2616, %v2620
  %v2625 = vand.u32 2147483647, %v1946
  %vm2626 = vcmp.eq.f32.partialorder %v2625, 8.507059e+37
  %v2627 = vand.u32 %v1946, 2147483648
  %v2628 = vor.u32 1.1754944e-38, %v2627
  %v2629 = vsel %vm2626, %v2628, %v2624
  %v2630 = vmul.f32 %v1777, %v2629
  %v2631 = vrcp.pop %v1949
  %v2632 = vmul.f32 %v1949, %v2631
  %v2633 = vsub.f32 1.0, %v2632
  %v2634 = vmul.f32 %v2631, %v2633
  %v2635 = vadd.f32 %v2631, %v2634
  %vm2636 = vweird.f32 %v1949
  %vm2637 = vweird.f32 %v2631
  %vm2638 = vmor %vm2636, %vm2637
  %v2639 = vsel %vm2638, %v2631, %v2635
  %v2640 = vand.u32 2147483647, %v1949
  %vm2641 = vcmp.eq.f32.partialorder %v2640, 8.507059e+37
  %v2642 = vand.u32 %v1949, 2147483648
  %v2643 = vor.u32 1.1754944e-38, %v2642
  %v2644 = vsel %vm2641, %v2643, %v2639
  %v2645 = vmul.f32 %v1779, %v2644
  %v2646 = vrcp.pop %v1952
  %v2647 = vmul.f32 %v1952, %v2646
  %v2648 = vsub.f32 1.0, %v2647
  %v2649 = vmul.f32 %v2646, %v2648
  %v2650 = vadd.f32 %v2646, %v2649
  %vm2651 = vweird.f32 %v1952
  %vm2652 = vweird.f32 %v2646
  %vm2653 = vmor %vm2651, %vm2652
  %v2654 = vsel %vm2653, %v2646, %v2650
  %v2655 = vand.u32 2147483647, %v1952
  %vm2656 = vcmp.eq.f32.partialorder %v2655, 8.507059e+37
  %v2657 = vand.u32 %v1952, 2147483648
  %v2658 = vor.u32 1.1754944e-38, %v2657
  %v2659 = vsel %vm2656, %v2658, %v2654
  %v2660 = vmul.f32 %v1781, %v2659
  %v2661 = vrcp.pop %v1955
  %v2662 = vmul.f32 %v1955, %v2661
  %v2663 = vsub.f32 1.0, %v2662
  %v2664 = vmul.f32 %v2661, %v2663
  %v2665 = vadd.f32 %v2661, %v2664
  %vm2666 = vweird.f32 %v1955
  %vm2667 = vweird.f32 %v2661
  %vm2668 = vmor %vm2666, %vm2667
  %v2669 = vsel %vm2668, %v2661, %v2665
  %v2670 = vand.u32 2147483647, %v1955
  %vm2671 = vcmp.eq.f32.partialorder %v2670, 8.507059e+37
  %v2672 = vand.u32 %v1955, 2147483648
  %v2673 = vor.u32 1.1754944e-38, %v2672
  %v2674 = vsel %vm2671, %v2673, %v2669
  %v2675 = vmul.f32 %v1783, %v2674
  %v2676 = vrcp.pop %v1958
  %v2677 = vmul.f32 %v1958, %v2676
  %v2678 = vsub.f32 1.0, %v2677
  %v2679 = vmul.f32 %v2676, %v2678
  %v2680 = vadd.f32 %v2676, %v2679
  %vm2681 = vweird.f32 %v1958
  %vm2682 = vweird.f32 %v2676
  %vm2683 = vmor %vm2681, %vm2682
  %v2684 = vsel %vm2683, %v2676, %v2680
  %v2685 = vand.u32 2147483647, %v1958
  %vm2686 = vcmp.eq.f32.partialorder %v2685, 8.507059e+37
  %v2687 = vand.u32 %v1958, 2147483648
  %v2688 = vor.u32 1.1754944e-38, %v2687
  %v2689 = vsel %vm2686, %v2688, %v2684
  %v2690 = vmul.f32 %v1785, %v2689
  %v2691 = vrcp.pop %v1961
  %v2692 = vmul.f32 %v1961, %v2691
  %v2693 = vsub.f32 1.0, %v2692
  %v2694 = vmul.f32 %v2691, %v2693
  %v2695 = vadd.f32 %v2691, %v2694
  %vm2696 = vweird.f32 %v1961
  %vm2697 = vweird.f32 %v2691
  %vm2698 = vmor %vm2696, %vm2697
  %v2699 = vsel %vm2698, %v2691, %v2695
  %v2700 = vand.u32 2147483647, %v1961
  %vm2701 = vcmp.eq.f32.partialorder %v2700, 8.507059e+37
  %v2702 = vand.u32 %v1961, 2147483648
  %v2703 = vor.u32 1.1754944e-38, %v2702
  %v2704 = vsel %vm2701, %v2703, %v2699
  %v2705 = vmul.f32 %v1787, %v2704
  %v2706 = vrcp.pop %v1964
  %v2707 = vmul.f32 %v1964, %v2706
  %v2708 = vsub.f32 1.0, %v2707
  %v2709 = vmul.f32 %v2706, %v2708
  %v2710 = vadd.f32 %v2706, %v2709
  %vm2711 = vweird.f32 %v1964
  %vm2712 = vweird.f32 %v2706
  %vm2713 = vmor %vm2711, %vm2712
  %v2714 = vsel %vm2713, %v2706, %v2710
  %v2715 = vand.u32 2147483647, %v1964
  %vm2716 = vcmp.eq.f32.partialorder %v2715, 8.507059e+37
  %v2717 = vand.u32 %v1964, 2147483648
  %v2718 = vor.u32 1.1754944e-38, %v2717
  %v2719 = vsel %vm2716, %v2718, %v2714
  %v2720 = vmul.f32 %v1789, %v2719
  %v2721 = vrcp.pop %v1967
  %v2722 = vmul.f32 %v1967, %v2721
  %v2723 = vsub.f32 1.0, %v2722
  %v2724 = vmul.f32 %v2721, %v2723
  %v2725 = vadd.f32 %v2721, %v2724
  %vm2726 = vweird.f32 %v1967
  %vm2727 = vweird.f32 %v2721
  %vm2728 = vmor %vm2726, %vm2727
  %v2729 = vsel %vm2728, %v2721, %v2725
  %v2730 = vand.u32 2147483647, %v1967
  %vm2731 = vcmp.eq.f32.partialorder %v2730, 8.507059e+37
  %v2732 = vand.u32 %v1967, 2147483648
  %v2733 = vor.u32 1.1754944e-38, %v2732
  %v2734 = vsel %vm2731, %v2733, %v2729
  %v2735 = vmul.f32 %v1791, %v2734
  %v2736 = vrcp.pop %v1970
  %v2737 = vmul.f32 %v1970, %v2736
  %v2738 = vsub.f32 1.0, %v2737
  %v2739 = vmul.f32 %v2736, %v2738
  %v2740 = vadd.f32 %v2736, %v2739
  %vm2741 = vweird.f32 %v1970
  %vm2742 = vweird.f32 %v2736
  %vm2743 = vmor %vm2741, %vm2742
  %v2744 = vsel %vm2743, %v2736, %v2740
  %v2745 = vand.u32 2147483647, %v1970
  %vm2746 = vcmp.eq.f32.partialorder %v2745, 8.507059e+37
  %v2747 = vand.u32 %v1970, 2147483648
  %v2748 = vor.u32 1.1754944e-38, %v2747
  %v2749 = vsel %vm2746, %v2748, %v2744
  %v2750 = vmul.f32 %v1793, %v2749
  %v2751 = vrcp.pop %v1973
  %v2752 = vmul.f32 %v1973, %v2751
  %v2753 = vsub.f32 1.0, %v2752
  %v2754 = vmul.f32 %v2751, %v2753
  %v2755 = vadd.f32 %v2751, %v2754
  %vm2756 = vweird.f32 %v1973
  %vm2757 = vweird.f32 %v2751
  %vm2758 = vmor %vm2756, %vm2757
  %v2759 = vsel %vm2758, %v2751, %v2755
  %v2760 = vand.u32 2147483647, %v1973
  %vm2761 = vcmp.eq.f32.partialorder %v2760, 8.507059e+37
  %v2762 = vand.u32 %v1973, 2147483648
  %v2763 = vor.u32 1.1754944e-38, %v2762
  %v2764 = vsel %vm2761, %v2763, %v2759
  %v2765 = vmul.f32 %v1795, %v2764
  %v2766 = vrcp.pop %v1976
  %v2767 = vmul.f32 %v1976, %v2766
  %v2768 = vsub.f32 1.0, %v2767
  %v2769 = vmul.f32 %v2766, %v2768
  %v2770 = vadd.f32 %v2766, %v2769
  %vm2771 = vweird.f32 %v1976
  %vm2772 = vweird.f32 %v2766
  %vm2773 = vmor %vm2771, %vm2772
  %v2774 = vsel %vm2773, %v2766, %v2770
  %v2775 = vand.u32 2147483647, %v1976
  %vm2776 = vcmp.eq.f32.partialorder %v2775, 8.507059e+37
  %v2777 = vand.u32 %v1976, 2147483648
  %v2778 = vor.u32 1.1754944e-38, %v2777
  %v2779 = vsel %vm2776, %v2778, %v2774
  %v2780 = vmul.f32 %v1797, %v2779
  %v2781 = vrcp.pop %v1979
  %v2782 = vmul.f32 %v1979, %v2781
  %v2783 = vsub.f32 1.0, %v2782
  %v2784 = vmul.f32 %v2781, %v2783
  %v2785 = vadd.f32 %v2781, %v2784
  %vm2786 = vweird.f32 %v1979
  %vm2787 = vweird.f32 %v2781
  %vm2788 = vmor %vm2786, %vm2787
  %v2789 = vsel %vm2788, %v2781, %v2785
  %v2790 = vand.u32 2147483647, %v1979
  %vm2791 = vcmp.eq.f32.partialorder %v2790, 8.507059e+37
  %v2792 = vand.u32 %v1979, 2147483648
  %v2793 = vor.u32 1.1754944e-38, %v2792
  %v2794 = vsel %vm2791, %v2793, %v2789
  %v2795 = vmul.f32 %v1799, %v2794
  %v2796 = vrcp.pop %v1982
  %v2797 = vmul.f32 %v1982, %v2796
  %v2798 = vsub.f32 1.0, %v2797
  %v2799 = vmul.f32 %v2796, %v2798
  %v2800 = vadd.f32 %v2796, %v2799
  %vm2801 = vweird.f32 %v1982
  %vm2802 = vweird.f32 %v2796
  %vm2803 = vmor %vm2801, %vm2802
  %v2804 = vsel %vm2803, %v2796, %v2800
  %v2805 = vand.u32 2147483647, %v1982
  %vm2806 = vcmp.eq.f32.partialorder %v2805, 8.507059e+37
  %v2807 = vand.u32 %v1982, 2147483648
  %v2808 = vor.u32 1.1754944e-38, %v2807
  %v2809 = vsel %vm2806, %v2808, %v2804
  %v2810 = vmul.f32 %v1801, %v2809
  %v2811 = vrcp.pop %v1985
  %v2812 = vmul.f32 %v1985, %v2811
  %v2813 = vsub.f32 1.0, %v2812
  %v2814 = vmul.f32 %v2811, %v2813
  %v2815 = vadd.f32 %v2811, %v2814
  %vm2816 = vweird.f32 %v1985
  %vm2817 = vweird.f32 %v2811
  %vm2818 = vmor %vm2816, %vm2817
  %v2819 = vsel %vm2818, %v2811, %v2815
  %v2820 = vand.u32 2147483647, %v1985
  %vm2821 = vcmp.eq.f32.partialorder %v2820, 8.507059e+37
  %v2822 = vand.u32 %v1985, 2147483648
  %v2823 = vor.u32 1.1754944e-38, %v2822
  %v2824 = vsel %vm2821, %v2823, %v2819
  %v2825 = vmul.f32 %v1803, %v2824
  %v2826 = vrcp.pop %v1988
  %v2827 = vmul.f32 %v1988, %v2826
  %v2828 = vsub.f32 1.0, %v2827
  %v2829 = vmul.f32 %v2826, %v2828
  %v2830 = vadd.f32 %v2826, %v2829
  %vm2831 = vweird.f32 %v1988
  %vm2832 = vweird.f32 %v2826
  %vm2833 = vmor %vm2831, %vm2832
  %v2834 = vsel %vm2833, %v2826, %v2830
  %v2835 = vand.u32 2147483647, %v1988
  %vm2836 = vcmp.eq.f32.partialorder %v2835, 8.507059e+37
  %v2837 = vand.u32 %v1988, 2147483648
  %v2838 = vor.u32 1.1754944e-38, %v2837
  %v2839 = vsel %vm2836, %v2838, %v2834
  %v2840 = vmul.f32 %v1805, %v2839
  %v2841 = vrcp.pop %v1991
  %v2842 = vmul.f32 %v1991, %v2841
  %v2843 = vsub.f32 1.0, %v2842
  %v2844 = vmul.f32 %v2841, %v2843
  %v2845 = vadd.f32 %v2841, %v2844
  %vm2846 = vweird.f32 %v1991
  %vm2847 = vweird.f32 %v2841
  %vm2848 = vmor %vm2846, %vm2847
  %v2849 = vsel %vm2848, %v2841, %v2845
  %v2850 = vand.u32 2147483647, %v1991
  %vm2851 = vcmp.eq.f32.partialorder %v2850, 8.507059e+37
  %v2852 = vand.u32 %v1991, 2147483648
  %v2853 = vor.u32 1.1754944e-38, %v2852
  %v2854 = vsel %vm2851, %v2853, %v2849
  %v2855 = vmul.f32 %v1807, %v2854
  %v2856 = vrcp.pop %v1994
  %v2857 = vmul.f32 %v1994, %v2856
  %v2858 = vsub.f32 1.0, %v2857
  %v2859 = vmul.f32 %v2856, %v2858
  %v2860 = vadd.f32 %v2856, %v2859
  %vm2861 = vweird.f32 %v1994
  %vm2862 = vweird.f32 %v2856
  %vm2863 = vmor %vm2861, %vm2862
  %v2864 = vsel %vm2863, %v2856, %v2860
  %v2865 = vand.u32 2147483647, %v1994
  %vm2866 = vcmp.eq.f32.partialorder %v2865, 8.507059e+37
  %v2867 = vand.u32 %v1994, 2147483648
  %v2868 = vor.u32 1.1754944e-38, %v2867
  %v2869 = vsel %vm2866, %v2868, %v2864
  %v2870 = vmul.f32 %v1809, %v2869
  %v2871 = vrcp.pop %v1997
  %v2872 = vmul.f32 %v1997, %v2871
  %v2873 = vsub.f32 1.0, %v2872
  %v2874 = vmul.f32 %v2871, %v2873
  %v2875 = vadd.f32 %v2871, %v2874
  %vm2876 = vweird.f32 %v1997
  %vm2877 = vweird.f32 %v2871
  %vm2878 = vmor %vm2876, %vm2877
  %v2879 = vsel %vm2878, %v2871, %v2875
  %v2880 = vand.u32 2147483647, %v1997
  %vm2881 = vcmp.eq.f32.partialorder %v2880, 8.507059e+37
  %v2882 = vand.u32 %v1997, 2147483648
  %v2883 = vor.u32 1.1754944e-38, %v2882
  %v2884 = vsel %vm2881, %v2883, %v2879
  %v2885 = vmul.f32 %v1811, %v2884
  %v2886 = vrcp.pop %v2000
  %v2887 = vmul.f32 %v2000, %v2886
  %v2888 = vsub.f32 1.0, %v2887
  %v2889 = vmul.f32 %v2886, %v2888
  %v2890 = vadd.f32 %v2886, %v2889
  %vm2891 = vweird.f32 %v2000
  %vm2892 = vweird.f32 %v2886
  %vm2893 = vmor %vm2891, %vm2892
  %v2894 = vsel %vm2893, %v2886, %v2890
  %v2895 = vand.u32 2147483647, %v2000
  %vm2896 = vcmp.eq.f32.partialorder %v2895, 8.507059e+37
  %v2897 = vand.u32 %v2000, 2147483648
  %v2898 = vor.u32 1.1754944e-38, %v2897
  %v2899 = vsel %vm2896, %v2898, %v2894
  %v2900 = vmul.f32 %v1813, %v2899
  %v2901 = vrcp.pop %v2003
  %v2902 = vmul.f32 %v2003, %v2901
  %v2903 = vsub.f32 1.0, %v2902
  %v2904 = vmul.f32 %v2901, %v2903
  %v2905 = vadd.f32 %v2901, %v2904
  %vm2906 = vweird.f32 %v2003
  %vm2907 = vweird.f32 %v2901
  %vm2908 = vmor %vm2906, %vm2907
  %v2909 = vsel %vm2908, %v2901, %v2905
  %v2910 = vand.u32 2147483647, %v2003
  %vm2911 = vcmp.eq.f32.partialorder %v2910, 8.507059e+37
  %v2912 = vand.u32 %v2003, 2147483648
  %v2913 = vor.u32 1.1754944e-38, %v2912
  %v2914 = vsel %vm2911, %v2913, %v2909
  %v2915 = vmul.f32 %v1815, %v2914
  %v2916 = vrcp.pop %v2006
  %v2917 = vmul.f32 %v2006, %v2916
  %v2918 = vsub.f32 1.0, %v2917
  %v2919 = vmul.f32 %v2916, %v2918
  %v2920 = vadd.f32 %v2916, %v2919
  %vm2921 = vweird.f32 %v2006
  %vm2922 = vweird.f32 %v2916
  %vm2923 = vmor %vm2921, %vm2922
  %v2924 = vsel %vm2923, %v2916, %v2920
  %v2925 = vand.u32 2147483647, %v2006
  %vm2926 = vcmp.eq.f32.partialorder %v2925, 8.507059e+37
  %v2927 = vand.u32 %v2006, 2147483648
  %v2928 = vor.u32 1.1754944e-38, %v2927
  %v2929 = vsel %vm2926, %v2928, %v2924
  %v2930 = vmul.f32 %v1817, %v2929
  %v2931 = vrcp.pop %v2009
  %v2932 = vmul.f32 %v2009, %v2931
  %v2933 = vsub.f32 1.0, %v2932
  %v2934 = vmul.f32 %v2931, %v2933
  %v2935 = vadd.f32 %v2931, %v2934
  %vm2936 = vweird.f32 %v2009
  %vm2937 = vweird.f32 %v2931
  %vm2938 = vmor %vm2936, %vm2937
  %v2939 = vsel %vm2938, %v2931, %v2935
  %v2940 = vand.u32 2147483647, %v2009
  %vm2941 = vcmp.eq.f32.partialorder %v2940, 8.507059e+37
  %v2942 = vand.u32 %v2009, 2147483648
  %v2943 = vor.u32 1.1754944e-38, %v2942
  %v2944 = vsel %vm2941, %v2943, %v2939
  %v2945 = vmul.f32 %v1819, %v2944
  %v2946 = vrcp.pop %v2012
  %v2947 = vmul.f32 %v2012, %v2946
  %v2948 = vsub.f32 1.0, %v2947
  %v2949 = vmul.f32 %v2946, %v2948
  %v2950 = vadd.f32 %v2946, %v2949
  %vm2951 = vweird.f32 %v2012
  %vm2952 = vweird.f32 %v2946
  %vm2953 = vmor %vm2951, %vm2952
  %v2954 = vsel %vm2953, %v2946, %v2950
  %v2955 = vand.u32 2147483647, %v2012
  %vm2956 = vcmp.eq.f32.partialorder %v2955, 8.507059e+37
  %v2957 = vand.u32 %v2012, 2147483648
  %v2958 = vor.u32 1.1754944e-38, %v2957
  %v2959 = vsel %vm2956, %v2958, %v2954
  %v2960 = vmul.f32 %v1821, %v2959
  %v2961 = vrcp.pop %v2015
  %v2962 = vmul.f32 %v2015, %v2961
  %v2963 = vsub.f32 1.0, %v2962
  %v2964 = vmul.f32 %v2961, %v2963
  %v2965 = vadd.f32 %v2961, %v2964
  %vm2966 = vweird.f32 %v2015
  %vm2967 = vweird.f32 %v2961
  %vm2968 = vmor %vm2966, %vm2967
  %v2969 = vsel %vm2968, %v2961, %v2965
  %v2970 = vand.u32 2147483647, %v2015
  %vm2971 = vcmp.eq.f32.partialorder %v2970, 8.507059e+37
  %v2972 = vand.u32 %v2015, 2147483648
  %v2973 = vor.u32 1.1754944e-38, %v2972
  %v2974 = vsel %vm2971, %v2973, %v2969
  %v2975 = vmul.f32 %v1823, %v2974
  %2976 = vst.msk [vmem:[%s5] sm:$0xff] %vm582, %v2030
  %2977 = vst.msk [vmem:[%s5 + $0x8] sm:$0xff] %vm582, %v2045
  %2978 = vst.msk [vmem:[%s5 + $0x10] sm:$0xff] %vm582, %v2060
  %2979 = vst.msk [vmem:[%s5 + $0x18] sm:$0xff] %vm582, %v2075
  %2980 = vst.msk [vmem:[%s5 + $0x20] sm:$0xff] %vm582, %v2090
  %2981 = vst.msk [vmem:[%s5 + $0x28] sm:$0xff] %vm582, %v2105
  %2982 = vst.msk [vmem:[%s5 + $0x30] sm:$0xff] %vm582, %v2120
  %2983 = vst.msk [vmem:[%s5 + $0x38] sm:$0xff] %vm582, %v2135
  %2984 = vst.msk [vmem:[%s5 + $0x40] sm:$0xff] %vm582, %v2150
  %2985 = vst.msk [vmem:[%s5 + $0x48] sm:$0xff] %vm582, %v2165
  %2986 = vst.msk [vmem:[%s5 + $0x50] sm:$0xff] %vm582, %v2180
  %2987 = vst.msk [vmem:[%s5 + $0x58] sm:$0xff] %vm582, %v2195
  %2988 = vst.msk [vmem:[%s5 + $0x60] sm:$0xff] %vm582, %v2210
  %2989 = vst.msk [vmem:[%s5 + $0x68] sm:$0xff] %vm582, %v2225
  %2990 = vst.msk [vmem:[%s5 + $0x70] sm:$0xff] %vm582, %v2240
  %2991 = vst.msk [vmem:[%s5 + $0x78] sm:$0xff] %vm582, %v2255
  %2992 = vst.msk [vmem:[%s5 + $0x80] sm:$0xff] %vm582, %v2270
  %2993 = vst.msk [vmem:[%s5 + $0x88] sm:$0xff] %vm582, %v2285
  %2994 = vst.msk [vmem:[%s5 + $0x90] sm:$0xff] %vm582, %v2300
  %2995 = vst.msk [vmem:[%s5 + $0x98] sm:$0xff] %vm582, %v2315
  %2996 = vst.msk [vmem:[%s5 + $0xa0] sm:$0xff] %vm582, %v2330
  %2997 = vst.msk [vmem:[%s5 + $0xa8] sm:$0xff] %vm582, %v2345
  %2998 = vst.msk [vmem:[%s5 + $0xb0] sm:$0xff] %vm582, %v2360
  %2999 = vst.msk [vmem:[%s5 + $0xb8] sm:$0xff] %vm582, %v2375
  %3000 = vst.msk [vmem:[%s5 + $0xc0] sm:$0xff] %vm582, %v2390
  %3001 = vst.msk [vmem:[%s5 + $0xc8] sm:$0xff] %vm582, %v2405
  %3002 = vst.msk [vmem:[%s5 + $0xd0] sm:$0xff] %vm582, %v2420
  %3003 = vst.msk [vmem:[%s5 + $0xd8] sm:$0xff] %vm582, %v2435
  %3004 = vst.msk [vmem:[%s5 + $0xe0] sm:$0xff] %vm582, %v2450
  %3005 = vst.msk [vmem:[%s5 + $0xe8] sm:$0xff] %vm582, %v2465
  %3006 = vst.msk [vmem:[%s5 + $0xf0] sm:$0xff] %vm582, %v2480
  %3007 = vst.msk [vmem:[%s5 + $0xf8] sm:$0xff] %vm582, %v2495
  %3008 = vst.msk [vmem:[%s5 + $0x100] sm:$0xff] %vm582, %v2510
  %3009 = vst.msk [vmem:[%s5 + $0x108] sm:$0xff] %vm582, %v2525
  %3010 = vst.msk [vmem:[%s5 + $0x110] sm:$0xff] %vm582, %v2540
  %3011 = vst.msk [vmem:[%s5 + $0x118] sm:$0xff] %vm582, %v2555
  %3012 = vst.msk [vmem:[%s5 + $0x120] sm:$0xff] %vm582, %v2570
  %3013 = vst.msk [vmem:[%s5 + $0x128] sm:$0xff] %vm582, %v2585
  %3014 = vst.msk [vmem:[%s5 + $0x130] sm:$0xff] %vm582, %v2600
  %3015 = vst.msk [vmem:[%s5 + $0x138] sm:$0xff] %vm582, %v2615
  %3016 = vst.msk [vmem:[%s5 + $0x140] sm:$0xff] %vm582, %v2630
  %3017 = vst.msk [vmem:[%s5 + $0x148] sm:$0xff] %vm582, %v2645
  %3018 = vst.msk [vmem:[%s5 + $0x150] sm:$0xff] %vm582, %v2660
  %3019 = vst.msk [vmem:[%s5 + $0x158] sm:$0xff] %vm582, %v2675
  %3020 = vst.msk [vmem:[%s5 + $0x160] sm:$0xff] %vm582, %v2690
  %3021 = vst.msk [vmem:[%s5 + $0x168] sm:$0xff] %vm582, %v2705
  %3022 = vst.msk [vmem:[%s5 + $0x170] sm:$0xff] %vm582, %v2720
  %3023 = vst.msk [vmem:[%s5 + $0x178] sm:$0xff] %vm582, %v2735
  %3024 = vst.msk [vmem:[%s5 + $0x180] sm:$0xff] %vm582, %v2750
  %3025 = vst.msk [vmem:[%s5 + $0x188] sm:$0xff] %vm582, %v2765
  %3026 = vst.msk [vmem:[%s5 + $0x190] sm:$0xff] %vm582, %v2780
  %3027 = vst.msk [vmem:[%s5 + $0x198] sm:$0xff] %vm582, %v2795
  %3028 = vst.msk [vmem:[%s5 + $0x1a0] sm:$0xff] %vm582, %v2810
  %3029 = vst.msk [vmem:[%s5 + $0x1a8] sm:$0xff] %vm582, %v2825
  %3030 = vst.msk [vmem:[%s5 + $0x1b0] sm:$0xff] %vm582, %v2840
  %3031 = vst.msk [vmem:[%s5 + $0x1b8] sm:$0xff] %vm582, %v2855
  %3032 = vst.msk [vmem:[%s5 + $0x1c0] sm:$0xff] %vm582, %v2870
  %3033 = vst.msk [vmem:[%s5 + $0x1c8] sm:$0xff] %vm582, %v2885
  %3034 = vst.msk [vmem:[%s5 + $0x1d0] sm:$0xff] %vm582, %v2900
  %3035 = vst.msk [vmem:[%s5 + $0x1d8] sm:$0xff] %vm582, %v2915
  %3036 = vst.msk [vmem:[%s5 + $0x1e0] sm:$0xff] %vm582, %v2930
  %3037 = vst.msk [vmem:[%s5 + $0x1e8] sm:$0xff] %vm582, %v2945
  %3038 = vst.msk [vmem:[%s5 + $0x1f0] sm:$0xff] %vm582, %v2960
  %3039 = vst.msk [vmem:[%s5 + $0x1f8] sm:$0xff] %vm582, %v2975
  %v3040 = vpack.c.bf16 %v2030, %v2030
  %v3041 = vpack.c.bf16 %v2045, %v2045
  %v3042 = vpack.c.bf16 %v2060, %v2060
  %v3043 = vpack.c.bf16 %v2075, %v2075
  %v3044 = vpack.c.bf16 %v2090, %v2090
  %v3045 = vpack.c.bf16 %v2105, %v2105
  %v3046 = vpack.c.bf16 %v2120, %v2120
  %v3047 = vpack.c.bf16 %v2135, %v2135
  %v3048 = vpack.c.bf16 %v2150, %v2150
  %v3049 = vpack.c.bf16 %v2165, %v2165
  %v3050 = vpack.c.bf16 %v2180, %v2180
  %v3051 = vpack.c.bf16 %v2195, %v2195
  %v3052 = vpack.c.bf16 %v2210, %v2210
  %v3053 = vpack.c.bf16 %v2225, %v2225
  %v3054 = vpack.c.bf16 %v2240, %v2240
  %v3055 = vpack.c.bf16 %v2255, %v2255
  %v3056 = vpack.c.bf16 %v2270, %v2270
  %v3057 = vpack.c.bf16 %v2285, %v2285
  %v3058 = vpack.c.bf16 %v2300, %v2300
  %v3059 = vpack.c.bf16 %v2315, %v2315
  %v3060 = vpack.c.bf16 %v2330, %v2330
  %v3061 = vpack.c.bf16 %v2345, %v2345
  %v3062 = vpack.c.bf16 %v2360, %v2360
  %v3063 = vpack.c.bf16 %v2375, %v2375
  %v3064 = vpack.c.bf16 %v2390, %v2390
  %v3065 = vpack.c.bf16 %v2405, %v2405
  %v3066 = vpack.c.bf16 %v2420, %v2420
  %v3067 = vpack.c.bf16 %v2435, %v2435
  %v3068 = vpack.c.bf16 %v2450, %v2450
  %v3069 = vpack.c.bf16 %v2465, %v2465
  %v3070 = vpack.c.bf16 %v2480, %v2480
  %v3071 = vpack.c.bf16 %v2495, %v2495
  %v3072 = vpack.c.bf16 %v2510, %v2510
  %v3073 = vpack.c.bf16 %v2525, %v2525
  %v3074 = vpack.c.bf16 %v2540, %v2540
  %v3075 = vpack.c.bf16 %v2555, %v2555
  %v3076 = vpack.c.bf16 %v2570, %v2570
  %v3077 = vpack.c.bf16 %v2585, %v2585
  %v3078 = vpack.c.bf16 %v2600, %v2600
  %v3079 = vpack.c.bf16 %v2615, %v2615
  %v3080 = vpack.c.bf16 %v2630, %v2630
  %v3081 = vpack.c.bf16 %v2645, %v2645
  %v3082 = vpack.c.bf16 %v2660, %v2660
  %v3083 = vpack.c.bf16 %v2675, %v2675
  %v3084 = vpack.c.bf16 %v2690, %v2690
  %v3085 = vpack.c.bf16 %v2705, %v2705
  %v3086 = vpack.c.bf16 %v2720, %v2720
  %v3087 = vpack.c.bf16 %v2735, %v2735
  %v3088 = vpack.c.bf16 %v2750, %v2750
  %v3089 = vpack.c.bf16 %v2765, %v2765
  %v3090 = vpack.c.bf16 %v2780, %v2780
  %v3091 = vpack.c.bf16 %v2795, %v2795
  %v3092 = vpack.c.bf16 %v2810, %v2810
  %v3093 = vpack.c.bf16 %v2825, %v2825
  %v3094 = vpack.c.bf16 %v2840, %v2840
  %v3095 = vpack.c.bf16 %v2855, %v2855
  %v3096 = vpack.c.bf16 %v2870, %v2870
  %v3097 = vpack.c.bf16 %v2885, %v2885
  %v3098 = vpack.c.bf16 %v2900, %v2900
  %v3099 = vpack.c.bf16 %v2915, %v2915
  %v3100 = vpack.c.bf16 %v2930, %v2930
  %v3101 = vpack.c.bf16 %v2945, %v2945
  %v3102 = vpack.c.bf16 %v2960, %v2960
  %v3103 = vpack.c.bf16 %v2975, %v2975
  %v3104 = vpack.c.bf16 %v152, %v152
  %v3105 = vpack.c.bf16 %v154, %v154
  %v3106 = vpack.c.bf16 %v368, %v368
  %v3107 = vpack.c.bf16 %v370, %v370
  %v3108 = vpack.c.bf16 %v416, %v416
  %v3109 = vpack.c.bf16 %v418, %v418
  %v3110 = vpack.c.bf16 %v464, %v464
  %v3111 = vpack.c.bf16 %v466, %v466
  %v3112 = vpack.c.bf16 %v157, %v157
  %v3113 = vpack.c.bf16 %v159, %v159
  %v3114 = vpack.c.bf16 %v372, %v372
  %v3115 = vpack.c.bf16 %v374, %v374
  %v3116 = vpack.c.bf16 %v420, %v420
  %v3117 = vpack.c.bf16 %v422, %v422
  %v3118 = vpack.c.bf16 %v468, %v468
  %v3119 = vpack.c.bf16 %v470, %v470
  %v3120 = vpack.c.bf16 %v162, %v162
  %v3121 = vpack.c.bf16 %v164, %v164
  %v3122 = vpack.c.bf16 %v376, %v376
  %v3123 = vpack.c.bf16 %v378, %v378
  %v3124 = vpack.c.bf16 %v424, %v424
  %v3125 = vpack.c.bf16 %v426, %v426
  %v3126 = vpack.c.bf16 %v472, %v472
  %v3127 = vpack.c.bf16 %v474, %v474
  %v3128 = vpack.c.bf16 %v167, %v167
  %v3129 = vpack.c.bf16 %v169, %v169
  %v3130 = vpack.c.bf16 %v380, %v380
  %v3131 = vpack.c.bf16 %v382, %v382
  %v3132 = vpack.c.bf16 %v428, %v428
  %v3133 = vpack.c.bf16 %v430, %v430
  %v3134 = vpack.c.bf16 %v476, %v476
  %v3135 = vpack.c.bf16 %v478, %v478
  %v3136 = vpack.c.bf16 %v172, %v172
  %v3137 = vpack.c.bf16 %v174, %v174
  %v3138 = vpack.c.bf16 %v384, %v384
  %v3139 = vpack.c.bf16 %v386, %v386
  %v3140 = vpack.c.bf16 %v432, %v432
  %v3141 = vpack.c.bf16 %v434, %v434
  %v3142 = vpack.c.bf16 %v480, %v480
  %v3143 = vpack.c.bf16 %v482, %v482
  %v3144 = vpack.c.bf16 %v177, %v177
  %v3145 = vpack.c.bf16 %v179, %v179
  %v3146 = vpack.c.bf16 %v388, %v388
  %v3147 = vpack.c.bf16 %v390, %v390
  %v3148 = vpack.c.bf16 %v436, %v436
  %v3149 = vpack.c.bf16 %v438, %v438
  %v3150 = vpack.c.bf16 %v484, %v484
  %v3151 = vpack.c.bf16 %v486, %v486
  %v3152 = vpack.c.bf16 %v182, %v182
  %v3153 = vpack.c.bf16 %v184, %v184
  %v3154 = vpack.c.bf16 %v392, %v392
  %v3155 = vpack.c.bf16 %v394, %v394
  %v3156 = vpack.c.bf16 %v440, %v440
  %v3157 = vpack.c.bf16 %v442, %v442
  %v3158 = vpack.c.bf16 %v488, %v488
  %v3159 = vpack.c.bf16 %v490, %v490
  %v3160 = vpack.c.bf16 %v187, %v187
  %v3161 = vpack.c.bf16 %v189, %v189
  %v3162 = vpack.c.bf16 %v396, %v396
  %v3163 = vpack.c.bf16 %v398, %v398
  %v3164 = vpack.c.bf16 %v444, %v444
  %v3165 = vpack.c.bf16 %v446, %v446
  %v3166 = vpack.c.bf16 %v492, %v492
  %v3167 = vpack.c.bf16 %v494, %v494
  %v3170 = vunpack.c.l.b16 %v3040
  %v3171 = vunpack.c.l.b16 %v3041
  %v3172 = vpack.c.b16 %v3171, %v3170
  %v3175 = vunpack.c.l.b16 %v3104
  %v3176 = vunpack.c.l.b16 %v3105
  %v3177 = vpack.c.b16 %v3176, %v3175
  %v3180 = vsel %vm582, %v3172, 0
  %3182 = vmatpush.bf16.msra.mxu0 0
  %3183 = vmatpush.bf16.msra.mxu0 0
  %3184 = vmatpush.bf16.msra.mxu0 0
  %3185 = vmatpush.bf16.msra.mxu0 0
  %3186 = vmatpush.bf16.msra.mxu0 0
  %3187 = vmatpush.bf16.msra.mxu0 0
  %3188 = vmatpush.bf16.msra.mxu0 0
  %3189 = vmatpush.bf16.msra.mxu0 %v3177
  %3190 = vmatmul.bf16.gmra.mxu0 %v3180
  %v3191 = vpop.f32.mrf.mxu0
  %v3192 = vadd.f32 0.0, %v3191
  %v3193 = vpop.f32.mrf.mxu0
  %v3194 = vadd.f32 0.0, %v3193
  %3195 = vdwg.mxu0
  %v3198 = vunpack.c.l.b16 %v3042
  %v3199 = vunpack.c.l.b16 %v3043
  %v3200 = vpack.c.b16 %v3199, %v3198
  %v3203 = vunpack.c.l.b16 %v3106
  %v3204 = vunpack.c.l.b16 %v3107
  %v3205 = vpack.c.b16 %v3204, %v3203
  %v3208 = vsel %vm582, %v3200, 0
  %3210 = vmatpush.bf16.msra.mxu0 0
  %3211 = vmatpush.bf16.msra.mxu0 0
  %3212 = vmatpush.bf16.msra.mxu0 0
  %3213 = vmatpush.bf16.msra.mxu0 0
  %3214 = vmatpush.bf16.msra.mxu0 0
  %3215 = vmatpush.bf16.msra.mxu0 0
  %3216 = vmatpush.bf16.msra.mxu0 0
  %3217 = vmatpush.bf16.msra.mxu0 %v3205
  %3218 = vmatmul.bf16.gmra.mxu0 %v3208
  %v3219 = vpop.f32.mrf.mxu0
  %v3220 = vadd.f32 0.0, %v3219
  %v3221 = vpop.f32.mrf.mxu0
  %v3222 = vadd.f32 0.0, %v3221
  %3223 = vdwg.mxu0
  %v3226 = vunpack.c.l.b16 %v3044
  %v3227 = vunpack.c.l.b16 %v3045
  %v3228 = vpack.c.b16 %v3227, %v3226
  %v3231 = vunpack.c.l.b16 %v3108
  %v3232 = vunpack.c.l.b16 %v3109
  %v3233 = vpack.c.b16 %v3232, %v3231
  %v3236 = vsel %vm582, %v3228, 0
  %3238 = vmatpush.bf16.msra.mxu0 0
  %3239 = vmatpush.bf16.msra.mxu0 0
  %3240 = vmatpush.bf16.msra.mxu0 0
  %3241 = vmatpush.bf16.msra.mxu0 0
  %3242 = vmatpush.bf16.msra.mxu0 0
  %3243 = vmatpush.bf16.msra.mxu0 0
  %3244 = vmatpush.bf16.msra.mxu0 0
  %3245 = vmatpush.bf16.msra.mxu0 %v3233
  %3246 = vmatmul.bf16.gmra.mxu0 %v3236
  %v3247 = vpop.f32.mrf.mxu0
  %v3248 = vadd.f32 0.0, %v3247
  %v3249 = vpop.f32.mrf.mxu0
  %v3250 = vadd.f32 0.0, %v3249
  %3251 = vdwg.mxu0
  %v3254 = vunpack.c.l.b16 %v3046
  %v3255 = vunpack.c.l.b16 %v3047
  %v3256 = vpack.c.b16 %v3255, %v3254
  %v3259 = vunpack.c.l.b16 %v3110
  %v3260 = vunpack.c.l.b16 %v3111
  %v3261 = vpack.c.b16 %v3260, %v3259
  %v3264 = vsel %vm582, %v3256, 0
  %3266 = vmatpush.bf16.msra.mxu0 0
  %3267 = vmatpush.bf16.msra.mxu0 0
  %3268 = vmatpush.bf16.msra.mxu0 0
  %3269 = vmatpush.bf16.msra.mxu0 0
  %3270 = vmatpush.bf16.msra.mxu0 0
  %3271 = vmatpush.bf16.msra.mxu0 0
  %3272 = vmatpush.bf16.msra.mxu0 0
  %3273 = vmatpush.bf16.msra.mxu0 %v3261
  %3274 = vmatmul.bf16.gmra.mxu0 %v3264
  %v3275 = vpop.f32.mrf.mxu0
  %v3276 = vadd.f32 0.0, %v3275
  %v3277 = vpop.f32.mrf.mxu0
  %v3278 = vadd.f32 0.0, %v3277
  %3279 = vdwg.mxu0
  %v3282 = vunpack.c.l.b16 %v3048
  %v3283 = vunpack.c.l.b16 %v3049
  %v3284 = vpack.c.b16 %v3283, %v3282
  %v3287 = vunpack.c.l.b16 %v3112
  %v3288 = vunpack.c.l.b16 %v3113
  %v3289 = vpack.c.b16 %v3288, %v3287
  %v3292 = vsel %vm582, %v3284, 0
  %3294 = vmatpush.bf16.msra.mxu0 0
  %3295 = vmatpush.bf16.msra.mxu0 0
  %3296 = vmatpush.bf16.msra.mxu0 0
  %3297 = vmatpush.bf16.msra.mxu0 0
  %3298 = vmatpush.bf16.msra.mxu0 0
  %3299 = vmatpush.bf16.msra.mxu0 0
  %3300 = vmatpush.bf16.msra.mxu0 0
  %3301 = vmatpush.bf16.msra.mxu0 %v3289
  %3302 = vmatmul.bf16.gmra.mxu0 %v3292
  %v3303 = vpop.f32.mrf.mxu0
  %v3304 = vadd.f32 0.0, %v3303
  %v3305 = vpop.f32.mrf.mxu0
  %v3306 = vadd.f32 0.0, %v3305
  %3307 = vdwg.mxu0
  %v3310 = vunpack.c.l.b16 %v3050
  %v3311 = vunpack.c.l.b16 %v3051
  %v3312 = vpack.c.b16 %v3311, %v3310
  %v3315 = vunpack.c.l.b16 %v3114
  %v3316 = vunpack.c.l.b16 %v3115
  %v3317 = vpack.c.b16 %v3316, %v3315
  %v3320 = vsel %vm582, %v3312, 0
  %3322 = vmatpush.bf16.msra.mxu0 0
  %3323 = vmatpush.bf16.msra.mxu0 0
  %3324 = vmatpush.bf16.msra.mxu0 0
  %3325 = vmatpush.bf16.msra.mxu0 0
  %3326 = vmatpush.bf16.msra.mxu0 0
  %3327 = vmatpush.bf16.msra.mxu0 0
  %3328 = vmatpush.bf16.msra.mxu0 0
  %3329 = vmatpush.bf16.msra.mxu0 %v3317
  %3330 = vmatmul.bf16.gmra.mxu0 %v3320
  %v3331 = vpop.f32.mrf.mxu0
  %v3332 = vadd.f32 0.0, %v3331
  %v3333 = vpop.f32.mrf.mxu0
  %v3334 = vadd.f32 0.0, %v3333
  %3335 = vdwg.mxu0
  %v3338 = vunpack.c.l.b16 %v3052
  %v3339 = vunpack.c.l.b16 %v3053
  %v3340 = vpack.c.b16 %v3339, %v3338
  %v3343 = vunpack.c.l.b16 %v3116
  %v3344 = vunpack.c.l.b16 %v3117
  %v3345 = vpack.c.b16 %v3344, %v3343
  %v3348 = vsel %vm582, %v3340, 0
  %3350 = vmatpush.bf16.msra.mxu0 0
  %3351 = vmatpush.bf16.msra.mxu0 0
  %3352 = vmatpush.bf16.msra.mxu0 0
  %3353 = vmatpush.bf16.msra.mxu0 0
  %3354 = vmatpush.bf16.msra.mxu0 0
  %3355 = vmatpush.bf16.msra.mxu0 0
  %3356 = vmatpush.bf16.msra.mxu0 0
  %3357 = vmatpush.bf16.msra.mxu0 %v3345
  %3358 = vmatmul.bf16.gmra.mxu0 %v3348
  %v3359 = vpop.f32.mrf.mxu0
  %v3360 = vadd.f32 0.0, %v3359
  %v3361 = vpop.f32.mrf.mxu0
  %v3362 = vadd.f32 0.0, %v3361
  %3363 = vdwg.mxu0
  %v3366 = vunpack.c.l.b16 %v3054
  %v3367 = vunpack.c.l.b16 %v3055
  %v3368 = vpack.c.b16 %v3367, %v3366
  %v3371 = vunpack.c.l.b16 %v3118
  %v3372 = vunpack.c.l.b16 %v3119
  %v3373 = vpack.c.b16 %v3372, %v3371
  %v3376 = vsel %vm582, %v3368, 0
  %3378 = vmatpush.bf16.msra.mxu0 0
  %3379 = vmatpush.bf16.msra.mxu0 0
  %3380 = vmatpush.bf16.msra.mxu0 0
  %3381 = vmatpush.bf16.msra.mxu0 0
  %3382 = vmatpush.bf16.msra.mxu0 0
  %3383 = vmatpush.bf16.msra.mxu0 0
  %3384 = vmatpush.bf16.msra.mxu0 0
  %3385 = vmatpush.bf16.msra.mxu0 %v3373
  %3386 = vmatmul.bf16.gmra.mxu0 %v3376
  %v3387 = vpop.f32.mrf.mxu0
  %v3388 = vadd.f32 0.0, %v3387
  %v3389 = vpop.f32.mrf.mxu0
  %v3390 = vadd.f32 0.0, %v3389
  %3391 = vdwg.mxu0
  %v3394 = vunpack.c.l.b16 %v3056
  %v3395 = vunpack.c.l.b16 %v3057
  %v3396 = vpack.c.b16 %v3395, %v3394
  %v3399 = vunpack.c.l.b16 %v3120
  %v3400 = vunpack.c.l.b16 %v3121
  %v3401 = vpack.c.b16 %v3400, %v3399
  %v3404 = vsel %vm582, %v3396, 0
  %3406 = vmatpush.bf16.msra.mxu0 0
  %3407 = vmatpush.bf16.msra.mxu0 0
  %3408 = vmatpush.bf16.msra.mxu0 0
  %3409 = vmatpush.bf16.msra.mxu0 0
  %3410 = vmatpush.bf16.msra.mxu0 0
  %3411 = vmatpush.bf16.msra.mxu0 0
  %3412 = vmatpush.bf16.msra.mxu0 0
  %3413 = vmatpush.bf16.msra.mxu0 %v3401
  %3414 = vmatmul.bf16.gmra.mxu0 %v3404
  %v3415 = vpop.f32.mrf.mxu0
  %v3416 = vadd.f32 0.0, %v3415
  %v3417 = vpop.f32.mrf.mxu0
  %v3418 = vadd.f32 0.0, %v3417
  %3419 = vdwg.mxu0
  %v3422 = vunpack.c.l.b16 %v3058
  %v3423 = vunpack.c.l.b16 %v3059
  %v3424 = vpack.c.b16 %v3423, %v3422
  %v3427 = vunpack.c.l.b16 %v3122
  %v3428 = vunpack.c.l.b16 %v3123
  %v3429 = vpack.c.b16 %v3428, %v3427
  %v3432 = vsel %vm582, %v3424, 0
  %3434 = vmatpush.bf16.msra.mxu0 0
  %3435 = vmatpush.bf16.msra.mxu0 0
  %3436 = vmatpush.bf16.msra.mxu0 0
  %3437 = vmatpush.bf16.msra.mxu0 0
  %3438 = vmatpush.bf16.msra.mxu0 0
  %3439 = vmatpush.bf16.msra.mxu0 0
  %3440 = vmatpush.bf16.msra.mxu0 0
  %3441 = vmatpush.bf16.msra.mxu0 %v3429
  %3442 = vmatmul.bf16.gmra.mxu0 %v3432
  %v3443 = vpop.f32.mrf.mxu0
  %v3444 = vadd.f32 0.0, %v3443
  %v3445 = vpop.f32.mrf.mxu0
  %v3446 = vadd.f32 0.0, %v3445
  %3447 = vdwg.mxu0
  %v3450 = vunpack.c.l.b16 %v3060
  %v3451 = vunpack.c.l.b16 %v3061
  %v3452 = vpack.c.b16 %v3451, %v3450
  %v3455 = vunpack.c.l.b16 %v3124
  %v3456 = vunpack.c.l.b16 %v3125
  %v3457 = vpack.c.b16 %v3456, %v3455
  %v3460 = vsel %vm582, %v3452, 0
  %3462 = vmatpush.bf16.msra.mxu0 0
  %3463 = vmatpush.bf16.msra.mxu0 0
  %3464 = vmatpush.bf16.msra.mxu0 0
  %3465 = vmatpush.bf16.msra.mxu0 0
  %3466 = vmatpush.bf16.msra.mxu0 0
  %3467 = vmatpush.bf16.msra.mxu0 0
  %3468 = vmatpush.bf16.msra.mxu0 0
  %3469 = vmatpush.bf16.msra.mxu0 %v3457
  %3470 = vmatmul.bf16.gmra.mxu0 %v3460
  %v3471 = vpop.f32.mrf.mxu0
  %v3472 = vadd.f32 0.0, %v3471
  %v3473 = vpop.f32.mrf.mxu0
  %v3474 = vadd.f32 0.0, %v3473
  %3475 = vdwg.mxu0
  %v3478 = vunpack.c.l.b16 %v3062
  %v3479 = vunpack.c.l.b16 %v3063
  %v3480 = vpack.c.b16 %v3479, %v3478
  %v3483 = vunpack.c.l.b16 %v3126
  %v3484 = vunpack.c.l.b16 %v3127
  %v3485 = vpack.c.b16 %v3484, %v3483
  %v3488 = vsel %vm582, %v3480, 0
  %3490 = vmatpush.bf16.msra.mxu0 0
  %3491 = vmatpush.bf16.msra.mxu0 0
  %3492 = vmatpush.bf16.msra.mxu0 0
  %3493 = vmatpush.bf16.msra.mxu0 0
  %3494 = vmatpush.bf16.msra.mxu0 0
  %3495 = vmatpush.bf16.msra.mxu0 0
  %3496 = vmatpush.bf16.msra.mxu0 0
  %3497 = vmatpush.bf16.msra.mxu0 %v3485
  %3498 = vmatmul.bf16.gmra.mxu0 %v3488
  %v3499 = vpop.f32.mrf.mxu0
  %v3500 = vadd.f32 0.0, %v3499
  %v3501 = vpop.f32.mrf.mxu0
  %v3502 = vadd.f32 0.0, %v3501
  %3503 = vdwg.mxu0
  %v3506 = vunpack.c.l.b16 %v3064
  %v3507 = vunpack.c.l.b16 %v3065
  %v3508 = vpack.c.b16 %v3507, %v3506
  %v3511 = vunpack.c.l.b16 %v3128
  %v3512 = vunpack.c.l.b16 %v3129
  %v3513 = vpack.c.b16 %v3512, %v3511
  %v3516 = vsel %vm582, %v3508, 0
  %3518 = vmatpush.bf16.msra.mxu0 0
  %3519 = vmatpush.bf16.msra.mxu0 0
  %3520 = vmatpush.bf16.msra.mxu0 0
  %3521 = vmatpush.bf16.msra.mxu0 0
  %3522 = vmatpush.bf16.msra.mxu0 0
  %3523 = vmatpush.bf16.msra.mxu0 0
  %3524 = vmatpush.bf16.msra.mxu0 0
  %3525 = vmatpush.bf16.msra.mxu0 %v3513
  %3526 = vmatmul.bf16.gmra.mxu0 %v3516
  %v3527 = vpop.f32.mrf.mxu0
  %v3528 = vadd.f32 0.0, %v3527
  %v3529 = vpop.f32.mrf.mxu0
  %v3530 = vadd.f32 0.0, %v3529
  %3531 = vdwg.mxu0
  %v3534 = vunpack.c.l.b16 %v3066
  %v3535 = vunpack.c.l.b16 %v3067
  %v3536 = vpack.c.b16 %v3535, %v3534
  %v3539 = vunpack.c.l.b16 %v3130
  %v3540 = vunpack.c.l.b16 %v3131
  %v3541 = vpack.c.b16 %v3540, %v3539
  %v3544 = vsel %vm582, %v3536, 0
  %3546 = vmatpush.bf16.msra.mxu0 0
  %3547 = vmatpush.bf16.msra.mxu0 0
  %3548 = vmatpush.bf16.msra.mxu0 0
  %3549 = vmatpush.bf16.msra.mxu0 0
  %3550 = vmatpush.bf16.msra.mxu0 0
  %3551 = vmatpush.bf16.msra.mxu0 0
  %3552 = vmatpush.bf16.msra.mxu0 0
  %3553 = vmatpush.bf16.msra.mxu0 %v3541
  %3554 = vmatmul.bf16.gmra.mxu0 %v3544
  %v3555 = vpop.f32.mrf.mxu0
  %v3556 = vadd.f32 0.0, %v3555
  %v3557 = vpop.f32.mrf.mxu0
  %v3558 = vadd.f32 0.0, %v3557
  %3559 = vdwg.mxu0
  %v3562 = vunpack.c.l.b16 %v3068
  %v3563 = vunpack.c.l.b16 %v3069
  %v3564 = vpack.c.b16 %v3563, %v3562
  %v3567 = vunpack.c.l.b16 %v3132
  %v3568 = vunpack.c.l.b16 %v3133
  %v3569 = vpack.c.b16 %v3568, %v3567
  %v3572 = vsel %vm582, %v3564, 0
  %3574 = vmatpush.bf16.msra.mxu0 0
  %3575 = vmatpush.bf16.msra.mxu0 0
  %3576 = vmatpush.bf16.msra.mxu0 0
  %3577 = vmatpush.bf16.msra.mxu0 0
  %3578 = vmatpush.bf16.msra.mxu0 0
  %3579 = vmatpush.bf16.msra.mxu0 0
  %3580 = vmatpush.bf16.msra.mxu0 0
  %3581 = vmatpush.bf16.msra.mxu0 %v3569
  %3582 = vmatmul.bf16.gmra.mxu0 %v3572
  %v3583 = vpop.f32.mrf.mxu0
  %v3584 = vadd.f32 0.0, %v3583
  %v3585 = vpop.f32.mrf.mxu0
  %v3586 = vadd.f32 0.0, %v3585
  %3587 = vdwg.mxu0
  %v3590 = vunpack.c.l.b16 %v3070
  %v3591 = vunpack.c.l.b16 %v3071
  %v3592 = vpack.c.b16 %v3591, %v3590
  %v3595 = vunpack.c.l.b16 %v3134
  %v3596 = vunpack.c.l.b16 %v3135
  %v3597 = vpack.c.b16 %v3596, %v3595
  %v3600 = vsel %vm582, %v3592, 0
  %3602 = vmatpush.bf16.msra.mxu0 0
  %3603 = vmatpush.bf16.msra.mxu0 0
  %3604 = vmatpush.bf16.msra.mxu0 0
  %3605 = vmatpush.bf16.msra.mxu0 0
  %3606 = vmatpush.bf16.msra.mxu0 0
  %3607 = vmatpush.bf16.msra.mxu0 0
  %3608 = vmatpush.bf16.msra.mxu0 0
  %3609 = vmatpush.bf16.msra.mxu0 %v3597
  %3610 = vmatmul.bf16.gmra.mxu0 %v3600
  %v3611 = vpop.f32.mrf.mxu0
  %v3612 = vadd.f32 0.0, %v3611
  %v3613 = vpop.f32.mrf.mxu0
  %v3614 = vadd.f32 0.0, %v3613
  %3615 = vdwg.mxu0
  %v3618 = vunpack.c.l.b16 %v3072
  %v3619 = vunpack.c.l.b16 %v3073
  %v3620 = vpack.c.b16 %v3619, %v3618
  %v3623 = vunpack.c.l.b16 %v3136
  %v3624 = vunpack.c.l.b16 %v3137
  %v3625 = vpack.c.b16 %v3624, %v3623
  %v3628 = vsel %vm582, %v3620, 0
  %3630 = vmatpush.bf16.msra.mxu0 0
  %3631 = vmatpush.bf16.msra.mxu0 0
  %3632 = vmatpush.bf16.msra.mxu0 0
  %3633 = vmatpush.bf16.msra.mxu0 0
  %3634 = vmatpush.bf16.msra.mxu0 0
  %3635 = vmatpush.bf16.msra.mxu0 0
  %3636 = vmatpush.bf16.msra.mxu0 0
  %3637 = vmatpush.bf16.msra.mxu0 %v3625
  %3638 = vmatmul.bf16.gmra.mxu0 %v3628
  %v3639 = vpop.f32.mrf.mxu0
  %v3640 = vadd.f32 0.0, %v3639
  %v3641 = vpop.f32.mrf.mxu0
  %v3642 = vadd.f32 0.0, %v3641
  %3643 = vdwg.mxu0
  %v3646 = vunpack.c.l.b16 %v3074
  %v3647 = vunpack.c.l.b16 %v3075
  %v3648 = vpack.c.b16 %v3647, %v3646
  %v3651 = vunpack.c.l.b16 %v3138
  %v3652 = vunpack.c.l.b16 %v3139
  %v3653 = vpack.c.b16 %v3652, %v3651
  %v3656 = vsel %vm582, %v3648, 0
  %3658 = vmatpush.bf16.msra.mxu0 0
  %3659 = vmatpush.bf16.msra.mxu0 0
  %3660 = vmatpush.bf16.msra.mxu0 0
  %3661 = vmatpush.bf16.msra.mxu0 0
  %3662 = vmatpush.bf16.msra.mxu0 0
  %3663 = vmatpush.bf16.msra.mxu0 0
  %3664 = vmatpush.bf16.msra.mxu0 0
  %3665 = vmatpush.bf16.msra.mxu0 %v3653
  %3666 = vmatmul.bf16.gmra.mxu0 %v3656
  %v3667 = vpop.f32.mrf.mxu0
  %v3668 = vadd.f32 0.0, %v3667
  %v3669 = vpop.f32.mrf.mxu0
  %v3670 = vadd.f32 0.0, %v3669
  %3671 = vdwg.mxu0
  %v3674 = vunpack.c.l.b16 %v3076
  %v3675 = vunpack.c.l.b16 %v3077
  %v3676 = vpack.c.b16 %v3675, %v3674
  %v3679 = vunpack.c.l.b16 %v3140
  %v3680 = vunpack.c.l.b16 %v3141
  %v3681 = vpack.c.b16 %v3680, %v3679
  %v3684 = vsel %vm582, %v3676, 0
  %3686 = vmatpush.bf16.msra.mxu0 0
  %3687 = vmatpush.bf16.msra.mxu0 0
  %3688 = vmatpush.bf16.msra.mxu0 0
  %3689 = vmatpush.bf16.msra.mxu0 0
  %3690 = vmatpush.bf16.msra.mxu0 0
  %3691 = vmatpush.bf16.msra.mxu0 0
  %3692 = vmatpush.bf16.msra.mxu0 0
  %3693 = vmatpush.bf16.msra.mxu0 %v3681
  %3694 = vmatmul.bf16.gmra.mxu0 %v3684
  %v3695 = vpop.f32.mrf.mxu0
  %v3696 = vadd.f32 0.0, %v3695
  %v3697 = vpop.f32.mrf.mxu0
  %v3698 = vadd.f32 0.0, %v3697
  %3699 = vdwg.mxu0
  %v3702 = vunpack.c.l.b16 %v3078
  %v3703 = vunpack.c.l.b16 %v3079
  %v3704 = vpack.c.b16 %v3703, %v3702
  %v3707 = vunpack.c.l.b16 %v3142
  %v3708 = vunpack.c.l.b16 %v3143
  %v3709 = vpack.c.b16 %v3708, %v3707
  %v3712 = vsel %vm582, %v3704, 0
  %3714 = vmatpush.bf16.msra.mxu0 0
  %3715 = vmatpush.bf16.msra.mxu0 0
  %3716 = vmatpush.bf16.msra.mxu0 0
  %3717 = vmatpush.bf16.msra.mxu0 0
  %3718 = vmatpush.bf16.msra.mxu0 0
  %3719 = vmatpush.bf16.msra.mxu0 0
  %3720 = vmatpush.bf16.msra.mxu0 0
  %3721 = vmatpush.bf16.msra.mxu0 %v3709
  %3722 = vmatmul.bf16.gmra.mxu0 %v3712
  %v3723 = vpop.f32.mrf.mxu0
  %v3724 = vadd.f32 0.0, %v3723
  %v3725 = vpop.f32.mrf.mxu0
  %v3726 = vadd.f32 0.0, %v3725
  %3727 = vdwg.mxu0
  %v3730 = vunpack.c.l.b16 %v3080
  %v3731 = vunpack.c.l.b16 %v3081
  %v3732 = vpack.c.b16 %v3731, %v3730
  %v3735 = vunpack.c.l.b16 %v3144
  %v3736 = vunpack.c.l.b16 %v3145
  %v3737 = vpack.c.b16 %v3736, %v3735
  %v3740 = vsel %vm582, %v3732, 0
  %3742 = vmatpush.bf16.msra.mxu0 0
  %3743 = vmatpush.bf16.msra.mxu0 0
  %3744 = vmatpush.bf16.msra.mxu0 0
  %3745 = vmatpush.bf16.msra.mxu0 0
  %3746 = vmatpush.bf16.msra.mxu0 0
  %3747 = vmatpush.bf16.msra.mxu0 0
  %3748 = vmatpush.bf16.msra.mxu0 0
  %3749 = vmatpush.bf16.msra.mxu0 %v3737
  %3750 = vmatmul.bf16.gmra.mxu0 %v3740
  %v3751 = vpop.f32.mrf.mxu0
  %v3752 = vadd.f32 0.0, %v3751
  %v3753 = vpop.f32.mrf.mxu0
  %v3754 = vadd.f32 0.0, %v3753
  %3755 = vdwg.mxu0
  %v3758 = vunpack.c.l.b16 %v3082
  %v3759 = vunpack.c.l.b16 %v3083
  %v3760 = vpack.c.b16 %v3759, %v3758
  %v3763 = vunpack.c.l.b16 %v3146
  %v3764 = vunpack.c.l.b16 %v3147
  %v3765 = vpack.c.b16 %v3764, %v3763
  %v3768 = vsel %vm582, %v3760, 0
  %3770 = vmatpush.bf16.msra.mxu0 0
  %3771 = vmatpush.bf16.msra.mxu0 0
  %3772 = vmatpush.bf16.msra.mxu0 0
  %3773 = vmatpush.bf16.msra.mxu0 0
  %3774 = vmatpush.bf16.msra.mxu0 0
  %3775 = vmatpush.bf16.msra.mxu0 0
  %3776 = vmatpush.bf16.msra.mxu0 0
  %3777 = vmatpush.bf16.msra.mxu0 %v3765
  %3778 = vmatmul.bf16.gmra.mxu0 %v3768
  %v3779 = vpop.f32.mrf.mxu0
  %v3780 = vadd.f32 0.0, %v3779
  %v3781 = vpop.f32.mrf.mxu0
  %v3782 = vadd.f32 0.0, %v3781
  %3783 = vdwg.mxu0
  %v3786 = vunpack.c.l.b16 %v3084
  %v3787 = vunpack.c.l.b16 %v3085
  %v3788 = vpack.c.b16 %v3787, %v3786
  %v3791 = vunpack.c.l.b16 %v3148
  %v3792 = vunpack.c.l.b16 %v3149
  %v3793 = vpack.c.b16 %v3792, %v3791
  %v3796 = vsel %vm582, %v3788, 0
  %3798 = vmatpush.bf16.msra.mxu0 0
  %3799 = vmatpush.bf16.msra.mxu0 0
  %3800 = vmatpush.bf16.msra.mxu0 0
  %3801 = vmatpush.bf16.msra.mxu0 0
  %3802 = vmatpush.bf16.msra.mxu0 0
  %3803 = vmatpush.bf16.msra.mxu0 0
  %3804 = vmatpush.bf16.msra.mxu0 0
  %3805 = vmatpush.bf16.msra.mxu0 %v3793
  %3806 = vmatmul.bf16.gmra.mxu0 %v3796
  %v3807 = vpop.f32.mrf.mxu0
  %v3808 = vadd.f32 0.0, %v3807
  %v3809 = vpop.f32.mrf.mxu0
  %v3810 = vadd.f32 0.0, %v3809
  %3811 = vdwg.mxu0
  %v3814 = vunpack.c.l.b16 %v3086
  %v3815 = vunpack.c.l.b16 %v3087
  %v3816 = vpack.c.b16 %v3815, %v3814
  %v3819 = vunpack.c.l.b16 %v3150
  %v3820 = vunpack.c.l.b16 %v3151
  %v3821 = vpack.c.b16 %v3820, %v3819
  %v3824 = vsel %vm582, %v3816, 0
  %3826 = vmatpush.bf16.msra.mxu0 0
  %3827 = vmatpush.bf16.msra.mxu0 0
  %3828 = vmatpush.bf16.msra.mxu0 0
  %3829 = vmatpush.bf16.msra.mxu0 0
  %3830 = vmatpush.bf16.msra.mxu0 0
  %3831 = vmatpush.bf16.msra.mxu0 0
  %3832 = vmatpush.bf16.msra.mxu0 0
  %3833 = vmatpush.bf16.msra.mxu0 %v3821
  %3834 = vmatmul.bf16.gmra.mxu0 %v3824
  %v3835 = vpop.f32.mrf.mxu0
  %v3836 = vadd.f32 0.0, %v3835
  %v3837 = vpop.f32.mrf.mxu0
  %v3838 = vadd.f32 0.0, %v3837
  %3839 = vdwg.mxu0
  %v3842 = vunpack.c.l.b16 %v3088
  %v3843 = vunpack.c.l.b16 %v3089
  %v3844 = vpack.c.b16 %v3843, %v3842
  %v3847 = vunpack.c.l.b16 %v3152
  %v3848 = vunpack.c.l.b16 %v3153
  %v3849 = vpack.c.b16 %v3848, %v3847
  %v3852 = vsel %vm582, %v3844, 0
  %3854 = vmatpush.bf16.msra.mxu0 0
  %3855 = vmatpush.bf16.msra.mxu0 0
  %3856 = vmatpush.bf16.msra.mxu0 0
  %3857 = vmatpush.bf16.msra.mxu0 0
  %3858 = vmatpush.bf16.msra.mxu0 0
  %3859 = vmatpush.bf16.msra.mxu0 0
  %3860 = vmatpush.bf16.msra.mxu0 0
  %3861 = vmatpush.bf16.msra.mxu0 %v3849
  %3862 = vmatmul.bf16.gmra.mxu0 %v3852
  %v3863 = vpop.f32.mrf.mxu0
  %v3864 = vadd.f32 0.0, %v3863
  %v3865 = vpop.f32.mrf.mxu0
  %v3866 = vadd.f32 0.0, %v3865
  %3867 = vdwg.mxu0
  %v3870 = vunpack.c.l.b16 %v3090
  %v3871 = vunpack.c.l.b16 %v3091
  %v3872 = vpack.c.b16 %v3871, %v3870
  %v3875 = vunpack.c.l.b16 %v3154
  %v3876 = vunpack.c.l.b16 %v3155
  %v3877 = vpack.c.b16 %v3876, %v3875
  %v3880 = vsel %vm582, %v3872, 0
  %3882 = vmatpush.bf16.msra.mxu0 0
  %3883 = vmatpush.bf16.msra.mxu0 0
  %3884 = vmatpush.bf16.msra.mxu0 0
  %3885 = vmatpush.bf16.msra.mxu0 0
  %3886 = vmatpush.bf16.msra.mxu0 0
  %3887 = vmatpush.bf16.msra.mxu0 0
  %3888 = vmatpush.bf16.msra.mxu0 0
  %3889 = vmatpush.bf16.msra.mxu0 %v3877
  %3890 = vmatmul.bf16.gmra.mxu0 %v3880
  %v3891 = vpop.f32.mrf.mxu0
  %v3892 = vadd.f32 0.0, %v3891
  %v3893 = vpop.f32.mrf.mxu0
  %v3894 = vadd.f32 0.0, %v3893
  %3895 = vdwg.mxu0
  %v3898 = vunpack.c.l.b16 %v3092
  %v3899 = vunpack.c.l.b16 %v3093
  %v3900 = vpack.c.b16 %v3899, %v3898
  %v3903 = vunpack.c.l.b16 %v3156
  %v3904 = vunpack.c.l.b16 %v3157
  %v3905 = vpack.c.b16 %v3904, %v3903
  %v3908 = vsel %vm582, %v3900, 0
  %3910 = vmatpush.bf16.msra.mxu0 0
  %3911 = vmatpush.bf16.msra.mxu0 0
  %3912 = vmatpush.bf16.msra.mxu0 0
  %3913 = vmatpush.bf16.msra.mxu0 0
  %3914 = vmatpush.bf16.msra.mxu0 0
  %3915 = vmatpush.bf16.msra.mxu0 0
  %3916 = vmatpush.bf16.msra.mxu0 0
  %3917 = vmatpush.bf16.msra.mxu0 %v3905
  %3918 = vmatmul.bf16.gmra.mxu0 %v3908
  %v3919 = vpop.f32.mrf.mxu0
  %v3920 = vadd.f32 0.0, %v3919
  %v3921 = vpop.f32.mrf.mxu0
  %v3922 = vadd.f32 0.0, %v3921
  %3923 = vdwg.mxu0
  %v3926 = vunpack.c.l.b16 %v3094
  %v3927 = vunpack.c.l.b16 %v3095
  %v3928 = vpack.c.b16 %v3927, %v3926
  %v3931 = vunpack.c.l.b16 %v3158
  %v3932 = vunpack.c.l.b16 %v3159
  %v3933 = vpack.c.b16 %v3932, %v3931
  %v3936 = vsel %vm582, %v3928, 0
  %3938 = vmatpush.bf16.msra.mxu0 0
  %3939 = vmatpush.bf16.msra.mxu0 0
  %3940 = vmatpush.bf16.msra.mxu0 0
  %3941 = vmatpush.bf16.msra.mxu0 0
  %3942 = vmatpush.bf16.msra.mxu0 0
  %3943 = vmatpush.bf16.msra.mxu0 0
  %3944 = vmatpush.bf16.msra.mxu0 0
  %3945 = vmatpush.bf16.msra.mxu0 %v3933
  %3946 = vmatmul.bf16.gmra.mxu0 %v3936
  %v3947 = vpop.f32.mrf.mxu0
  %v3948 = vadd.f32 0.0, %v3947
  %v3949 = vpop.f32.mrf.mxu0
  %v3950 = vadd.f32 0.0, %v3949
  %3951 = vdwg.mxu0
  %v3954 = vunpack.c.l.b16 %v3096
  %v3955 = vunpack.c.l.b16 %v3097
  %v3956 = vpack.c.b16 %v3955, %v3954
  %v3959 = vunpack.c.l.b16 %v3160
  %v3960 = vunpack.c.l.b16 %v3161
  %v3961 = vpack.c.b16 %v3960, %v3959
  %v3964 = vsel %vm582, %v3956, 0
  %3966 = vmatpush.bf16.msra.mxu0 0
  %3967 = vmatpush.bf16.msra.mxu0 0
  %3968 = vmatpush.bf16.msra.mxu0 0
  %3969 = vmatpush.bf16.msra.mxu0 0
  %3970 = vmatpush.bf16.msra.mxu0 0
  %3971 = vmatpush.bf16.msra.mxu0 0
  %3972 = vmatpush.bf16.msra.mxu0 0
  %3973 = vmatpush.bf16.msra.mxu0 %v3961
  %3974 = vmatmul.bf16.gmra.mxu0 %v3964
  %v3975 = vpop.f32.mrf.mxu0
  %v3976 = vadd.f32 0.0, %v3975
  %v3977 = vpop.f32.mrf.mxu0
  %v3978 = vadd.f32 0.0, %v3977
  %3979 = vdwg.mxu0
  %v3982 = vunpack.c.l.b16 %v3098
  %v3983 = vunpack.c.l.b16 %v3099
  %v3984 = vpack.c.b16 %v3983, %v3982
  %v3987 = vunpack.c.l.b16 %v3162
  %v3988 = vunpack.c.l.b16 %v3163
  %v3989 = vpack.c.b16 %v3988, %v3987
  %v3992 = vsel %vm582, %v3984, 0
  %3994 = vmatpush.bf16.msra.mxu0 0
  %3995 = vmatpush.bf16.msra.mxu0 0
  %3996 = vmatpush.bf16.msra.mxu0 0
  %3997 = vmatpush.bf16.msra.mxu0 0
  %3998 = vmatpush.bf16.msra.mxu0 0
  %3999 = vmatpush.bf16.msra.mxu0 0
  %4000 = vmatpush.bf16.msra.mxu0 0
  %4001 = vmatpush.bf16.msra.mxu0 %v3989
  %4002 = vmatmul.bf16.gmra.mxu0 %v3992
  %v4003 = vpop.f32.mrf.mxu0
  %v4004 = vadd.f32 0.0, %v4003
  %v4005 = vpop.f32.mrf.mxu0
  %v4006 = vadd.f32 0.0, %v4005
  %4007 = vdwg.mxu0
  %v4010 = vunpack.c.l.b16 %v3100
  %v4011 = vunpack.c.l.b16 %v3101
  %v4012 = vpack.c.b16 %v4011, %v4010
  %v4015 = vunpack.c.l.b16 %v3164
  %v4016 = vunpack.c.l.b16 %v3165
  %v4017 = vpack.c.b16 %v4016, %v4015
  %v4020 = vsel %vm582, %v4012, 0
  %4022 = vmatpush.bf16.msra.mxu0 0
  %4023 = vmatpush.bf16.msra.mxu0 0
  %4024 = vmatpush.bf16.msra.mxu0 0
  %4025 = vmatpush.bf16.msra.mxu0 0
  %4026 = vmatpush.bf16.msra.mxu0 0
  %4027 = vmatpush.bf16.msra.mxu0 0
  %4028 = vmatpush.bf16.msra.mxu0 0
  %4029 = vmatpush.bf16.msra.mxu0 %v4017
  %4030 = vmatmul.bf16.gmra.mxu0 %v4020
  %v4031 = vpop.f32.mrf.mxu0
  %v4032 = vadd.f32 0.0, %v4031
  %v4033 = vpop.f32.mrf.mxu0
  %v4034 = vadd.f32 0.0, %v4033
  %4035 = vdwg.mxu0
  %v4038 = vunpack.c.l.b16 %v3102
  %v4039 = vunpack.c.l.b16 %v3103
  %v4040 = vpack.c.b16 %v4039, %v4038
  %v4043 = vunpack.c.l.b16 %v3166
  %v4044 = vunpack.c.l.b16 %v3167
  %v4045 = vpack.c.b16 %v4044, %v4043
  %v4048 = vsel %vm582, %v4040, 0
  %4050 = vmatpush.bf16.msra.mxu0 0
  %4051 = vmatpush.bf16.msra.mxu0 0
  %4052 = vmatpush.bf16.msra.mxu0 0
  %4053 = vmatpush.bf16.msra.mxu0 0
  %4054 = vmatpush.bf16.msra.mxu0 0
  %4055 = vmatpush.bf16.msra.mxu0 0
  %4056 = vmatpush.bf16.msra.mxu0 0
  %4057 = vmatpush.bf16.msra.mxu0 %v4045
  %4058 = vmatmul.bf16.gmra.mxu0 %v4048
  %v4059 = vpop.f32.mrf.mxu0
  %v4060 = vadd.f32 0.0, %v4059
  %v4061 = vpop.f32.mrf.mxu0
  %v4062 = vadd.f32 0.0, %v4061
  %4063 = vdwg.mxu0
  %v4064 = vpack.c.bf16 %v3194, %v3192
  %v4065 = vpack.c.bf16 %v3306, %v3304
  %v4066 = vpack.c.bf16 %v3418, %v3416
  %v4067 = vpack.c.bf16 %v3530, %v3528
  %v4068 = vpack.c.bf16 %v3642, %v3640
  %v4069 = vpack.c.bf16 %v3754, %v3752
  %v4070 = vpack.c.bf16 %v3866, %v3864
  %v4071 = vpack.c.bf16 %v3978, %v3976
  %v4072 = vld [vmem:[%s2] sm:$0xf]
  %v4073 = vld [vmem:[%s2 + $0x4] sm:$0xf]
  %v4074 = vpack.c.bf16 %v3222, %v3220
  %v4075 = vpack.c.bf16 %v3334, %v3332
  %v4076 = vpack.c.bf16 %v3446, %v3444
  %v4077 = vpack.c.bf16 %v3558, %v3556
  %v4078 = vpack.c.bf16 %v3670, %v3668
  %v4079 = vpack.c.bf16 %v3782, %v3780
  %v4080 = vpack.c.bf16 %v3894, %v3892
  %v4081 = vpack.c.bf16 %v4006, %v4004
  %s4082 = scalar_lea.vmem %s2, 8
  %v4083 = vld [vmem:[%s4082] sm:$0xf]
  %v4084 = vld [vmem:[%s4082 + $0x4] sm:$0xf]
  %v4087 = vunpack.c.l.b16 %v4083
  %v4088 = vunpack.c.l.b16 %v4084
  %v4089 = vpack.c.b16 %v4088, %v4087
  %v4092 = vsel %vm582, %v4074, 0
  %v4095 = vsel %vm582, %v4075, 0
  %v4098 = vsel %vm582, %v4076, 0
  %v4101 = vsel %vm582, %v4077, 0
  %v4104 = vsel %vm582, %v4078, 0
  %v4107 = vsel %vm582, %v4079, 0
  %v4110 = vsel %vm582, %v4080, 0
  %v4113 = vsel %vm582, %v4081, 0
  %4115 = vmatpush.bf16.msra.mxu0 0
  %4116 = vmatpush.bf16.msra.mxu0 0
  %4117 = vmatpush.bf16.msra.mxu0 0
  %4118 = vmatpush.bf16.msra.mxu0 0
  %4119 = vmatpush.bf16.msra.mxu0 0
  %4120 = vmatpush.bf16.msra.mxu0 0
  %4121 = vmatpush.bf16.msra.mxu0 0
  %4122 = vmatpush.bf16.msra.mxu0 %v4089
  %4123 = vmatmul.bf16.gmra.mxu0 %v4092
  %v4124 = vpop.f32.mrf.mxu0
  %v4125 = vadd.f32 0.0, %v4124
  %v4126 = vpop.f32.mrf.mxu0
  %v4127 = vadd.f32 0.0, %v4126
  %4128 = vmatmul.bf16.gmra.mxu0 %v4095
  %v4129 = vpop.f32.mrf.mxu0
  %v4130 = vadd.f32 0.0, %v4129
  %v4131 = vpop.f32.mrf.mxu0
  %v4132 = vadd.f32 0.0, %v4131
  %4133 = vmatmul.bf16.gmra.mxu0 %v4098
  %v4134 = vpop.f32.mrf.mxu0
  %v4135 = vadd.f32 0.0, %v4134
  %v4136 = vpop.f32.mrf.mxu0
  %v4137 = vadd.f32 0.0, %v4136
  %4138 = vmatmul.bf16.gmra.mxu0 %v4101
  %v4139 = vpop.f32.mrf.mxu0
  %v4140 = vadd.f32 0.0, %v4139
  %v4141 = vpop.f32.mrf.mxu0
  %v4142 = vadd.f32 0.0, %v4141
  %4143 = vmatmul.bf16.gmra.mxu0 %v4104
  %v4144 = vpop.f32.mrf.mxu0
  %v4145 = vadd.f32 0.0, %v4144
  %v4146 = vpop.f32.mrf.mxu0
  %v4147 = vadd.f32 0.0, %v4146
  %4148 = vmatmul.bf16.gmra.mxu0 %v4107
  %v4149 = vpop.f32.mrf.mxu0
  %v4150 = vadd.f32 0.0, %v4149
  %v4151 = vpop.f32.mrf.mxu0
  %v4152 = vadd.f32 0.0, %v4151
  %4153 = vmatmul.bf16.gmra.mxu0 %v4110
  %v4154 = vpop.f32.mrf.mxu0
  %v4155 = vadd.f32 0.0, %v4154
  %v4156 = vpop.f32.mrf.mxu0
  %v4157 = vadd.f32 0.0, %v4156
  %4158 = vmatmul.bf16.gmra.mxu0 %v4113
  %v4159 = vpop.f32.mrf.mxu0
  %v4160 = vadd.f32 0.0, %v4159
  %v4161 = vpop.f32.mrf.mxu0
  %v4162 = vadd.f32 0.0, %v4161
  %4163 = vdwg.mxu0
  %v4166 = vunpack.c.l.b16 %v4072
  %v4167 = vunpack.c.l.b16 %v4073
  %v4168 = vpack.c.b16 %v4167, %v4166
  %v4171 = vsel %vm582, %v4064, 0
  %v4174 = vsel %vm582, %v4065, 0
  %v4177 = vsel %vm582, %v4066, 0
  %v4180 = vsel %vm582, %v4067, 0
  %v4183 = vsel %vm582, %v4068, 0
  %v4186 = vsel %vm582, %v4069, 0
  %v4189 = vsel %vm582, %v4070, 0
  %v4192 = vsel %vm582, %v4071, 0
  %4194 = vmatpush.bf16.msra.mxu0 0
  %4195 = vmatpush.bf16.msra.mxu0 0
  %4196 = vmatpush.bf16.msra.mxu0 0
  %4197 = vmatpush.bf16.msra.mxu0 0
  %4198 = vmatpush.bf16.msra.mxu0 0
  %4199 = vmatpush.bf16.msra.mxu0 0
  %4200 = vmatpush.bf16.msra.mxu0 0
  %4201 = vmatpush.bf16.msra.mxu0 %v4168
  %4202 = vmatmul.bf16.gmra.mxu0 %v4171
  %v4203 = vpop.f32.mrf.mxu0
  %v4204 = vadd.f32 %v4125, %v4203
  %v4205 = vpop.f32.mrf.mxu0
  %v4206 = vadd.f32 %v4127, %v4205
  %4207 = vmatmul.bf16.gmra.mxu0 %v4174
  %v4208 = vpop.f32.mrf.mxu0
  %v4209 = vadd.f32 %v4130, %v4208
  %v4210 = vpop.f32.mrf.mxu0
  %v4211 = vadd.f32 %v4132, %v4210
  %4212 = vmatmul.bf16.gmra.mxu0 %v4177
  %v4213 = vpop.f32.mrf.mxu0
  %v4214 = vadd.f32 %v4135, %v4213
  %v4215 = vpop.f32.mrf.mxu0
  %v4216 = vadd.f32 %v4137, %v4215
  %4217 = vmatmul.bf16.gmra.mxu0 %v4180
  %v4218 = vpop.f32.mrf.mxu0
  %v4219 = vadd.f32 %v4140, %v4218
  %v4220 = vpop.f32.mrf.mxu0
  %v4221 = vadd.f32 %v4142, %v4220
  %4222 = vmatmul.bf16.gmra.mxu0 %v4183
  %v4223 = vpop.f32.mrf.mxu0
  %v4224 = vadd.f32 %v4145, %v4223
  %v4225 = vpop.f32.mrf.mxu0
  %v4226 = vadd.f32 %v4147, %v4225
  %4227 = vmatmul.bf16.gmra.mxu0 %v4186
  %v4228 = vpop.f32.mrf.mxu0
  %v4229 = vadd.f32 %v4150, %v4228
  %v4230 = vpop.f32.mrf.mxu0
  %v4231 = vadd.f32 %v4152, %v4230
  %4232 = vmatmul.bf16.gmra.mxu0 %v4189
  %v4233 = vpop.f32.mrf.mxu0
  %v4234 = vadd.f32 %v4155, %v4233
  %v4235 = vpop.f32.mrf.mxu0
  %v4236 = vadd.f32 %v4157, %v4235
  %4237 = vmatmul.bf16.gmra.mxu0 %v4192
  %v4238 = vpop.f32.mrf.mxu0
  %v4239 = vadd.f32 %v4160, %v4238
  %v4240 = vpop.f32.mrf.mxu0
  %v4241 = vadd.f32 %v4162, %v4240
  %4242 = vdwg.mxu0
  %v4243 = vpack.c.bf16 %v3250, %v3248
  %v4244 = vpack.c.bf16 %v3362, %v3360
  %v4245 = vpack.c.bf16 %v3474, %v3472
  %v4246 = vpack.c.bf16 %v3586, %v3584
  %v4247 = vpack.c.bf16 %v3698, %v3696
  %v4248 = vpack.c.bf16 %v3810, %v3808
  %v4249 = vpack.c.bf16 %v3922, %v3920
  %v4250 = vpack.c.bf16 %v4034, %v4032
  %s4251 = scalar_lea.vmem %s2, 16
  %v4252 = vld [vmem:[%s4251] sm:$0xf]
  %v4253 = vld [vmem:[%s4251 + $0x4] sm:$0xf]
  %v4256 = vunpack.c.l.b16 %v4252
  %v4257 = vunpack.c.l.b16 %v4253
  %v4258 = vpack.c.b16 %v4257, %v4256
  %v4261 = vsel %vm582, %v4243, 0
  %v4264 = vsel %vm582, %v4244, 0
  %v4267 = vsel %vm582, %v4245, 0
  %v4270 = vsel %vm582, %v4246, 0
  %v4273 = vsel %vm582, %v4247, 0
  %v4276 = vsel %vm582, %v4248, 0
  %v4279 = vsel %vm582, %v4249, 0
  %v4282 = vsel %vm582, %v4250, 0
  %4284 = vmatpush.bf16.msra.mxu0 0
  %4285 = vmatpush.bf16.msra.mxu0 0
  %4286 = vmatpush.bf16.msra.mxu0 0
  %4287 = vmatpush.bf16.msra.mxu0 0
  %4288 = vmatpush.bf16.msra.mxu0 0
  %4289 = vmatpush.bf16.msra.mxu0 0
  %4290 = vmatpush.bf16.msra.mxu0 0
  %4291 = vmatpush.bf16.msra.mxu0 %v4258
  %4292 = vmatmul.bf16.gmra.mxu0 %v4261
  %v4293 = vpop.f32.mrf.mxu0
  %v4294 = vadd.f32 0.0, %v4293
  %v4295 = vpop.f32.mrf.mxu0
  %v4296 = vadd.f32 0.0, %v4295
  %4297 = vmatmul.bf16.gmra.mxu0 %v4264
  %v4298 = vpop.f32.mrf.mxu0
  %v4299 = vadd.f32 0.0, %v4298
  %v4300 = vpop.f32.mrf.mxu0
  %v4301 = vadd.f32 0.0, %v4300
  %4302 = vmatmul.bf16.gmra.mxu0 %v4267
  %v4303 = vpop.f32.mrf.mxu0
  %v4304 = vadd.f32 0.0, %v4303
  %v4305 = vpop.f32.mrf.mxu0
  %v4306 = vadd.f32 0.0, %v4305
  %4307 = vmatmul.bf16.gmra.mxu0 %v4270
  %v4308 = vpop.f32.mrf.mxu0
  %v4309 = vadd.f32 0.0, %v4308
  %v4310 = vpop.f32.mrf.mxu0
  %v4311 = vadd.f32 0.0, %v4310
  %4312 = vmatmul.bf16.gmra.mxu0 %v4273
  %v4313 = vpop.f32.mrf.mxu0
  %v4314 = vadd.f32 0.0, %v4313
  %v4315 = vpop.f32.mrf.mxu0
  %v4316 = vadd.f32 0.0, %v4315
  %4317 = vmatmul.bf16.gmra.mxu0 %v4276
  %v4318 = vpop.f32.mrf.mxu0
  %v4319 = vadd.f32 0.0, %v4318
  %v4320 = vpop.f32.mrf.mxu0
  %v4321 = vadd.f32 0.0, %v4320
  %4322 = vmatmul.bf16.gmra.mxu0 %v4279
  %v4323 = vpop.f32.mrf.mxu0
  %v4324 = vadd.f32 0.0, %v4323
  %v4325 = vpop.f32.mrf.mxu0
  %v4326 = vadd.f32 0.0, %v4325
  %4327 = vmatmul.bf16.gmra.mxu0 %v4282
  %v4328 = vpop.f32.mrf.mxu0
  %v4329 = vadd.f32 0.0, %v4328
  %v4330 = vpop.f32.mrf.mxu0
  %v4331 = vadd.f32 0.0, %v4330
  %4332 = vdwg.mxu0
  %v4333 = vadd.f32 %v4204, %v4294
  %v4334 = vadd.f32 %v4206, %v4296
  %v4335 = vadd.f32 %v4209, %v4299
  %v4336 = vadd.f32 %v4211, %v4301
  %v4337 = vadd.f32 %v4214, %v4304
  %v4338 = vadd.f32 %v4216, %v4306
  %v4339 = vadd.f32 %v4219, %v4309
  %v4340 = vadd.f32 %v4221, %v4311
  %v4341 = vadd.f32 %v4224, %v4314
  %v4342 = vadd.f32 %v4226, %v4316
  %v4343 = vadd.f32 %v4229, %v4319
  %v4344 = vadd.f32 %v4231, %v4321
  %v4345 = vadd.f32 %v4234, %v4324
  %v4346 = vadd.f32 %v4236, %v4326
  %v4347 = vadd.f32 %v4239, %v4329
  %v4348 = vadd.f32 %v4241, %v4331
  %v4349 = vpack.c.bf16 %v3278, %v3276
  %v4350 = vpack.c.bf16 %v3390, %v3388
  %v4351 = vpack.c.bf16 %v3502, %v3500
  %v4352 = vpack.c.bf16 %v3614, %v3612
  %v4353 = vpack.c.bf16 %v3726, %v3724
  %v4354 = vpack.c.bf16 %v3838, %v3836
  %v4355 = vpack.c.bf16 %v3950, %v3948
  %v4356 = vpack.c.bf16 %v4062, %v4060
  %s4357 = scalar_lea.vmem %s2, 24
  %v4358 = vld [vmem:[%s4357] sm:$0xf]
  %v4359 = vld [vmem:[%s4357 + $0x4] sm:$0xf]
  %v4362 = vunpack.c.l.b16 %v4358
  %v4363 = vunpack.c.l.b16 %v4359
  %v4364 = vpack.c.b16 %v4363, %v4362
  %v4367 = vsel %vm582, %v4349, 0
  %v4370 = vsel %vm582, %v4350, 0
  %v4373 = vsel %vm582, %v4351, 0
  %v4376 = vsel %vm582, %v4352, 0
  %v4379 = vsel %vm582, %v4353, 0
  %v4382 = vsel %vm582, %v4354, 0
  %v4385 = vsel %vm582, %v4355, 0
  %v4388 = vsel %vm582, %v4356, 0
  %4390 = vmatpush.bf16.msra.mxu0 0
  %4391 = vmatpush.bf16.msra.mxu0 0
  %4392 = vmatpush.bf16.msra.mxu0 0
  %4393 = vmatpush.bf16.msra.mxu0 0
  %4394 = vmatpush.bf16.msra.mxu0 0
  %4395 = vmatpush.bf16.msra.mxu0 0
  %4396 = vmatpush.bf16.msra.mxu0 0
  %4397 = vmatpush.bf16.msra.mxu0 %v4364
  %4398 = vmatmul.bf16.gmra.mxu0 %v4367
  %v4399 = vpop.f32.mrf.mxu0
  %v4400 = vadd.f32 0.0, %v4399
  %v4401 = vpop.f32.mrf.mxu0
  %v4402 = vadd.f32 0.0, %v4401
  %4403 = vmatmul.bf16.gmra.mxu0 %v4370
  %v4404 = vpop.f32.mrf.mxu0
  %v4405 = vadd.f32 0.0, %v4404
  %v4406 = vpop.f32.mrf.mxu0
  %v4407 = vadd.f32 0.0, %v4406
  %4408 = vmatmul.bf16.gmra.mxu0 %v4373
  %v4409 = vpop.f32.mrf.mxu0
  %v4410 = vadd.f32 0.0, %v4409
  %v4411 = vpop.f32.mrf.mxu0
  %v4412 = vadd.f32 0.0, %v4411
  %4413 = vmatmul.bf16.gmra.mxu0 %v4376
  %v4414 = vpop.f32.mrf.mxu0
  %v4415 = vadd.f32 0.0, %v4414
  %v4416 = vpop.f32.mrf.mxu0
  %v4417 = vadd.f32 0.0, %v4416
  %4418 = vmatmul.bf16.gmra.mxu0 %v4379
  %v4419 = vpop.f32.mrf.mxu0
  %v4420 = vadd.f32 0.0, %v4419
  %v4421 = vpop.f32.mrf.mxu0
  %v4422 = vadd.f32 0.0, %v4421
  %4423 = vmatmul.bf16.gmra.mxu0 %v4382
  %v4424 = vpop.f32.mrf.mxu0
  %v4425 = vadd.f32 0.0, %v4424
  %v4426 = vpop.f32.mrf.mxu0
  %v4427 = vadd.f32 0.0, %v4426
  %4428 = vmatmul.bf16.gmra.mxu0 %v4385
  %v4429 = vpop.f32.mrf.mxu0
  %v4430 = vadd.f32 0.0, %v4429
  %v4431 = vpop.f32.mrf.mxu0
  %v4432 = vadd.f32 0.0, %v4431
  %4433 = vmatmul.bf16.gmra.mxu0 %v4388
  %v4434 = vpop.f32.mrf.mxu0
  %v4435 = vadd.f32 0.0, %v4434
  %v4436 = vpop.f32.mrf.mxu0
  %v4437 = vadd.f32 0.0, %v4436
  %4438 = vdwg.mxu0
  %v4439 = vadd.f32 %v4333, %v4400
  %v4440 = vadd.f32 %v4334, %v4402
  %v4441 = vadd.f32 %v4335, %v4405
  %v4442 = vadd.f32 %v4336, %v4407
  %v4443 = vadd.f32 %v4337, %v4410
  %v4444 = vadd.f32 %v4338, %v4412
  %v4445 = vadd.f32 %v4339, %v4415
  %v4446 = vadd.f32 %v4340, %v4417
  %v4447 = vadd.f32 %v4341, %v4420
  %v4448 = vadd.f32 %v4342, %v4422
  %v4449 = vadd.f32 %v4343, %v4425
  %v4450 = vadd.f32 %v4344, %v4427
  %v4451 = vadd.f32 %v4345, %v4430
  %v4452 = vadd.f32 %v4346, %v4432
  %v4453 = vadd.f32 %v4347, %v4435
  %v4454 = vadd.f32 %v4348, %v4437
  %v4455 = vld [vmem:[%s3] sm:$0x1]
  %v4457 = vperm.slane %v4455, 0
  %v4459 = vadd.f32 %v4439, %v4457
  %v4460 = vadd.f32 %v4440, %v4457
  %v4461 = vadd.f32 %v4441, %v4457
  %v4462 = vadd.f32 %v4442, %v4457
  %v4463 = vadd.f32 %v4443, %v4457
  %v4464 = vadd.f32 %v4444, %v4457
  %v4465 = vadd.f32 %v4445, %v4457
  %v4466 = vadd.f32 %v4446, %v4457
  %v4467 = vadd.f32 %v4447, %v4457
  %v4468 = vadd.f32 %v4448, %v4457
  %v4469 = vadd.f32 %v4449, %v4457
  %v4470 = vadd.f32 %v4450, %v4457
  %v4471 = vadd.f32 %v4451, %v4457
  %v4472 = vadd.f32 %v4452, %v4457
  %v4473 = vadd.f32 %v4453, %v4457
  %v4474 = vadd.f32 %v4454, %v4457
  %4475 = vst.msk [vmem:[%s4] sm:$0xff] %vm68, %v4459
  %4476 = vst.msk [vmem:[%s4 + $0x8] sm:$0xff] %vm68, %v4460
  %4477 = vst.msk [vmem:[%s4 + $0x10] sm:$0xff] %vm68, %v4461
  %4478 = vst.msk [vmem:[%s4 + $0x18] sm:$0xff] %vm68, %v4462
  %4479 = vst.msk [vmem:[%s4 + $0x20] sm:$0xff] %vm68, %v4463
  %4480 = vst.msk [vmem:[%s4 + $0x28] sm:$0xff] %vm68, %v4464
  %4481 = vst.msk [vmem:[%s4 + $0x30] sm:$0xff] %vm68, %v4465
  %4482 = vst.msk [vmem:[%s4 + $0x38] sm:$0xff] %vm68, %v4466
  %4483 = vst.msk [vmem:[%s4 + $0x40] sm:$0xff] %vm68, %v4467
  %4484 = vst.msk [vmem:[%s4 + $0x48] sm:$0xff] %vm68, %v4468
  %4485 = vst.msk [vmem:[%s4 + $0x50] sm:$0xff] %vm68, %v4469
  %4486 = vst.msk [vmem:[%s4 + $0x58] sm:$0xff] %vm68, %v4470
  %4487 = vst.msk [vmem:[%s4 + $0x60] sm:$0xff] %vm68, %v4471
  %4488 = vst.msk [vmem:[%s4 + $0x68] sm:$0xff] %vm68, %v4472
  %4489 = vst.msk [vmem:[%s4 + $0x70] sm:$0xff] %vm68, %v4473
  %4490 = vst.msk [vmem:[%s4 + $0x78] sm:$0xff] %vm68, %v4474
  // Predicated region
  $region18: #{tpu_custom_call.1} parent=0 // pred_check
    _
  $region19: #{tpu_custom_call.1} parent=0 // pred_check_branch
    %4492 = sbr.rel (0) target = $region21
  $region20: #{tpu_custom_call.1} parent=0 // pred_region
    _
  $region21: #{tpu_custom_call.1} parent=0 // pred_fallthru
    _
  // Predicated region
  $region22: #{tpu_custom_call.1} parent=0 // pred_check
    _
  $region23: #{tpu_custom_call.1} parent=0 // pred_check_branch
    %4494 = sbr.rel (0) target = $region25
  $region24: #{tpu_custom_call.1} parent=0 // pred_region
    _
  $region25: #{tpu_custom_call.1} parent=0 // pred_fallthru
    _
  // Predicated region
  $region26: #{tpu_custom_call.1} parent=0 // pred_check
    _
  $region27: #{tpu_custom_call.1} parent=0 // pred_check_branch
    %4496 = sbr.rel (0) target = $region29
  $region28: #{tpu_custom_call.1} parent=0 // pred_region
    _
  $region29: #{tpu_custom_call.1} parent=0 // pred_fallthru
    _
  // Predicated region
  $region30: #{tpu_custom_call.1} parent=0 // pred_check
    _
  $region31: #{tpu_custom_call.1} parent=0 // pred_check_branch
    %4498 = sbr.rel (0) target = $region33
  $region32: #{tpu_custom_call.1} parent=0 // pred_region
    _
  $region33: #{tpu_custom_call.1} parent=0 // pred_fallthru
    _

</llo_original>
